<compile_context>
chip_gen: v6e
topology: v6e:2x2x1
jax: 0.10.0
libtpu: 0.0.40
codegen_flags: <defaults>
</compile_context>

<pallas_src>
import functools
import math

import jax
import jax.numpy as jnp
from jax.experimental import pallas as pl
from jax.experimental.pallas import tpu as pltpu


MXU_DTYPE = jnp.bfloat16   # bf16 into the MXU (v6e/v7x fast path), f32 accumulate
LN_EPS = 1e-6              # TODO(synk): DiT-style eps; nn.LayerNorm default is 1e-5


def _pick_tile(m, pref=256):
    """Largest tile <= pref that divides m (falls back to m). Guarantees no
    out-of-bounds partial blocks, and tiles are multiples of 8."""
    if m <= pref:
        return m
    for cand in (pref, 128, 64, 32, 16, 8):
        if m % cand == 0:
            return cand
    return m


# ----------------------------------------------------------------------------
# Pallas kernels
# ----------------------------------------------------------------------------

def _act_matmul_kernel(x_ref, w_ref, o_ref, *, act):
    x = x_ref[...].astype(jnp.float32)
    if act == "silu":
        x = x * jax.nn.sigmoid(x)
    o_ref[...] = jnp.dot(
        x.astype(MXU_DTYPE), w_ref[...].astype(MXU_DTYPE),
        preferred_element_type=jnp.float32,
    ).astype(o_ref.dtype)


def linear(x, w, act=None):
    """(optional act on x) then x @ w.  x: [M, K], w: [K, N].  Bias-free."""
    M, K = x.shape
    N = w.shape[1]
    tm = _pick_tile(M)
    cost = pl.CostEstimate(flops=2 * M * K * N, transcendentals=0,
                           bytes_accessed=4 * (M * K + K * N + M * N))
    return pl.pallas_call(
        functools.partial(_act_matmul_kernel, act=act),
        grid=(pl.cdiv(M, tm),),
        in_specs=[pl.BlockSpec((tm, K), lambda i: (i, 0)),
                  pl.BlockSpec((K, N), lambda i: (0, 0))],
        out_specs=pl.BlockSpec((tm, N), lambda i: (i, 0)),
        out_shape=jax.ShapeDtypeStruct((M, N), x.dtype),
        compiler_params=pltpu.CompilerParams(dimension_semantics=("parallel",)),
        cost_estimate=cost,
    )(x, w)


def _mlp_kernel(x_ref, w1_ref, w2_ref, o_ref, *, act):
    x = x_ref[...].astype(jnp.float32)
    h = jnp.dot(x.astype(MXU_DTYPE), w1_ref[...].astype(MXU_DTYPE),
                preferred_element_type=jnp.float32)
    if act == "gelu":
        h = jax.nn.gelu(h)  # TODO(synk): tanh approx; PyTorch nn.GELU default is exact erf
    else:  # silu
        h = h * jax.nn.sigmoid(h)
    o_ref[...] = jnp.dot(h.astype(MXU_DTYPE), w2_ref[...].astype(MXU_DTYPE),
                         preferred_element_type=jnp.float32).astype(o_ref.dtype)


def mlp(x, w1, w2, act="gelu"):
    """Fused Linear -> act -> Linear.  x: [M, K], w1: [K, H], w2: [H, N]."""
    M, K = x.shape
    H = w1.shape[1]
    N = w2.shape[1]
    tm = _pick_tile(M)
    cost = pl.CostEstimate(flops=2 * M * (K * H + H * N), transcendentals=M * H,
                           bytes_accessed=4 * (M * K + K * H + H * N + M * N))
    return pl.pallas_call(
        functools.partial(_mlp_kernel, act=act),
        grid=(pl.cdiv(M, tm),),
        in_specs=[pl.BlockSpec((tm, K), lambda i: (i, 0)),
                  pl.BlockSpec((K, H), lambda i: (0, 0)),
                  pl.BlockSpec((H, N), lambda i: (0, 0))],
        out_specs=pl.BlockSpec((tm, N), lambda i: (i, 0)),
        out_shape=jax.ShapeDtypeStruct((M, N), x.dtype),
        compiler_params=pltpu.CompilerParams(dimension_semantics=("parallel",)),
        cost_estimate=cost,
    )(x, w1, w2)


def _ln_mod(x, shift, scale):
    """LayerNorm (no affine) over last dim, then adaLN shift/scale."""
    mu = jnp.mean(x, axis=-1, keepdims=True)
    var = jnp.mean(jnp.square(x - mu), axis=-1, keepdims=True)
    xn = (x - mu) * jax.lax.rsqrt(var + LN_EPS)
    return xn * (1.0 + scale) + shift


def _ln_mod_matmul_kernel(x_ref, shift_ref, scale_ref, w_ref, o_ref):
    h = _ln_mod(x_ref[...].astype(jnp.float32),
                shift_ref[...].astype(jnp.float32),
                scale_ref[...].astype(jnp.float32))
    o_ref[...] = jnp.dot(h.astype(MXU_DTYPE), w_ref[...].astype(MXU_DTYPE),
                         preferred_element_type=jnp.float32).astype(o_ref.dtype)


def ln_mod_matmul(x, shift, scale, w):
    """(modulate(LN(x), shift, scale)) @ w, fused.
    x: [B, N, D], shift/scale: [B, 1, D], w: [D, Dout] -> [B, N, Dout]."""
    B, N, D = x.shape
    Dout = w.shape[1]
    tn = _pick_tile(N)
    cost = pl.CostEstimate(flops=2 * B * N * D * Dout + 10 * B * N * D,
                           transcendentals=B * N,
                           bytes_accessed=4 * (B * N * D + D * Dout + B * N * Dout))
    return pl.pallas_call(
        _ln_mod_matmul_kernel,
        grid=(B, pl.cdiv(N, tn)),
        in_specs=[
            pl.BlockSpec((None, tn, D), lambda b, i: (b, i, 0)),
            pl.BlockSpec((None, 1, D), lambda b, i: (b, 0, 0)),
            pl.BlockSpec((None, 1, D), lambda b, i: (b, 0, 0)),
            pl.BlockSpec((D, Dout), lambda b, i: (0, 0)),
        ],
        out_specs=pl.BlockSpec((None, tn, Dout), lambda b, i: (b, i, 0)),
        out_shape=jax.ShapeDtypeStruct((B, N, Dout), x.dtype),
        compiler_params=pltpu.CompilerParams(
            dimension_semantics=("parallel", "parallel")),
        cost_estimate=cost,
    )(x, shift, scale, w)


def _ln_mod_mlp_res_kernel(x_ref, shift_ref, scale_ref, gate_ref,
                           w1_ref, w2_ref, o_ref):
    x = x_ref[...].astype(jnp.float32)
    h = _ln_mod(x, shift_ref[...].astype(jnp.float32),
                scale_ref[...].astype(jnp.float32))
    u = jnp.dot(h.astype(MXU_DTYPE), w1_ref[...].astype(MXU_DTYPE),
                preferred_element_type=jnp.float32)
    u = jax.nn.gelu(u)  # TODO(synk): tanh approx vs PyTorch exact-erf GELU
    m = jnp.dot(u.astype(MXU_DTYPE), w2_ref[...].astype(MXU_DTYPE),
                preferred_element_type=jnp.float32)
    o_ref[...] = (x + gate_ref[...].astype(jnp.float32) * m).astype(o_ref.dtype)


def ln_mod_mlp_residual(x, shift, scale, gate, w1, w2):
    """x + gate * MLP(modulate(LN(x))), fully fused per token tile."""
    B, N, D = x.shape
    H = w1.shape[1]
    tn = _pick_tile(N)
    cost = pl.CostEstimate(flops=4 * B * N * D * H + 12 * B * N * D,
                           transcendentals=B * N * (H + 1),
                           bytes_accessed=4 * (2 * B * N * D + 2 * D * H))
    return pl.pallas_call(
        _ln_mod_mlp_res_kernel,
        grid=(B, pl.cdiv(N, tn)),
        in_specs=[
            pl.BlockSpec((None, tn, D), lambda b, i: (b, i, 0)),
            pl.BlockSpec((None, 1, D), lambda b, i: (b, 0, 0)),
            pl.BlockSpec((None, 1, D), lambda b, i: (b, 0, 0)),
            pl.BlockSpec((None, 1, D), lambda b, i: (b, 0, 0)),
            pl.BlockSpec((D, H), lambda b, i: (0, 0)),
            pl.BlockSpec((H, D), lambda b, i: (0, 0)),
        ],
        out_specs=pl.BlockSpec((None, tn, D), lambda b, i: (b, i, 0)),
        out_shape=jax.ShapeDtypeStruct(x.shape, x.dtype),
        compiler_params=pltpu.CompilerParams(
            dimension_semantics=("parallel", "parallel")),
        cost_estimate=cost,
    )(x, shift, scale, gate, w1, w2)


def _attn_out_res_kernel(x_ref, q_ref, k_ref, v_ref, gate_ref, wo_ref, o_ref,
                         *, n_heads, scale):
    # Per batch element: all heads handled in one grid step; per-head slices are
    # in-kernel lane slices (no host-side [B,H,L,dh] transposes). The output
    # projection Wo and gated residual are fused into the epilogue.
    # TODO(synk): for large N convert to flash-style online softmax with a kv
    #             grid axis ('arbitrary') + m/l/acc scratch to bound VMEM.
    N, D = x_ref.shape
    dh = D // n_heads
    x = x_ref[...].astype(jnp.float32)
    q = q_ref[...]
    k = k_ref[...]
    v = v_ref[...]
    wo = wo_ref[...]
    acc = jnp.zeros((N, D), jnp.float32)
    for h in range(n_heads):  # static unroll (small, fixed head count)
        sl = slice(h * dh, (h + 1) * dh)
        qh = q[:, sl].astype(MXU_DTYPE)          # [N, dh]
        kh = k[:, sl].astype(MXU_DTYPE)          # [L, dh]
        vh = v[:, sl].astype(MXU_DTYPE)          # [L, dh]
        s = jax.lax.dot_general(qh, kh, (((1,), (1,)), ((), ())),
                                preferred_element_type=jnp.float32) * scale
        s = s - jnp.max(s, axis=-1, keepdims=True)
        p = jnp.exp(s)
        p = p / jnp.sum(p, axis=-1, keepdims=True)
        oh = jnp.dot(p.astype(MXU_DTYPE), vh, preferred_element_type=jnp.float32)
        acc = acc + jnp.dot(oh.astype(MXU_DTYPE), wo[sl, :].astype(MXU_DTYPE),
                            preferred_element_type=jnp.float32)
    o_ref[...] = (x + gate_ref[...].astype(jnp.float32) * acc).astype(o_ref.dtype)


def attention_out_residual(x, q, k, v, gate, wo, n_heads):
    """x + gate * (MHA(q, k, v) @ wo), fused per batch element.
    x/q: [B, N, D]; k/v: [B, L, D]; gate: [B, 1, D]; wo: [D, D]."""
    B, N, D = q.shape
    L = k.shape[1]
    dh = D // n_heads
    cost = pl.CostEstimate(
        flops=4 * B * N * L * D + 2 * B * N * D * D,
        transcendentals=B * n_heads * N * L,
        bytes_accessed=4 * (3 * B * N * D + 2 * B * L * D + D * D),
    )
    kernel = functools.partial(_attn_out_res_kernel, n_heads=n_heads,
                               scale=1.0 / math.sqrt(dh))
    return pl.pallas_call(
        kernel,
        grid=(B,),
        in_specs=[
            pl.BlockSpec((None, N, D), lambda b: (b, 0, 0)),
            pl.BlockSpec((None, N, D), lambda b: (b, 0, 0)),
            pl.BlockSpec((None, L, D), lambda b: (b, 0, 0)),
            pl.BlockSpec((None, L, D), lambda b: (b, 0, 0)),
            pl.BlockSpec((None, 1, D), lambda b: (b, 0, 0)),
            pl.BlockSpec((D, D), lambda b: (0, 0)),
        ],
        out_specs=pl.BlockSpec((None, N, D), lambda b: (b, 0, 0)),
        out_shape=jax.ShapeDtypeStruct((B, N, D), x.dtype),
        compiler_params=pltpu.CompilerParams(dimension_semantics=("parallel",)),
        cost_estimate=cost,
    )(x, q, k, v, gate, wo)


def _mse_kernel(a_ref, b_ref, o_ref, acc_ref, *, inv_total):
    @pl.when(pl.program_id(0) == 0)
    def _():
        acc_ref[...] = jnp.zeros_like(acc_ref)
    d = a_ref[...].astype(jnp.float32) - b_ref[...].astype(jnp.float32)
    acc_ref[...] += jnp.sum(d * d, keepdims=True)

    @pl.when(pl.program_id(0) == pl.num_programs(0) - 1)
    def _():
        o_ref[...] = acc_ref[...] * inv_total


def mse_loss(a, b):
    """Tiled MSE reduction with a VMEM accumulator ('arbitrary' reduction axis)."""
    a2 = a.reshape(-1, a.shape[-1])
    b2 = b.reshape(-1, b.shape[-1])
    M, K = a2.shape
    tm = _pick_tile(M, pref=512)
    out = pl.pallas_call(
        functools.partial(_mse_kernel, inv_total=1.0 / float(M * K)),
        grid=(pl.cdiv(M, tm),),
        in_specs=[pl.BlockSpec((tm, K), lambda i: (i, 0)),
                  pl.BlockSpec((tm, K), lambda i: (i, 0))],
        out_specs=pl.BlockSpec((1, 1), lambda i: (0, 0)),
        out_shape=jax.ShapeDtypeStruct((1, 1), jnp.float32),
        scratch_shapes=[pltpu.VMEM((1, 1), jnp.float32)],
        compiler_params=pltpu.CompilerParams(dimension_semantics=("arbitrary",)),
    )(a2, b2)
    return out[0, 0]


# ----------------------------------------------------------------------------
# Model (glue in plain JAX, compute in the kernels above)
# ----------------------------------------------------------------------------

def timestep_embedding(t, dim, max_period=10000.0):
    half = dim // 2
    freqs = jnp.exp(-math.log(max_period) * jnp.arange(half, dtype=jnp.float32) / half)
    args = t.astype(jnp.float32)[:, None] * freqs[None, :]
    return jnp.concatenate([jnp.cos(args), jnp.sin(args)], axis=-1)


def init_params(key, cfg):
    D, Dt, C, nL = cfg["d_model"], cfg["text_d_model"], cfg["channels"], cfg["n_layers"]
    keys = iter(jax.random.split(key, 8 + 8 * nL))

    def w(shape):
        return jax.random.normal(next(keys), shape, jnp.float32) * 0.02

    params = {
        "W_text": w((Dt, D)),       # text_proj (Linear, no bias)
        "W_patch": w((C, D)),       # patch_proj (1x1 Conv2d, no bias)
        "W_out": w((D, C)),         # proj_out (Linear, no bias)
        "W_t1": w((D, D)), "W_t2": w((D, D)),    # t_embed MLP
        "W_p1": w((Dt, D)), "W_p2": w((D, D)),   # pool_embed MLP
        "W_fm": w((D, 2 * D)),      # FinalMod adaLN
        "blocks": [],
    }
    for _ in range(nL):
        params["blocks"].append({
            "W_mod": w((D, 6 * D)),
            "W_qkv": w((D, 3 * D)),  # fused [Wq | Wk | Wv]
            "Wo": w((D, D)),
            "Wm1": w((D, 4 * D)), "Wm2": w((4 * D, D)),
        })
    return params


def dit_block(x, y, cond, p, n_heads):
    B, N, D = x.shape
    Lt = y.shape[1]

    # adaLN modulation params: SiLU + Linear, fused, 6D-wide (lane-dense) output
    mod = linear(cond, p["W_mod"], act="silu")                       # [B, 6D]
    s1, sc1, g1, s2, sc2, g2 = [m[:, None, :] for m in jnp.split(mod, 6, axis=-1)]

    # --- joint attention over [modulate(LN(x)); text] ---
    qkv = ln_mod_matmul(x, s1, sc1, p["W_qkv"])                      # [B, N, 3D]
    q, k_x, v_x = jnp.split(qkv, 3, axis=-1)
    kv_y = linear(y.reshape(B * Lt, D), p["W_qkv"][:, D:]).reshape(B, Lt, 2 * D)
    k_y, v_y = jnp.split(kv_y, 2, axis=-1)
    k = jnp.concatenate([k_x, k_y], axis=1)                          # [B, N+Lt, D]
    v = jnp.concatenate([v_x, v_y], axis=1)
    x = attention_out_residual(x, q, k, v, g1, p["Wo"], n_heads)     # + Wo + gate + res

    # --- gated MLP path, fully fused (LN + mod + Wm1 + gelu + Wm2 + gate + res) ---
    x = ln_mod_mlp_residual(x, s2, sc2, g2, p["Wm1"], p["Wm2"])
    return x


def rft_core_forward(params, x, y, ts, cfg):
    """RFTCore.forward.  x: [B, C, H, W] (NCHW), y: [B, Lt, Dt], ts: [B]."""
    B, C, H, W = x.shape
    Lt, Dt = y.shape[1], y.shape[2]
    D = cfg["d_model"]

    # y_pool = y.mean(1);  y = text_proj(y)
    y_pool = jnp.mean(y, axis=1)                                         # [B, Dt]
    y_proj = linear(y.reshape(B * Lt, Dt), params["W_text"]).reshape(B, Lt, D)

    # x = patch_proj(x).flatten(2).transpose(1, 2)  (1x1 conv == per-pixel matmul)
    x_tok = jnp.transpose(x, (0, 2, 3, 1)).reshape(B * H * W, C)
    x_tok = linear(x_tok, params["W_patch"]).reshape(B, H * W, D)

    # cond = t_embed(ts) + pool_embed(y_pool)
    t_emb = mlp(timestep_embedding(ts, D), params["W_t1"], params["W_t2"], act="silu")
    p_emb = mlp(y_pool, params["W_p1"], params["W_p2"], act="gelu")
    cond = t_emb + p_emb                                                 # [B, D]

    # x = blocks(x, y, cond)
    for blk in params["blocks"]:
        x_tok = dit_block(x_tok, y_proj, cond, blk, cfg["n_heads"])

    # x = final_mod(x, cond); x = proj_out(x)  -> fused LN + modulate + matmul
    fm = linear(cond, params["W_fm"], act="silu")                        # [B, 2D]
    shift, scale = jnp.split(fm, 2, axis=-1)
    out = ln_mod_matmul(x_tok, shift[:, None, :], scale[:, None, :], params["W_out"])

    # depatchify 'b (ny nx) c -> b c ny nx'
    out = jnp.transpose(out.reshape(B, H, W, C), (0, 3, 1, 2))
    return out


def rft_forward(params, x, y, key, cfg):
    """RFT.forward training step (rectified-flow loss).  x plays the role of
    VAE latents, y of text embeddings (frozen encoders are external — see TODO)."""
    kz, kt = jax.random.split(key)
    z = jax.random.normal(kz, x.shape, x.dtype)
    t = jax.nn.sigmoid(jax.random.normal(kt, (x.shape[0],), x.dtype))
    t_exp = t[:, None, None, None]
    lerpd = x * (1.0 - t_exp) + z * t_exp
    target = z - x
    pred = rft_core_forward(params, lerpd, y, t, cfg)
    diff_loss = mse_loss(target, pred)
    total_loss = diff_loss
    return total_loss, pred


# ----------------------------------------------------------------------------
# Main
# ----------------------------------------------------------------------------

if __name__ == "__main__":
    cfg = dict(
        channels=4,
        d_model=64,
        text_d_model=32,
        sample_size=8,   # latent H = W = 8  ->  64 tokens
        n_layers=2,
        n_heads=4,
        text_len=8,
    )
    B = 2

    key = jax.random.PRNGKey(0)
    kp, kx, ky, kn = jax.random.split(key, 4)

    params = init_params(kp, cfg)
    x = jax.random.normal(kx, (B, cfg["channels"], cfg["sample_size"], cfg["sample_size"]),
                          jnp.float32)
    y = jax.random.normal(ky, (B, cfg["text_len"], cfg["text_d_model"]), jnp.float32)

    fwd = jax.jit(lambda p_, x_, y_, k_: rft_forward(p_, x_, y_, k_, cfg))
    loss, pred = fwd(params, x, y, kn)
    jax.block_until_ready((loss, pred))

    assert pred.shape == x.shape, (pred.shape, x.shape)
    assert jnp.isfinite(loss)
    print("KERNEL_OK")
</pallas_src>

<mosaic_0001>
module attributes {stable_mosaic.version = 11 : i64} {
  func.func @_act_matmul_kernel(%arg0: i32, %arg1: memref<128x4xf32, #tpu.memory_space<vmem>>, %arg2: memref<4x64xf32, #tpu.memory_space<vmem>>, %arg3: memref<128x64xf32, #tpu.memory_space<vmem>>) attributes {dimension_semantics = [#tpu.dimension_semantics<parallel>], iteration_bounds = array<i64: 1>, scalar_prefetch = 0 : i64, scratch_operands = 0 : i64, tpu.core_type = #tpu.core_type<tc>, window_params = [{transform_indices = @transform_0, window_bounds = array<i64: 128, 4>}, {pipeline_mode = #tpu.pipeline_mode<synchronous>, transform_indices = @transform_1, window_bounds = array<i64: 4, 64>}, {transform_indices = @transform_2, window_bounds = array<i64: 128, 64>}]} {
    %c0 = arith.constant 0 : index
    %c0_0 = arith.constant 0 : index
    %0 = vector.load %arg1[%c0, %c0_0] : memref<128x4xf32, #tpu.memory_space<vmem>>, vector<128x4xf32>
    %1 = arith.truncf %0 : vector<128x4xf32> to vector<128x4xbf16>
    %c0_1 = arith.constant 0 : index
    %c0_2 = arith.constant 0 : index
    %2 = vector.load %arg2[%c0_1, %c0_2] : memref<4x64xf32, #tpu.memory_space<vmem>>, vector<4x64xf32>
    %3 = arith.truncf %2 : vector<4x64xf32> to vector<4x64xbf16>
    %cst = arith.constant dense<0.000000e+00> : vector<128x64xf32>
    %4 = tpu.matmul %1, %3, %cst {dimension_numbers = #tpu.dot_dimension_numbers<[1], [0], [0], [1], [0, 0, 1, 1], [], []>} : vector<128x4xbf16>, vector<4x64xbf16>, vector<128x64xf32> -> vector<128x64xf32>
    %c0_3 = arith.constant 0 : index
    %c0_4 = arith.constant 0 : index
    %5 = vector.load %arg3[%c0_3, %c0_4] : memref<128x64xf32, #tpu.memory_space<vmem>>, vector<128x64xf32>
    tpu.vector_store %arg3[%c0_3, %c0_4], %4 {strides = array<i32>} : memref<128x64xf32, #tpu.memory_space<vmem>>, vector<128x64xf32>,
    return
  }
  func.func @transform_0(%arg0: i32) -> (i32, i32) {
    %c0_i32 = arith.constant 0 : i32
    %c0_i32_0 = arith.constant 0 : i32
    return %arg0, %c0_i32 : i32, i32
  }
  func.func @transform_1(%arg0: i32) -> (i32, i32) {
    %c0_i32 = arith.constant 0 : i32
    %c0_i32_0 = arith.constant 0 : i32
    %c0_i32_1 = arith.constant 0 : i32
    return %c0_i32, %c0_i32_0 : i32, i32
  }
  func.func @transform_2(%arg0: i32) -> (i32, i32) {
    %c0_i32 = arith.constant 0 : i32
    %c0_i32_0 = arith.constant 0 : i32
    return %arg0, %c0_i32 : i32, i32
  }
}

module attributes {stable_mosaic.version = 11 : i64} {
  func.func @_mlp_kernel(%arg0: i32, %arg1: memref<2x64xf32, #tpu.memory_space<vmem>>, %arg2: memref<64x64xf32, #tpu.memory_space<vmem>>, %arg3: memref<64x64xf32, #tpu.memory_space<vmem>>, %arg4: memref<2x64xf32, #tpu.memory_space<vmem>>) attributes {dimension_semantics = [#tpu.dimension_semantics<parallel>], iteration_bounds = array<i64: 1>, scalar_prefetch = 0 : i64, scratch_operands = 0 : i64, tpu.core_type = #tpu.core_type<tc>, window_params = [{transform_indices = @transform_0, window_bounds = array<i64: 2, 64>}, {pipeline_mode = #tpu.pipeline_mode<synchronous>, transform_indices = @transform_1, window_bounds = array<i64: 64, 64>}, {pipeline_mode = #tpu.pipeline_mode<synchronous>, transform_indices = @transform_2, window_bounds = array<i64: 64, 64>}, {transform_indices = @transform_3, window_bounds = array<i64: 2, 64>}]} {
    %c0 = arith.constant 0 : index
    %c0_0 = arith.constant 0 : index
    %0 = vector.load %arg1[%c0, %c0_0] : memref<2x64xf32, #tpu.memory_space<vmem>>, vector<2x64xf32>
    %1 = arith.truncf %0 : vector<2x64xf32> to vector<2x64xbf16>
    %c0_1 = arith.constant 0 : index
    %c0_2 = arith.constant 0 : index
    %2 = vector.load %arg2[%c0_1, %c0_2] : memref<64x64xf32, #tpu.memory_space<vmem>>, vector<64x64xf32>
    %3 = arith.truncf %2 : vector<64x64xf32> to vector<64x64xbf16>
    %cst = arith.constant dense<0.000000e+00> : vector<2x64xf32>
    %4 = tpu.matmul %1, %3, %cst {dimension_numbers = #tpu.dot_dimension_numbers<[1], [0], [0], [1], [0, 0, 1, 1], [], []>} : vector<2x64xbf16>, vector<64x64xbf16>, vector<2x64xf32> -> vector<2x64xf32>
    %5 = arith.negf %4 : vector<2x64xf32>
    %6 = math.exp %5 : vector<2x64xf32>
    %cst_3 = arith.constant 1.000000e+00 : f32
    %7 = vector.broadcast %cst_3 : f32 to vector<2x64xf32>
    %8 = arith.addf %7, %6 : vector<2x64xf32>
    %9 = arith.divf %7, %8 : vector<2x64xf32>
    %10 = arith.mulf %4, %9 : vector<2x64xf32>
    %11 = arith.truncf %10 : vector<2x64xf32> to vector<2x64xbf16>
    %c0_4 = arith.constant 0 : index
    %c0_5 = arith.constant 0 : index
    %12 = vector.load %arg3[%c0_4, %c0_5] : memref<64x64xf32, #tpu.memory_space<vmem>>, vector<64x64xf32>
    %13 = arith.truncf %12 : vector<64x64xf32> to vector<64x64xbf16>
    %cst_6 = arith.constant dense<0.000000e+00> : vector<2x64xf32>
    %14 = tpu.matmul %11, %13, %cst_6 {dimension_numbers = #tpu.dot_dimension_numbers<[1], [0], [0], [1], [0, 0, 1, 1], [], []>} : vector<2x64xbf16>, vector<64x64xbf16>, vector<2x64xf32> -> vector<2x64xf32>
    %c0_7 = arith.constant 0 : index
    %c0_8 = arith.constant 0 : index
    %15 = vector.load %arg4[%c0_7, %c0_8] : memref<2x64xf32, #tpu.memory_space<vmem>>, vector<2x64xf32>
    tpu.vector_store %arg4[%c0_7, %c0_8], %14 {strides = array<i32>} : memref<2x64xf32, #tpu.memory_space<vmem>>, vector<2x64xf32>,
    return
  }
  func.func @transform_0(%arg0: i32) -> (i32, i32) {
    %c0_i32 = arith.constant 0 : i32
    %c0_i32_0 = arith.constant 0 : i32
    return %arg0, %c0_i32 : i32, i32
  }
  func.func @transform_1(%arg0: i32) -> (i32, i32) {
    %c0_i32 = arith.constant 0 : i32
    %c0_i32_0 = arith.constant 0 : i32
    %c0_i32_1 = arith.constant 0 : i32
    return %c0_i32, %c0_i32_0 : i32, i32
  }
  func.func @transform_2(%arg0: i32) -> (i32, i32) {
    %c0_i32 = arith.constant 0 : i32
    %c0_i32_0 = arith.constant 0 : i32
    %c0_i32_1 = arith.constant 0 : i32
    return %c0_i32, %c0_i32_0 : i32, i32
  }
  func.func @transform_3(%arg0: i32) -> (i32, i32) {
    %c0_i32 = arith.constant 0 : i32
    %c0_i32_0 = arith.constant 0 : i32
    return %arg0, %c0_i32 : i32, i32
  }
}

module attributes {stable_mosaic.version = 11 : i64} {
  func.func @_mlp_kernel(%arg0: i32, %arg1: memref<2x32xf32, #tpu.memory_space<vmem>>, %arg2: memref<32x64xf32, #tpu.memory_space<vmem>>, %arg3: memref<64x64xf32, #tpu.memory_space<vmem>>, %arg4: memref<2x64xf32, #tpu.memory_space<vmem>>) attributes {dimension_semantics = [#tpu.dimension_semantics<parallel>], iteration_bounds = array<i64: 1>, scalar_prefetch = 0 : i64, scratch_operands = 0 : i64, tpu.core_type = #tpu.core_type<tc>, window_params = [{transform_indices = @transform_0, window_bounds = array<i64: 2, 32>}, {pipeline_mode = #tpu.pipeline_mode<synchronous>, transform_indices = @transform_1, window_bounds = array<i64: 32, 64>}, {pipeline_mode = #tpu.pipeline_mode<synchronous>, transform_indices = @transform_2, window_bounds = array<i64: 64, 64>}, {transform_indices = @transform_3, window_bounds = array<i64: 2, 64>}]} {
    %c0 = arith.constant 0 : index
    %c0_0 = arith.constant 0 : index
    %0 = vector.load %arg1[%c0, %c0_0] : memref<2x32xf32, #tpu.memory_space<vmem>>, vector<2x32xf32>
    %1 = arith.truncf %0 : vector<2x32xf32> to vector<2x32xbf16>
    %c0_1 = arith.constant 0 : index
    %c0_2 = arith.constant 0 : index
    %2 = vector.load %arg2[%c0_1, %c0_2] : memref<32x64xf32, #tpu.memory_space<vmem>>, vector<32x64xf32>
    %3 = arith.truncf %2 : vector<32x64xf32> to vector<32x64xbf16>
    %cst = arith.constant dense<0.000000e+00> : vector<2x64xf32>
    %4 = tpu.matmul %1, %3, %cst {dimension_numbers = #tpu.dot_dimension_numbers<[1], [0], [0], [1], [0, 0, 1, 1], [], []>} : vector<2x32xbf16>, vector<32x64xbf16>, vector<2x64xf32> -> vector<2x64xf32>
    %5 = arith.mulf %4, %4 : vector<2x64xf32>
    %6 = arith.mulf %4, %5 : vector<2x64xf32>
    %cst_3 = arith.constant 4.471500e-02 : f32
    %7 = vector.broadcast %cst_3 : f32 to vector<2x64xf32>
    %8 = arith.mulf %7, %6 : vector<2x64xf32>
    %9 = arith.addf %4, %8 : vector<2x64xf32>
    %cst_4 = arith.constant 0.797884583 : f32
    %10 = vector.broadcast %cst_4 : f32 to vector<2x64xf32>
    %11 = arith.mulf %10, %9 : vector<2x64xf32>
    %12 = math.tanh %11 : vector<2x64xf32>
    %cst_5 = arith.constant 1.000000e+00 : f32
    %13 = vector.broadcast %cst_5 : f32 to vector<2x64xf32>
    %14 = arith.addf %13, %12 : vector<2x64xf32>
    %cst_6 = arith.constant 5.000000e-01 : f32
    %15 = vector.broadcast %cst_6 : f32 to vector<2x64xf32>
    %16 = arith.mulf %15, %14 : vector<2x64xf32>
    %17 = arith.mulf %4, %16 : vector<2x64xf32>
    %18 = arith.truncf %17 : vector<2x64xf32> to vector<2x64xbf16>
    %c0_7 = arith.constant 0 : index
    %c0_8 = arith.constant 0 : index
    %19 = vector.load %arg3[%c0_7, %c0_8] : memref<64x64xf32, #tpu.memory_space<vmem>>, vector<64x64xf32>
    %20 = arith.truncf %19 : vector<64x64xf32> to vector<64x64xbf16>
    %cst_9 = arith.constant dense<0.000000e+00> : vector<2x64xf32>
    %21 = tpu.matmul %18, %20, %cst_9 {dimension_numbers = #tpu.dot_dimension_numbers<[1], [0], [0], [1], [0, 0, 1, 1], [], []>} : vector<2x64xbf16>, vector<64x64xbf16>, vector<2x64xf32> -> vector<2x64xf32>
    %c0_10 = arith.constant 0 : index
    %c0_11 = arith.constant 0 : index
    %22 = vector.load %arg4[%c0_10, %c0_11] : memref<2x64xf32, #tpu.memory_space<vmem>>, vector<2x64xf32>
    tpu.vector_store %arg4[%c0_10, %c0_11], %21 {strides = array<i32>} : memref<2x64xf32, #tpu.memory_space<vmem>>, vector<2x64xf32>,
    return
  }
  func.func @transform_0(%arg0: i32) -> (i32, i32) {
    %c0_i32 = arith.constant 0 : i32
    %c0_i32_0 = arith.constant 0 : i32
    return %arg0, %c0_i32 : i32, i32
  }
  func.func @transform_1(%arg0: i32) -> (i32, i32) {
    %c0_i32 = arith.constant 0 : i32
    %c0_i32_0 = arith.constant 0 : i32
    %c0_i32_1 = arith.constant 0 : i32
    return %c0_i32, %c0_i32_0 : i32, i32
  }
  func.func @transform_2(%arg0: i32) -> (i32, i32) {
    %c0_i32 = arith.constant 0 : i32
    %c0_i32_0 = arith.constant 0 : i32
    %c0_i32_1 = arith.constant 0 : i32
    return %c0_i32, %c0_i32_0 : i32, i32
  }
  func.func @transform_3(%arg0: i32) -> (i32, i32) {
    %c0_i32 = arith.constant 0 : i32
    %c0_i32_0 = arith.constant 0 : i32
    return %arg0, %c0_i32 : i32, i32
  }
}

module attributes {stable_mosaic.version = 11 : i64} {
  func.func @_act_matmul_kernel(%arg0: i32, %arg1: memref<2x64xf32, #tpu.memory_space<vmem>>, %arg2: memref<64x384xf32, #tpu.memory_space<vmem>>, %arg3: memref<2x384xf32, #tpu.memory_space<vmem>>) attributes {dimension_semantics = [#tpu.dimension_semantics<parallel>], iteration_bounds = array<i64: 1>, scalar_prefetch = 0 : i64, scratch_operands = 0 : i64, tpu.core_type = #tpu.core_type<tc>, window_params = [{transform_indices = @transform_0, window_bounds = array<i64: 2, 64>}, {pipeline_mode = #tpu.pipeline_mode<synchronous>, transform_indices = @transform_1, window_bounds = array<i64: 64, 384>}, {transform_indices = @transform_2, window_bounds = array<i64: 2, 384>}]} {
    %c0 = arith.constant 0 : index
    %c0_0 = arith.constant 0 : index
    %0 = vector.load %arg1[%c0, %c0_0] : memref<2x64xf32, #tpu.memory_space<vmem>>, vector<2x64xf32>
    %1 = arith.negf %0 : vector<2x64xf32>
    %2 = math.exp %1 : vector<2x64xf32>
    %cst = arith.constant 1.000000e+00 : f32
    %3 = vector.broadcast %cst : f32 to vector<2x64xf32>
    %4 = arith.addf %3, %2 : vector<2x64xf32>
    %5 = arith.divf %3, %4 : vector<2x64xf32>
    %6 = arith.mulf %0, %5 : vector<2x64xf32>
    %7 = arith.truncf %6 : vector<2x64xf32> to vector<2x64xbf16>
    %c0_1 = arith.constant 0 : index
    %c0_2 = arith.constant 0 : index
    %8 = vector.load %arg2[%c0_1, %c0_2] : memref<64x384xf32, #tpu.memory_space<vmem>>, vector<64x384xf32>
    %9 = arith.truncf %8 : vector<64x384xf32> to vector<64x384xbf16>
    %cst_3 = arith.constant dense<0.000000e+00> : vector<2x384xf32>
    %10 = tpu.matmul %7, %9, %cst_3 {dimension_numbers = #tpu.dot_dimension_numbers<[1], [0], [0], [1], [0, 0, 1, 1], [], []>} : vector<2x64xbf16>, vector<64x384xbf16>, vector<2x384xf32> -> vector<2x384xf32>
    %c0_4 = arith.constant 0 : index
    %c0_5 = arith.constant 0 : index
    %11 = vector.load %arg3[%c0_4, %c0_5] : memref<2x384xf32, #tpu.memory_space<vmem>>, vector<2x384xf32>
    tpu.vector_store %arg3[%c0_4, %c0_5], %10 {strides = array<i32>} : memref<2x384xf32, #tpu.memory_space<vmem>>, vector<2x384xf32>,
    return
  }
  func.func @transform_0(%arg0: i32) -> (i32, i32) {
    %c0_i32 = arith.constant 0 : i32
    %c0_i32_0 = arith.constant 0 : i32
    return %arg0, %c0_i32 : i32, i32
  }
  func.func @transform_1(%arg0: i32) -> (i32, i32) {
    %c0_i32 = arith.constant 0 : i32
    %c0_i32_0 = arith.constant 0 : i32
    %c0_i32_1 = arith.constant 0 : i32
    return %c0_i32, %c0_i32_0 : i32, i32
  }
  func.func @transform_2(%arg0: i32) -> (i32, i32) {
    %c0_i32 = arith.constant 0 : i32
    %c0_i32_0 = arith.constant 0 : i32
    return %arg0, %c0_i32 : i32, i32
  }
}

module attributes {stable_mosaic.version = 11 : i64} {
  func.func @_ln_mod_matmul_kernel(%arg0: i32, %arg1: i32, %arg2: memref<1x64x64xf32, #tpu.memory_space<vmem>>, %arg3: memref<1x1x64xf32, #tpu.memory_space<vmem>>, %arg4: memref<1x1x64xf32, #tpu.memory_space<vmem>>, %arg5: memref<64x192xf32, #tpu.memory_space<vmem>>, %arg6: memref<1x64x192xf32, #tpu.memory_space<vmem>>) attributes {dimension_semantics = [#tpu.dimension_semantics<parallel>, #tpu.dimension_semantics<parallel>], iteration_bounds = array<i64: 2, 1>, scalar_prefetch = 0 : i64, scratch_operands = 0 : i64, tpu.core_type = #tpu.core_type<tc>, window_params = [{transform_indices = @transform_0, window_bounds = array<i64: 1, 64, 64>}, {transform_indices = @transform_1, window_bounds = array<i64: 1, 1, 64>}, {transform_indices = @transform_2, window_bounds = array<i64: 1, 1, 64>}, {pipeline_mode = #tpu.pipeline_mode<synchronous>, transform_indices = @transform_3, window_bounds = array<i64: 64, 192>}, {transform_indices = @transform_4, window_bounds = array<i64: 1, 64, 192>}]} {
    %c0 = arith.constant 0 : index
    %c0_0 = arith.constant 0 : index
    %c0_1 = arith.constant 0 : index
    %0 = vector.load %arg2[%c0, %c0_0, %c0_1] : memref<1x64x64xf32, #tpu.memory_space<vmem>>, vector<1x64x64xf32>
    %1 = vector.shape_cast %0 : vector<1x64x64xf32> to vector<64x64xf32>
    %c0_2 = arith.constant 0 : index
    %c0_3 = arith.constant 0 : index
    %c0_4 = arith.constant 0 : index
    %2 = vector.load %arg3[%c0_2, %c0_3, %c0_4] : memref<1x1x64xf32, #tpu.memory_space<vmem>>, vector<1x1x64xf32>
    %3 = vector.shape_cast %2 : vector<1x1x64xf32> to vector<1x64xf32>
    %c0_5 = arith.constant 0 : index
    %c0_6 = arith.constant 0 : index
    %c0_7 = arith.constant 0 : index
    %4 = vector.load %arg4[%c0_5, %c0_6, %c0_7] : memref<1x1x64xf32, #tpu.memory_space<vmem>>, vector<1x1x64xf32>
    %5 = vector.shape_cast %4 : vector<1x1x64xf32> to vector<1x64xf32>
    %cst = arith.constant dense<0.000000e+00> : vector<64xf32>
    %6 = vector.multi_reduction <add>, %1, %cst [1] : vector<64x64xf32> to vector<64xf32>
    %7 = vector.shape_cast %6 : vector<64xf32> to vector<64x1xf32>
    %cst_8 = arith.constant 6.400000e+01 : f32
    %8 = vector.broadcast %cst_8 : f32 to vector<64x1xf32>
    %9 = arith.divf %7, %8 : vector<64x1xf32>
    %10 = vector.broadcast %9 : vector<64x1xf32> to vector<64x64xf32>
    %11 = arith.subf %1, %10 : vector<64x64xf32>
    %12 = arith.mulf %11, %11 : vector<64x64xf32>
    %cst_9 = arith.constant dense<0.000000e+00> : vector<64xf32>
    %13 = vector.multi_reduction <add>, %12, %cst_9 [1] : vector<64x64xf32> to vector<64xf32>
    %14 = vector.shape_cast %13 : vector<64xf32> to vector<64x1xf32>
    %cst_10 = arith.constant 6.400000e+01 : f32
    %15 = vector.broadcast %cst_10 : f32 to vector<64x1xf32>
    %16 = arith.divf %14, %15 : vector<64x1xf32>
    %17 = vector.broadcast %9 : vector<64x1xf32> to vector<64x64xf32>
    %18 = arith.subf %1, %17 : vector<64x64xf32>
    %cst_11 = arith.constant 9.99999997E-7 : f32
    %19 = vector.broadcast %cst_11 : f32 to vector<64x1xf32>
    %20 = arith.addf %16, %19 : vector<64x1xf32>
    %21 = math.rsqrt %20 : vector<64x1xf32>
    %22 = vector.broadcast %21 : vector<64x1xf32> to vector<64x64xf32>
    %23 = arith.mulf %18, %22 : vector<64x64xf32>
    %cst_12 = arith.constant 1.000000e+00 : f32
    %24 = vector.broadcast %cst_12 : f32 to vector<1x64xf32>
    %25 = arith.addf %24, %5 : vector<1x64xf32>
    %26 = vector.broadcast %25 : vector<1x64xf32> to vector<64x64xf32>
    %27 = arith.mulf %23, %26 : vector<64x64xf32>
    %28 = vector.broadcast %3 : vector<1x64xf32> to vector<64x64xf32>
    %29 = arith.addf %27, %28 : vector<64x64xf32>
    %30 = arith.truncf %29 : vector<64x64xf32> to vector<64x64xbf16>
    %c0_13 = arith.constant 0 : index
    %c0_14 = arith.constant 0 : index
    %31 = vector.load %arg5[%c0_13, %c0_14] : memref<64x192xf32, #tpu.memory_space<vmem>>, vector<64x192xf32>
    %32 = arith.truncf %31 : vector<64x192xf32> to vector<64x192xbf16>
    %cst_15 = arith.constant dense<0.000000e+00> : vector<64x192xf32>
    %33 = tpu.matmul %30, %32, %cst_15 {dimension_numbers = #tpu.dot_dimension_numbers<[1], [0], [0], [1], [0, 0, 1, 1], [], []>} : vector<64x64xbf16>, vector<64x192xbf16>, vector<64x192xf32> -> vector<64x192xf32>
    %c0_16 = arith.constant 0 : index
    %c0_17 = arith.constant 0 : index
    %c0_18 = arith.constant 0 : index
    %34 = vector.load %arg6[%c0_16, %c0_17, %c0_18] : memref<1x64x192xf32, #tpu.memory_space<vmem>>, vector<1x64x192xf32>
    %35 = vector.shape_cast %34 : vector<1x64x192xf32> to vector<64x192xf32>
    %36 = vector.shape_cast %33 : vector<64x192xf32> to vector<1x64x192xf32>
    tpu.vector_store %arg6[%c0_16, %c0_17, %c0_18], %36 {strides = array<i32>} : memref<1x64x192xf32, #tpu.memory_space<vmem>>, vector<1x64x192xf32>,
    return
  }
  func.func @transform_0(%arg0: i32, %arg1: i32) -> (i32, i32, i32) {
    %c0_i32 = arith.constant 0 : i32
    %c0_i32_0 = arith.constant 0 : i32
    return %arg0, %arg1, %c0_i32 : i32, i32, i32
  }
  func.func @transform_1(%arg0: i32, %arg1: i32) -> (i32, i32, i32) {
    %c0_i32 = arith.constant 0 : i32
    %c0_i32_0 = arith.constant 0 : i32
    %c0_i32_1 = arith.constant 0 : i32
    return %arg0, %c0_i32, %c0_i32_0 : i32, i32, i32
  }
  func.func @transform_2(%arg0: i32, %arg1: i32) -> (i32, i32, i32) {
    %c0_i32 = arith.constant 0 : i32
    %c0_i32_0 = arith.constant 0 : i32
    %c0_i32_1 = arith.constant 0 : i32
    return %arg0, %c0_i32, %c0_i32_0 : i32, i32, i32
  }
  func.func @transform_3(%arg0: i32, %arg1: i32) -> (i32, i32) {
    %c0_i32 = arith.constant 0 : i32
    %c0_i32_0 = arith.constant 0 : i32
    %c0_i32_1 = arith.constant 0 : i32
    return %c0_i32, %c0_i32_0 : i32, i32
  }
  func.func @transform_4(%arg0: i32, %arg1: i32) -> (i32, i32, i32) {
    %c0_i32 = arith.constant 0 : i32
    %c0_i32_0 = arith.constant 0 : i32
    return %arg0, %arg1, %c0_i32 : i32, i32, i32
  }
}

module attributes {stable_mosaic.version = 11 : i64} {
  func.func @_act_matmul_kernel(%arg0: i32, %arg1: memref<16x32xf32, #tpu.memory_space<vmem>>, %arg2: memref<32x64xf32, #tpu.memory_space<vmem>>, %arg3: memref<16x64xf32, #tpu.memory_space<vmem>>) attributes {dimension_semantics = [#tpu.dimension_semantics<parallel>], iteration_bounds = array<i64: 1>, scalar_prefetch = 0 : i64, scratch_operands = 0 : i64, tpu.core_type = #tpu.core_type<tc>, window_params = [{transform_indices = @transform_0, window_bounds = array<i64: 16, 32>}, {pipeline_mode = #tpu.pipeline_mode<synchronous>, transform_indices = @transform_1, window_bounds = array<i64: 32, 64>}, {transform_indices = @transform_2, window_bounds = array<i64: 16, 64>}]} {
    %c0 = arith.constant 0 : index
    %c0_0 = arith.constant 0 : index
    %0 = vector.load %arg1[%c0, %c0_0] : memref<16x32xf32, #tpu.memory_space<vmem>>, vector<16x32xf32>
    %1 = arith.truncf %0 : vector<16x32xf32> to vector<16x32xbf16>
    %c0_1 = arith.constant 0 : index
    %c0_2 = arith.constant 0 : index
    %2 = vector.load %arg2[%c0_1, %c0_2] : memref<32x64xf32, #tpu.memory_space<vmem>>, vector<32x64xf32>
    %3 = arith.truncf %2 : vector<32x64xf32> to vector<32x64xbf16>
    %cst = arith.constant dense<0.000000e+00> : vector<16x64xf32>
    %4 = tpu.matmul %1, %3, %cst {dimension_numbers = #tpu.dot_dimension_numbers<[1], [0], [0], [1], [0, 0, 1, 1], [], []>} : vector<16x32xbf16>, vector<32x64xbf16>, vector<16x64xf32> -> vector<16x64xf32>
    %c0_3 = arith.constant 0 : index
    %c0_4 = arith.constant 0 : index
    %5 = vector.load %arg3[%c0_3, %c0_4] : memref<16x64xf32, #tpu.memory_space<vmem>>, vector<16x64xf32>
    tpu.vector_store %arg3[%c0_3, %c0_4], %4 {strides = array<i32>} : memref<16x64xf32, #tpu.memory_space<vmem>>, vector<16x64xf32>,
    return
  }
  func.func @transform_0(%arg0: i32) -> (i32, i32) {
    %c0_i32 = arith.constant 0 : i32
    %c0_i32_0 = arith.constant 0 : i32
    return %arg0, %c0_i32 : i32, i32
  }
  func.func @transform_1(%arg0: i32) -> (i32, i32) {
    %c0_i32 = arith.constant 0 : i32
    %c0_i32_0 = arith.constant 0 : i32
    %c0_i32_1 = arith.constant 0 : i32
    return %c0_i32, %c0_i32_0 : i32, i32
  }
  func.func @transform_2(%arg0: i32) -> (i32, i32) {
    %c0_i32 = arith.constant 0 : i32
    %c0_i32_0 = arith.constant 0 : i32
    return %arg0, %c0_i32 : i32, i32
  }
}

module attributes {stable_mosaic.version = 11 : i64} {
  func.func @_act_matmul_kernel(%arg0: i32, %arg1: memref<16x64xf32, #tpu.memory_space<vmem>>, %arg2: memref<64x128xf32, #tpu.memory_space<vmem>>, %arg3: memref<16x128xf32, #tpu.memory_space<vmem>>) attributes {dimension_semantics = [#tpu.dimension_semantics<parallel>], iteration_bounds = array<i64: 1>, scalar_prefetch = 0 : i64, scratch_operands = 0 : i64, tpu.core_type = #tpu.core_type<tc>, window_params = [{transform_indices = @transform_0, window_bounds = array<i64: 16, 64>}, {pipeline_mode = #tpu.pipeline_mode<synchronous>, transform_indices = @transform_1, window_bounds = array<i64: 64, 128>}, {transform_indices = @transform_2, window_bounds = array<i64: 16, 128>}]} {
    %c0 = arith.constant 0 : index
    %c0_0 = arith.constant 0 : index
    %0 = vector.load %arg1[%c0, %c0_0] : memref<16x64xf32, #tpu.memory_space<vmem>>, vector<16x64xf32>
    %1 = arith.truncf %0 : vector<16x64xf32> to vector<16x64xbf16>
    %c0_1 = arith.constant 0 : index
    %c0_2 = arith.constant 0 : index
    %2 = vector.load %arg2[%c0_1, %c0_2] : memref<64x128xf32, #tpu.memory_space<vmem>>, vector<64x128xf32>
    %3 = arith.truncf %2 : vector<64x128xf32> to vector<64x128xbf16>
    %cst = arith.constant dense<0.000000e+00> : vector<16x128xf32>
    %4 = tpu.matmul %1, %3, %cst {dimension_numbers = #tpu.dot_dimension_numbers<[1], [0], [0], [1], [0, 0, 1, 1], [], []>} : vector<16x64xbf16>, vector<64x128xbf16>, vector<16x128xf32> -> vector<16x128xf32>
    %c0_3 = arith.constant 0 : index
    %c0_4 = arith.constant 0 : index
    %5 = vector.load %arg3[%c0_3, %c0_4] : memref<16x128xf32, #tpu.memory_space<vmem>>, vector<16x128xf32>
    tpu.vector_store %arg3[%c0_3, %c0_4], %4 {strides = array<i32>} : memref<16x128xf32, #tpu.memory_space<vmem>>, vector<16x128xf32>,
    return
  }
  func.func @transform_0(%arg0: i32) -> (i32, i32) {
    %c0_i32 = arith.constant 0 : i32
    %c0_i32_0 = arith.constant 0 : i32
    return %arg0, %c0_i32 : i32, i32
  }
  func.func @transform_1(%arg0: i32) -> (i32, i32) {
    %c0_i32 = arith.constant 0 : i32
    %c0_i32_0 = arith.constant 0 : i32
    %c0_i32_1 = arith.constant 0 : i32
    return %c0_i32, %c0_i32_0 : i32, i32
  }
  func.func @transform_2(%arg0: i32) -> (i32, i32) {
    %c0_i32 = arith.constant 0 : i32
    %c0_i32_0 = arith.constant 0 : i32
    return %arg0, %c0_i32 : i32, i32
  }
}

module attributes {stable_mosaic.version = 11 : i64} {
  func.func @_attn_out_res_kernel(%arg0: i32, %arg1: memref<1x64x64xf32, #tpu.memory_space<vmem>>, %arg2: memref<1x64x64xf32, #tpu.memory_space<vmem>>, %arg3: memref<1x72x64xf32, #tpu.memory_space<vmem>>, %arg4: memref<1x72x64xf32, #tpu.memory_space<vmem>>, %arg5: memref<1x1x64xf32, #tpu.memory_space<vmem>>, %arg6: memref<64x64xf32, #tpu.memory_space<vmem>>, %arg7: memref<1x64x64xf32, #tpu.memory_space<vmem>>) attributes {dimension_semantics = [#tpu.dimension_semantics<parallel>], iteration_bounds = array<i64: 2>, scalar_prefetch = 0 : i64, scratch_operands = 0 : i64, tpu.core_type = #tpu.core_type<tc>, window_params = [{transform_indices = @transform_0, window_bounds = array<i64: 1, 64, 64>}, {transform_indices = @transform_1, window_bounds = array<i64: 1, 64, 64>}, {transform_indices = @transform_2, window_bounds = array<i64: 1, 72, 64>}, {transform_indices = @transform_3, window_bounds = array<i64: 1, 72, 64>}, {transform_indices = @transform_4, window_bounds = array<i64: 1, 1, 64>}, {pipeline_mode = #tpu.pipeline_mode<synchronous>, transform_indices = @transform_5, window_bounds = array<i64: 64, 64>}, {transform_indices = @transform_6, window_bounds = array<i64: 1, 64, 64>}]} {
    %c0 = arith.constant 0 : index
    %c0_0 = arith.constant 0 : index
    %c0_1 = arith.constant 0 : index
    %0 = vector.load %arg1[%c0, %c0_0, %c0_1] : memref<1x64x64xf32, #tpu.memory_space<vmem>>, vector<1x64x64xf32>
    %1 = vector.shape_cast %0 : vector<1x64x64xf32> to vector<64x64xf32>
    %c0_2 = arith.constant 0 : index
    %c0_3 = arith.constant 0 : index
    %c0_4 = arith.constant 0 : index
    %2 = vector.load %arg2[%c0_2, %c0_3, %c0_4] : memref<1x64x64xf32, #tpu.memory_space<vmem>>, vector<1x64x64xf32>
    %3 = vector.shape_cast %2 : vector<1x64x64xf32> to vector<64x64xf32>
    %c0_5 = arith.constant 0 : index
    %c0_6 = arith.constant 0 : index
    %c0_7 = arith.constant 0 : index
    %4 = vector.load %arg3[%c0_5, %c0_6, %c0_7] : memref<1x72x64xf32, #tpu.memory_space<vmem>>, vector<1x72x64xf32>
    %5 = vector.shape_cast %4 : vector<1x72x64xf32> to vector<72x64xf32>
    %c0_8 = arith.constant 0 : index
    %c0_9 = arith.constant 0 : index
    %c0_10 = arith.constant 0 : index
    %6 = vector.load %arg4[%c0_8, %c0_9, %c0_10] : memref<1x72x64xf32, #tpu.memory_space<vmem>>, vector<1x72x64xf32>
    %7 = vector.shape_cast %6 : vector<1x72x64xf32> to vector<72x64xf32>
    %c0_11 = arith.constant 0 : index
    %c0_12 = arith.constant 0 : index
    %8 = vector.load %arg6[%c0_11, %c0_12] : memref<64x64xf32, #tpu.memory_space<vmem>>, vector<64x64xf32>
    %cst = arith.constant 0.000000e+00 : f32
    %9 = vector.broadcast %cst : f32 to vector<64x64xf32>
    %10 = vector.extract_strided_slice %3 {offsets = [0, 0], sizes = [64, 16], strides = [1, 1]} : vector<64x64xf32> to vector<64x16xf32>
    %11 = arith.truncf %10 : vector<64x16xf32> to vector<64x16xbf16>
    %12 = vector.extract_strided_slice %5 {offsets = [0, 0], sizes = [72, 16], strides = [1, 1]} : vector<72x64xf32> to vector<72x16xf32>
    %13 = arith.truncf %12 : vector<72x16xf32> to vector<72x16xbf16>
    %14 = vector.extract_strided_slice %7 {offsets = [0, 0], sizes = [72, 16], strides = [1, 1]} : vector<72x64xf32> to vector<72x16xf32>
    %15 = arith.truncf %14 : vector<72x16xf32> to vector<72x16xbf16>
    %cst_13 = arith.constant dense<0.000000e+00> : vector<64x72xf32>
    %16 = tpu.matmul %11, %13, %cst_13 {dimension_numbers = #tpu.dot_dimension_numbers<[1], [1], [0], [0], [0, 0, 1, 0], [], []>} : vector<64x16xbf16>, vector<72x16xbf16>, vector<64x72xf32> -> vector<64x72xf32>
    %cst_14 = arith.constant 2.500000e-01 : f32
    %17 = vector.broadcast %cst_14 : f32 to vector<64x72xf32>
    %18 = arith.mulf %16, %17 : vector<64x72xf32>
    %cst_15 = arith.constant dense<0xFF800000> : vector<64xf32>
    %19 = vector.multi_reduction <maximumf>, %18, %cst_15 [1] : vector<64x72xf32> to vector<64xf32>
    %20 = vector.shape_cast %19 : vector<64xf32> to vector<64x1xf32>
    %21 = vector.broadcast %20 : vector<64x1xf32> to vector<64x72xf32>
    %22 = arith.subf %18, %21 : vector<64x72xf32>
    %23 = math.exp %22 : vector<64x72xf32>
    %cst_16 = arith.constant dense<0.000000e+00> : vector<64xf32>
    %24 = vector.multi_reduction <add>, %23, %cst_16 [1] : vector<64x72xf32> to vector<64xf32>
    %25 = vector.shape_cast %24 : vector<64xf32> to vector<64x1xf32>
    %26 = vector.broadcast %25 : vector<64x1xf32> to vector<64x72xf32>
    %27 = arith.divf %23, %26 : vector<64x72xf32>
    %28 = arith.truncf %27 : vector<64x72xf32> to vector<64x72xbf16>
    %cst_17 = arith.constant dense<0.000000e+00> : vector<64x16xf32>
    %29 = tpu.matmul %28, %15, %cst_17 {dimension_numbers = #tpu.dot_dimension_numbers<[1], [0], [0], [1], [0, 0, 1, 1], [], []>} : vector<64x72xbf16>, vector<72x16xbf16>, vector<64x16xf32> -> vector<64x16xf32>
    %30 = arith.truncf %29 : vector<64x16xf32> to vector<64x16xbf16>
    %31 = vector.extract_strided_slice %8 {offsets = [0, 0], sizes = [16, 64], strides = [1, 1]} : vector<64x64xf32> to vector<16x64xf32>
    %32 = arith.truncf %31 : vector<16x64xf32> to vector<16x64xbf16>
    %cst_18 = arith.constant dense<0.000000e+00> : vector<64x64xf32>
    %33 = tpu.matmul %30, %32, %cst_18 {dimension_numbers = #tpu.dot_dimension_numbers<[1], [0], [0], [1], [0, 0, 1, 1], [], []>} : vector<64x16xbf16>, vector<16x64xbf16>, vector<64x64xf32> -> vector<64x64xf32>
    %34 = arith.addf %9, %33 : vector<64x64xf32>
    %35 = vector.extract_strided_slice %3 {offsets = [0, 16], sizes = [64, 16], strides = [1, 1]} : vector<64x64xf32> to vector<64x16xf32>
    %36 = arith.truncf %35 : vector<64x16xf32> to vector<64x16xbf16>
    %37 = vector.extract_strided_slice %5 {offsets = [0, 16], sizes = [72, 16], strides = [1, 1]} : vector<72x64xf32> to vector<72x16xf32>
    %38 = arith.truncf %37 : vector<72x16xf32> to vector<72x16xbf16>
    %39 = vector.extract_strided_slice %7 {offsets = [0, 16], sizes = [72, 16], strides = [1, 1]} : vector<72x64xf32> to vector<72x16xf32>
    %40 = arith.truncf %39 : vector<72x16xf32> to vector<72x16xbf16>
    %cst_19 = arith.constant dense<0.000000e+00> : vector<64x72xf32>
    %41 = tpu.matmul %36, %38, %cst_19 {dimension_numbers = #tpu.dot_dimension_numbers<[1], [1], [0], [0], [0, 0, 1, 0], [], []>} : vector<64x16xbf16>, vector<72x16xbf16>, vector<64x72xf32> -> vector<64x72xf32>
    %cst_20 = arith.constant 2.500000e-01 : f32
    %42 = vector.broadcast %cst_20 : f32 to vector<64x72xf32>
    %43 = arith.mulf %41, %42 : vector<64x72xf32>
    %cst_21 = arith.constant dense<0xFF800000> : vector<64xf32>
    %44 = vector.multi_reduction <maximumf>, %43, %cst_21 [1] : vector<64x72xf32> to vector<64xf32>
    %45 = vector.shape_cast %44 : vector<64xf32> to vector<64x1xf32>
    %46 = vector.broadcast %45 : vector<64x1xf32> to vector<64x72xf32>
    %47 = arith.subf %43, %46 : vector<64x72xf32>
    %48 = math.exp %47 : vector<64x72xf32>
    %cst_22 = arith.constant dense<0.000000e+00> : vector<64xf32>
    %49 = vector.multi_reduction <add>, %48, %cst_22 [1] : vector<64x72xf32> to vector<64xf32>
    %50 = vector.shape_cast %49 : vector<64xf32> to vector<64x1xf32>
    %51 = vector.broadcast %50 : vector<64x1xf32> to vector<64x72xf32>
    %52 = arith.divf %48, %51 : vector<64x72xf32>
    %53 = arith.truncf %52 : vector<64x72xf32> to vector<64x72xbf16>
    %cst_23 = arith.constant dense<0.000000e+00> : vector<64x16xf32>
    %54 = tpu.matmul %53, %40, %cst_23 {dimension_numbers = #tpu.dot_dimension_numbers<[1], [0], [0], [1], [0, 0, 1, 1], [], []>} : vector<64x72xbf16>, vector<72x16xbf16>, vector<64x16xf32> -> vector<64x16xf32>
    %55 = arith.truncf %54 : vector<64x16xf32> to vector<64x16xbf16>
    %56 = vector.extract_strided_slice %8 {offsets = [16, 0], sizes = [16, 64], strides = [1, 1]} : vector<64x64xf32> to vector<16x64xf32>
    %57 = arith.truncf %56 : vector<16x64xf32> to vector<16x64xbf16>
    %cst_24 = arith.constant dense<0.000000e+00> : vector<64x64xf32>
    %58 = tpu.matmul %55, %57, %cst_24 {dimension_numbers = #tpu.dot_dimension_numbers<[1], [0], [0], [1], [0, 0, 1, 1], [], []>} : vector<64x16xbf16>, vector<16x64xbf16>, vector<64x64xf32> -> vector<64x64xf32>
    %59 = arith.addf %34, %58 : vector<64x64xf32>
    %60 = vector.extract_strided_slice %3 {offsets = [0, 32], sizes = [64, 16], strides = [1, 1]} : vector<64x64xf32> to vector<64x16xf32>
    %61 = arith.truncf %60 : vector<64x16xf32> to vector<64x16xbf16>
    %62 = vector.extract_strided_slice %5 {offsets = [0, 32], sizes = [72, 16], strides = [1, 1]} : vector<72x64xf32> to vector<72x16xf32>
    %63 = arith.truncf %62 : vector<72x16xf32> to vector<72x16xbf16>
    %64 = vector.extract_strided_slice %7 {offsets = [0, 32], sizes = [72, 16], strides = [1, 1]} : vector<72x64xf32> to vector<72x16xf32>
    %65 = arith.truncf %64 : vector<72x16xf32> to vector<72x16xbf16>
    %cst_25 = arith.constant dense<0.000000e+00> : vector<64x72xf32>
    %66 = tpu.matmul %61, %63, %cst_25 {dimension_numbers = #tpu.dot_dimension_numbers<[1], [1], [0], [0], [0, 0, 1, 0], [], []>} : vector<64x16xbf16>, vector<72x16xbf16>, vector<64x72xf32> -> vector<64x72xf32>
    %cst_26 = arith.constant 2.500000e-01 : f32
    %67 = vector.broadcast %cst_26 : f32 to vector<64x72xf32>
    %68 = arith.mulf %66, %67 : vector<64x72xf32>
    %cst_27 = arith.constant dense<0xFF800000> : vector<64xf32>
    %69 = vector.multi_reduction <maximumf>, %68, %cst_27 [1] : vector<64x72xf32> to vector<64xf32>
    %70 = vector.shape_cast %69 : vector<64xf32> to vector<64x1xf32>
    %71 = vector.broadcast %70 : vector<64x1xf32> to vector<64x72xf32>
    %72 = arith.subf %68, %71 : vector<64x72xf32>
    %73 = math.exp %72 : vector<64x72xf32>
    %cst_28 = arith.constant dense<0.000000e+00> : vector<64xf32>
    %74 = vector.multi_reduction <add>, %73, %cst_28 [1] : vector<64x72xf32> to vector<64xf32>
    %75 = vector.shape_cast %74 : vector<64xf32> to vector<64x1xf32>
    %76 = vector.broadcast %75 : vector<64x1xf32> to vector<64x72xf32>
    %77 = arith.divf %73, %76 : vector<64x72xf32>
    %78 = arith.truncf %77 : vector<64x72xf32> to vector<64x72xbf16>
    %cst_29 = arith.constant dense<0.000000e+00> : vector<64x16xf32>
    %79 = tpu.matmul %78, %65, %cst_29 {dimension_numbers = #tpu.dot_dimension_numbers<[1], [0], [0], [1], [0, 0, 1, 1], [], []>} : vector<64x72xbf16>, vector<72x16xbf16>, vector<64x16xf32> -> vector<64x16xf32>
    %80 = arith.truncf %79 : vector<64x16xf32> to vector<64x16xbf16>
    %81 = vector.extract_strided_slice %8 {offsets = [32, 0], sizes = [16, 64], strides = [1, 1]} : vector<64x64xf32> to vector<16x64xf32>
    %82 = arith.truncf %81 : vector<16x64xf32> to vector<16x64xbf16>
    %cst_30 = arith.constant dense<0.000000e+00> : vector<64x64xf32>
    %83 = tpu.matmul %80, %82, %cst_30 {dimension_numbers = #tpu.dot_dimension_numbers<[1], [0], [0], [1], [0, 0, 1, 1], [], []>} : vector<64x16xbf16>, vector<16x64xbf16>, vector<64x64xf32> -> vector<64x64xf32>
    %84 = arith.addf %59, %83 : vector<64x64xf32>
    %85 = vector.extract_strided_slice %3 {offsets = [0, 48], sizes = [64, 16], strides = [1, 1]} : vector<64x64xf32> to vector<64x16xf32>
    %86 = arith.truncf %85 : vector<64x16xf32> to vector<64x16xbf16>
    %87 = vector.extract_strided_slice %5 {offsets = [0, 48], sizes = [72, 16], strides = [1, 1]} : vector<72x64xf32> to vector<72x16xf32>
    %88 = arith.truncf %87 : vector<72x16xf32> to vector<72x16xbf16>
    %89 = vector.extract_strided_slice %7 {offsets = [0, 48], sizes = [72, 16], strides = [1, 1]} : vector<72x64xf32> to vector<72x16xf32>
    %90 = arith.truncf %89 : vector<72x16xf32> to vector<72x16xbf16>
    %cst_31 = arith.constant dense<0.000000e+00> : vector<64x72xf32>
    %91 = tpu.matmul %86, %88, %cst_31 {dimension_numbers = #tpu.dot_dimension_numbers<[1], [1], [0], [0], [0, 0, 1, 0], [], []>} : vector<64x16xbf16>, vector<72x16xbf16>, vector<64x72xf32> -> vector<64x72xf32>
    %cst_32 = arith.constant 2.500000e-01 : f32
    %92 = vector.broadcast %cst_32 : f32 to vector<64x72xf32>
    %93 = arith.mulf %91, %92 : vector<64x72xf32>
    %cst_33 = arith.constant dense<0xFF800000> : vector<64xf32>
    %94 = vector.multi_reduction <maximumf>, %93, %cst_33 [1] : vector<64x72xf32> to vector<64xf32>
    %95 = vector.shape_cast %94 : vector<64xf32> to vector<64x1xf32>
    %96 = vector.broadcast %95 : vector<64x1xf32> to vector<64x72xf32>
    %97 = arith.subf %93, %96 : vector<64x72xf32>
    %98 = math.exp %97 : vector<64x72xf32>
    %cst_34 = arith.constant dense<0.000000e+00> : vector<64xf32>
    %99 = vector.multi_reduction <add>, %98, %cst_34 [1] : vector<64x72xf32> to vector<64xf32>
    %100 = vector.shape_cast %99 : vector<64xf32> to vector<64x1xf32>
    %101 = vector.broadcast %100 : vector<64x1xf32> to vector<64x72xf32>
    %102 = arith.divf %98, %101 : vector<64x72xf32>
    %103 = arith.truncf %102 : vector<64x72xf32> to vector<64x72xbf16>
    %cst_35 = arith.constant dense<0.000000e+00> : vector<64x16xf32>
    %104 = tpu.matmul %103, %90, %cst_35 {dimension_numbers = #tpu.dot_dimension_numbers<[1], [0], [0], [1], [0, 0, 1, 1], [], []>} : vector<64x72xbf16>, vector<72x16xbf16>, vector<64x16xf32> -> vector<64x16xf32>
    %105 = arith.truncf %104 : vector<64x16xf32> to vector<64x16xbf16>
    %106 = vector.extract_strided_slice %8 {offsets = [48, 0], sizes = [16, 64], strides = [1, 1]} : vector<64x64xf32> to vector<16x64xf32>
    %107 = arith.truncf %106 : vector<16x64xf32> to vector<16x64xbf16>
    %cst_36 = arith.constant dense<0.000000e+00> : vector<64x64xf32>
    %108 = tpu.matmul %105, %107, %cst_36 {dimension_numbers = #tpu.dot_dimension_numbers<[1], [0], [0], [1], [0, 0, 1, 1], [], []>} : vector<64x16xbf16>, vector<16x64xbf16>, vector<64x64xf32> -> vector<64x64xf32>
    %109 = arith.addf %84, %108 : vector<64x64xf32>
    %c0_37 = arith.constant 0 : index
    %c0_38 = arith.constant 0 : index
    %c0_39 = arith.constant 0 : index
    %110 = vector.load %arg5[%c0_37, %c0_38, %c0_39] : memref<1x1x64xf32, #tpu.memory_space<vmem>>, vector<1x1x64xf32>
    %111 = vector.shape_cast %110 : vector<1x1x64xf32> to vector<1x64xf32>
    %112 = vector.broadcast %111 : vector<1x64xf32> to vector<64x64xf32>
    %113 = arith.mulf %112, %109 : vector<64x64xf32>
    %114 = arith.addf %1, %113 : vector<64x64xf32>
    %c0_40 = arith.constant 0 : index
    %c0_41 = arith.constant 0 : index
    %c0_42 = arith.constant 0 : index
    %115 = vector.load %arg7[%c0_40, %c0_41, %c0_42] : memref<1x64x64xf32, #tpu.memory_space<vmem>>, vector<1x64x64xf32>
    %116 = vector.shape_cast %115 : vector<1x64x64xf32> to vector<64x64xf32>
    %117 = vector.shape_cast %114 : vector<64x64xf32> to vector<1x64x64xf32>
    tpu.vector_store %arg7[%c0_40, %c0_41, %c0_42], %117 {strides = array<i32>} : memref<1x64x64xf32, #tpu.memory_space<vmem>>, vector<1x64x64xf32>,
    return
  }
  func.func @transform_0(%arg0: i32) -> (i32, i32, i32) {
    %c0_i32 = arith.constant 0 : i32
    %c0_i32_0 = arith.constant 0 : i32
    %c0_i32_1 = arith.constant 0 : i32
    return %arg0, %c0_i32, %c0_i32_0 : i32, i32, i32
  }
  func.func @transform_1(%arg0: i32) -> (i32, i32, i32) {
    %c0_i32 = arith.constant 0 : i32
    %c0_i32_0 = arith.constant 0 : i32
    %c0_i32_1 = arith.constant 0 : i32
    return %arg0, %c0_i32, %c0_i32_0 : i32, i32, i32
  }
  func.func @transform_2(%arg0: i32) -> (i32, i32, i32) {
    %c0_i32 = arith.constant 0 : i32
    %c0_i32_0 = arith.constant 0 : i32
    %c0_i32_1 = arith.constant 0 : i32
    return %arg0, %c0_i32, %c0_i32_0 : i32, i32, i32
  }
  func.func @transform_3(%arg0: i32) -> (i32, i32, i32) {
    %c0_i32 = arith.constant 0 : i32
    %c0_i32_0 = arith.constant 0 : i32
    %c0_i32_1 = arith.constant 0 : i32
    return %arg0, %c0_i32, %c0_i32_0 : i32, i32, i32
  }
  func.func @transform_4(%arg0: i32) -> (i32, i32, i32) {
    %c0_i32 = arith.constant 0 : i32
    %c0_i32_0 = arith.constant 0 : i32
    %c0_i32_1 = arith.constant 0 : i32
    return %arg0, %c0_i32, %c0_i32_0 : i32, i32, i32
  }
  func.func @transform_5(%arg0: i32) -> (i32, i32) {
    %c0_i32 = arith.constant 0 : i32
    %c0_i32_0 = arith.constant 0 : i32
    %c0_i32_1 = arith.constant 0 : i32
    return %c0_i32, %c0_i32_0 : i32, i32
  }
  func.func @transform_6(%arg0: i32) -> (i32, i32, i32) {
    %c0_i32 = arith.constant 0 : i32
    %c0_i32_0 = arith.constant 0 : i32
    %c0_i32_1 = arith.constant 0 : i32
    return %arg0, %c0_i32, %c0_i32_0 : i32, i32, i32
  }
}

module attributes {stable_mosaic.version = 11 : i64} {
  func.func @_act_matmul_kernel(%arg0: i32, %arg1: memref<2x64xf32, #tpu.memory_space<vmem>>, %arg2: memref<64x128xf32, #tpu.memory_space<vmem>>, %arg3: memref<2x128xf32, #tpu.memory_space<vmem>>) attributes {dimension_semantics = [#tpu.dimension_semantics<parallel>], iteration_bounds = array<i64: 1>, scalar_prefetch = 0 : i64, scratch_operands = 0 : i64, tpu.core_type = #tpu.core_type<tc>, window_params = [{transform_indices = @transform_0, window_bounds = array<i64: 2, 64>}, {pipeline_mode = #tpu.pipeline_mode<synchronous>, transform_indices = @transform_1, window_bounds = array<i64: 64, 128>}, {transform_indices = @transform_2, window_bounds = array<i64: 2, 128>}]} {
    %c0 = arith.constant 0 : index
    %c0_0 = arith.constant 0 : index
    %0 = vector.load %arg1[%c0, %c0_0] : memref<2x64xf32, #tpu.memory_space<vmem>>, vector<2x64xf32>
    %1 = arith.negf %0 : vector<2x64xf32>
    %2 = math.exp %1 : vector<2x64xf32>
    %cst = arith.constant 1.000000e+00 : f32
    %3 = vector.broadcast %cst : f32 to vector<2x64xf32>
    %4 = arith.addf %3, %2 : vector<2x64xf32>
    %5 = arith.divf %3, %4 : vector<2x64xf32>
    %6 = arith.mulf %0, %5 : vector<2x64xf32>
    %7 = arith.truncf %6 : vector<2x64xf32> to vector<2x64xbf16>
    %c0_1 = arith.constant 0 : index
    %c0_2 = arith.constant 0 : index
    %8 = vector.load %arg2[%c0_1, %c0_2] : memref<64x128xf32, #tpu.memory_space<vmem>>, vector<64x128xf32>
    %9 = arith.truncf %8 : vector<64x128xf32> to vector<64x128xbf16>
    %cst_3 = arith.constant dense<0.000000e+00> : vector<2x128xf32>
    %10 = tpu.matmul %7, %9, %cst_3 {dimension_numbers = #tpu.dot_dimension_numbers<[1], [0], [0], [1], [0, 0, 1, 1], [], []>} : vector<2x64xbf16>, vector<64x128xbf16>, vector<2x128xf32> -> vector<2x128xf32>
    %c0_4 = arith.constant 0 : index
    %c0_5 = arith.constant 0 : index
    %11 = vector.load %arg3[%c0_4, %c0_5] : memref<2x128xf32, #tpu.memory_space<vmem>>, vector<2x128xf32>
    tpu.vector_store %arg3[%c0_4, %c0_5], %10 {strides = array<i32>} : memref<2x128xf32, #tpu.memory_space<vmem>>, vector<2x128xf32>,
    return
  }
  func.func @transform_0(%arg0: i32) -> (i32, i32) {
    %c0_i32 = arith.constant 0 : i32
    %c0_i32_0 = arith.constant 0 : i32
    return %arg0, %c0_i32 : i32, i32
  }
  func.func @transform_1(%arg0: i32) -> (i32, i32) {
    %c0_i32 = arith.constant 0 : i32
    %c0_i32_0 = arith.constant 0 : i32
    %c0_i32_1 = arith.constant 0 : i32
    return %c0_i32, %c0_i32_0 : i32, i32
  }
  func.func @transform_2(%arg0: i32) -> (i32, i32) {
    %c0_i32 = arith.constant 0 : i32
    %c0_i32_0 = arith.constant 0 : i32
    return %arg0, %c0_i32 : i32, i32
  }
}

module attributes {stable_mosaic.version = 11 : i64} {
  func.func @_ln_mod_mlp_res_kernel(%arg0: i32, %arg1: i32, %arg2: memref<1x64x64xf32, #tpu.memory_space<vmem>>, %arg3: memref<1x1x64xf32, #tpu.memory_space<vmem>>, %arg4: memref<1x1x64xf32, #tpu.memory_space<vmem>>, %arg5: memref<1x1x64xf32, #tpu.memory_space<vmem>>, %arg6: memref<64x256xf32, #tpu.memory_space<vmem>>, %arg7: memref<256x64xf32, #tpu.memory_space<vmem>>, %arg8: memref<1x64x64xf32, #tpu.memory_space<vmem>>) attributes {dimension_semantics = [#tpu.dimension_semantics<parallel>, #tpu.dimension_semantics<parallel>], iteration_bounds = array<i64: 2, 1>, scalar_prefetch = 0 : i64, scratch_operands = 0 : i64, tpu.core_type = #tpu.core_type<tc>, window_params = [{transform_indices = @transform_0, window_bounds = array<i64: 1, 64, 64>}, {transform_indices = @transform_1, window_bounds = array<i64: 1, 1, 64>}, {transform_indices = @transform_2, window_bounds = array<i64: 1, 1, 64>}, {transform_indices = @transform_3, window_bounds = array<i64: 1, 1, 64>}, {pipeline_mode = #tpu.pipeline_mode<synchronous>, transform_indices = @transform_4, window_bounds = array<i64: 64, 256>}, {pipeline_mode = #tpu.pipeline_mode<synchronous>, transform_indices = @transform_5, window_bounds = array<i64: 256, 64>}, {transform_indices = @transform_6, window_bounds = array<i64: 1, 64, 64>}]} {
    %c0 = arith.constant 0 : index
    %c0_0 = arith.constant 0 : index
    %c0_1 = arith.constant 0 : index
    %0 = vector.load %arg2[%c0, %c0_0, %c0_1] : memref<1x64x64xf32, #tpu.memory_space<vmem>>, vector<1x64x64xf32>
    %1 = vector.shape_cast %0 : vector<1x64x64xf32> to vector<64x64xf32>
    %c0_2 = arith.constant 0 : index
    %c0_3 = arith.constant 0 : index
    %c0_4 = arith.constant 0 : index
    %2 = vector.load %arg3[%c0_2, %c0_3, %c0_4] : memref<1x1x64xf32, #tpu.memory_space<vmem>>, vector<1x1x64xf32>
    %3 = vector.shape_cast %2 : vector<1x1x64xf32> to vector<1x64xf32>
    %c0_5 = arith.constant 0 : index
    %c0_6 = arith.constant 0 : index
    %c0_7 = arith.constant 0 : index
    %4 = vector.load %arg4[%c0_5, %c0_6, %c0_7] : memref<1x1x64xf32, #tpu.memory_space<vmem>>, vector<1x1x64xf32>
    %5 = vector.shape_cast %4 : vector<1x1x64xf32> to vector<1x64xf32>
    %cst = arith.constant dense<0.000000e+00> : vector<64xf32>
    %6 = vector.multi_reduction <add>, %1, %cst [1] : vector<64x64xf32> to vector<64xf32>
    %7 = vector.shape_cast %6 : vector<64xf32> to vector<64x1xf32>
    %cst_8 = arith.constant 6.400000e+01 : f32
    %8 = vector.broadcast %cst_8 : f32 to vector<64x1xf32>
    %9 = arith.divf %7, %8 : vector<64x1xf32>
    %10 = vector.broadcast %9 : vector<64x1xf32> to vector<64x64xf32>
    %11 = arith.subf %1, %10 : vector<64x64xf32>
    %12 = arith.mulf %11, %11 : vector<64x64xf32>
    %cst_9 = arith.constant dense<0.000000e+00> : vector<64xf32>
    %13 = vector.multi_reduction <add>, %12, %cst_9 [1] : vector<64x64xf32> to vector<64xf32>
    %14 = vector.shape_cast %13 : vector<64xf32> to vector<64x1xf32>
    %cst_10 = arith.constant 6.400000e+01 : f32
    %15 = vector.broadcast %cst_10 : f32 to vector<64x1xf32>
    %16 = arith.divf %14, %15 : vector<64x1xf32>
    %17 = vector.broadcast %9 : vector<64x1xf32> to vector<64x64xf32>
    %18 = arith.subf %1, %17 : vector<64x64xf32>
    %cst_11 = arith.constant 9.99999997E-7 : f32
    %19 = vector.broadcast %cst_11 : f32 to vector<64x1xf32>
    %20 = arith.addf %16, %19 : vector<64x1xf32>
    %21 = math.rsqrt %20 : vector<64x1xf32>
    %22 = vector.broadcast %21 : vector<64x1xf32> to vector<64x64xf32>
    %23 = arith.mulf %18, %22 : vector<64x64xf32>
    %cst_12 = arith.constant 1.000000e+00 : f32
    %24 = vector.broadcast %cst_12 : f32 to vector<1x64xf32>
    %25 = arith.addf %24, %5 : vector<1x64xf32>
    %26 = vector.broadcast %25 : vector<1x64xf32> to vector<64x64xf32>
    %27 = arith.mulf %23, %26 : vector<64x64xf32>
    %28 = vector.broadcast %3 : vector<1x64xf32> to vector<64x64xf32>
    %29 = arith.addf %27, %28 : vector<64x64xf32>
    %30 = arith.truncf %29 : vector<64x64xf32> to vector<64x64xbf16>
    %c0_13 = arith.constant 0 : index
    %c0_14 = arith.constant 0 : index
    %31 = vector.load %arg6[%c0_13, %c0_14] : memref<64x256xf32, #tpu.memory_space<vmem>>, vector<64x256xf32>
    %32 = arith.truncf %31 : vector<64x256xf32> to vector<64x256xbf16>
    %cst_15 = arith.constant dense<0.000000e+00> : vector<64x256xf32>
    %33 = tpu.matmul %30, %32, %cst_15 {dimension_numbers = #tpu.dot_dimension_numbers<[1], [0], [0], [1], [0, 0, 1, 1], [], []>} : vector<64x64xbf16>, vector<64x256xbf16>, vector<64x256xf32> -> vector<64x256xf32>
    %34 = arith.mulf %33, %33 : vector<64x256xf32>
    %35 = arith.mulf %33, %34 : vector<64x256xf32>
    %cst_16 = arith.constant 4.471500e-02 : f32
    %36 = vector.broadcast %cst_16 : f32 to vector<64x256xf32>
    %37 = arith.mulf %36, %35 : vector<64x256xf32>
    %38 = arith.addf %33, %37 : vector<64x256xf32>
    %cst_17 = arith.constant 0.797884583 : f32
    %39 = vector.broadcast %cst_17 : f32 to vector<64x256xf32>
    %40 = arith.mulf %39, %38 : vector<64x256xf32>
    %41 = math.tanh %40 : vector<64x256xf32>
    %cst_18 = arith.constant 1.000000e+00 : f32
    %42 = vector.broadcast %cst_18 : f32 to vector<64x256xf32>
    %43 = arith.addf %42, %41 : vector<64x256xf32>
    %cst_19 = arith.constant 5.000000e-01 : f32
    %44 = vector.broadcast %cst_19 : f32 to vector<64x256xf32>
    %45 = arith.mulf %44, %43 : vector<64x256xf32>
    %46 = arith.mulf %33, %45 : vector<64x256xf32>
    %47 = arith.truncf %46 : vector<64x256xf32> to vector<64x256xbf16>
    %c0_20 = arith.constant 0 : index
    %c0_21 = arith.constant 0 : index
    %48 = vector.load %arg7[%c0_20, %c0_21] : memref<256x64xf32, #tpu.memory_space<vmem>>, vector<256x64xf32>
    %49 = arith.truncf %48 : vector<256x64xf32> to vector<256x64xbf16>
    %cst_22 = arith.constant dense<0.000000e+00> : vector<64x64xf32>
    %50 = tpu.matmul %47, %49, %cst_22 {dimension_numbers = #tpu.dot_dimension_numbers<[1], [0], [0], [1], [0, 0, 1, 1], [], []>} : vector<64x256xbf16>, vector<256x64xbf16>, vector<64x64xf32> -> vector<64x64xf32>
    %c0_23 = arith.constant 0 : index
    %c0_24 = arith.constant 0 : index
    %c0_25 = arith.constant 0 : index
    %51 = vector.load %arg5[%c0_23, %c0_24, %c0_25] : memref<1x1x64xf32, #tpu.memory_space<vmem>>, vector<1x1x64xf32>
    %52 = vector.shape_cast %51 : vector<1x1x64xf32> to vector<1x64xf32>
    %53 = vector.broadcast %52 : vector<1x64xf32> to vector<64x64xf32>
    %54 = arith.mulf %53, %50 : vector<64x64xf32>
    %55 = arith.addf %1, %54 : vector<64x64xf32>
    %c0_26 = arith.constant 0 : index
    %c0_27 = arith.constant 0 : index
    %c0_28 = arith.constant 0 : index
    %56 = vector.load %arg8[%c0_26, %c0_27, %c0_28] : memref<1x64x64xf32, #tpu.memory_space<vmem>>, vector<1x64x64xf32>
    %57 = vector.shape_cast %56 : vector<1x64x64xf32> to vector<64x64xf32>
    %58 = vector.shape_cast %55 : vector<64x64xf32> to vector<1x64x64xf32>
    tpu.vector_store %arg8[%c0_26, %c0_27, %c0_28], %58 {strides = array<i32>} : memref<1x64x64xf32, #tpu.memory_space<vmem>>, vector<1x64x64xf32>,
    return
  }
  func.func @transform_0(%arg0: i32, %arg1: i32) -> (i32, i32, i32) {
    %c0_i32 = arith.constant 0 : i32
    %c0_i32_0 = arith.constant 0 : i32
    return %arg0, %arg1, %c0_i32 : i32, i32, i32
  }
  func.func @transform_1(%arg0: i32, %arg1: i32) -> (i32, i32, i32) {
    %c0_i32 = arith.constant 0 : i32
    %c0_i32_0 = arith.constant 0 : i32
    %c0_i32_1 = arith.constant 0 : i32
    return %arg0, %c0_i32, %c0_i32_0 : i32, i32, i32
  }
  func.func @transform_2(%arg0: i32, %arg1: i32) -> (i32, i32, i32) {
    %c0_i32 = arith.constant 0 : i32
    %c0_i32_0 = arith.constant 0 : i32
    %c0_i32_1 = arith.constant 0 : i32
    return %arg0, %c0_i32, %c0_i32_0 : i32, i32, i32
  }
  func.func @transform_3(%arg0: i32, %arg1: i32) -> (i32, i32, i32) {
    %c0_i32 = arith.constant 0 : i32
    %c0_i32_0 = arith.constant 0 : i32
    %c0_i32_1 = arith.constant 0 : i32
    return %arg0, %c0_i32, %c0_i32_0 : i32, i32, i32
  }
  func.func @transform_4(%arg0: i32, %arg1: i32) -> (i32, i32) {
    %c0_i32 = arith.constant 0 : i32
    %c0_i32_0 = arith.constant 0 : i32
    %c0_i32_1 = arith.constant 0 : i32
    return %c0_i32, %c0_i32_0 : i32, i32
  }
  func.func @transform_5(%arg0: i32, %arg1: i32) -> (i32, i32) {
    %c0_i32 = arith.constant 0 : i32
    %c0_i32_0 = arith.constant 0 : i32
    %c0_i32_1 = arith.constant 0 : i32
    return %c0_i32, %c0_i32_0 : i32, i32
  }
  func.func @transform_6(%arg0: i32, %arg1: i32) -> (i32, i32, i32) {
    %c0_i32 = arith.constant 0 : i32
    %c0_i32_0 = arith.constant 0 : i32
    return %arg0, %arg1, %c0_i32 : i32, i32, i32
  }
}

module attributes {stable_mosaic.version = 11 : i64} {
  func.func @_ln_mod_matmul_kernel(%arg0: i32, %arg1: i32, %arg2: memref<1x64x64xf32, #tpu.memory_space<vmem>>, %arg3: memref<1x1x64xf32, #tpu.memory_space<vmem>>, %arg4: memref<1x1x64xf32, #tpu.memory_space<vmem>>, %arg5: memref<64x4xf32, #tpu.memory_space<vmem>>, %arg6: memref<1x64x4xf32, #tpu.memory_space<vmem>>) attributes {dimension_semantics = [#tpu.dimension_semantics<parallel>, #tpu.dimension_semantics<parallel>], iteration_bounds = array<i64: 2, 1>, scalar_prefetch = 0 : i64, scratch_operands = 0 : i64, tpu.core_type = #tpu.core_type<tc>, window_params = [{transform_indices = @transform_0, window_bounds = array<i64: 1, 64, 64>}, {transform_indices = @transform_1, window_bounds = array<i64: 1, 1, 64>}, {transform_indices = @transform_2, window_bounds = array<i64: 1, 1, 64>}, {pipeline_mode = #tpu.pipeline_mode<synchronous>, transform_indices = @transform_3, window_bounds = array<i64: 64, 4>}, {transform_indices = @transform_4, window_bounds = array<i64: 1, 64, 4>}]} {
    %c0 = arith.constant 0 : index
    %c0_0 = arith.constant 0 : index
    %c0_1 = arith.constant 0 : index
    %0 = vector.load %arg2[%c0, %c0_0, %c0_1] : memref<1x64x64xf32, #tpu.memory_space<vmem>>, vector<1x64x64xf32>
    %1 = vector.shape_cast %0 : vector<1x64x64xf32> to vector<64x64xf32>
    %c0_2 = arith.constant 0 : index
    %c0_3 = arith.constant 0 : index
    %c0_4 = arith.constant 0 : index
    %2 = vector.load %arg3[%c0_2, %c0_3, %c0_4] : memref<1x1x64xf32, #tpu.memory_space<vmem>>, vector<1x1x64xf32>
    %3 = vector.shape_cast %2 : vector<1x1x64xf32> to vector<1x64xf32>
    %c0_5 = arith.constant 0 : index
    %c0_6 = arith.constant 0 : index
    %c0_7 = arith.constant 0 : index
    %4 = vector.load %arg4[%c0_5, %c0_6, %c0_7] : memref<1x1x64xf32, #tpu.memory_space<vmem>>, vector<1x1x64xf32>
    %5 = vector.shape_cast %4 : vector<1x1x64xf32> to vector<1x64xf32>
    %cst = arith.constant dense<0.000000e+00> : vector<64xf32>
    %6 = vector.multi_reduction <add>, %1, %cst [1] : vector<64x64xf32> to vector<64xf32>
    %7 = vector.shape_cast %6 : vector<64xf32> to vector<64x1xf32>
    %cst_8 = arith.constant 6.400000e+01 : f32
    %8 = vector.broadcast %cst_8 : f32 to vector<64x1xf32>
    %9 = arith.divf %7, %8 : vector<64x1xf32>
    %10 = vector.broadcast %9 : vector<64x1xf32> to vector<64x64xf32>
    %11 = arith.subf %1, %10 : vector<64x64xf32>
    %12 = arith.mulf %11, %11 : vector<64x64xf32>
    %cst_9 = arith.constant dense<0.000000e+00> : vector<64xf32>
    %13 = vector.multi_reduction <add>, %12, %cst_9 [1] : vector<64x64xf32> to vector<64xf32>
    %14 = vector.shape_cast %13 : vector<64xf32> to vector<64x1xf32>
    %cst_10 = arith.constant 6.400000e+01 : f32
    %15 = vector.broadcast %cst_10 : f32 to vector<64x1xf32>
    %16 = arith.divf %14, %15 : vector<64x1xf32>
    %17 = vector.broadcast %9 : vector<64x1xf32> to vector<64x64xf32>
    %18 = arith.subf %1, %17 : vector<64x64xf32>
    %cst_11 = arith.constant 9.99999997E-7 : f32
    %19 = vector.broadcast %cst_11 : f32 to vector<64x1xf32>
    %20 = arith.addf %16, %19 : vector<64x1xf32>
    %21 = math.rsqrt %20 : vector<64x1xf32>
    %22 = vector.broadcast %21 : vector<64x1xf32> to vector<64x64xf32>
    %23 = arith.mulf %18, %22 : vector<64x64xf32>
    %cst_12 = arith.constant 1.000000e+00 : f32
    %24 = vector.broadcast %cst_12 : f32 to vector<1x64xf32>
    %25 = arith.addf %24, %5 : vector<1x64xf32>
    %26 = vector.broadcast %25 : vector<1x64xf32> to vector<64x64xf32>
    %27 = arith.mulf %23, %26 : vector<64x64xf32>
    %28 = vector.broadcast %3 : vector<1x64xf32> to vector<64x64xf32>
    %29 = arith.addf %27, %28 : vector<64x64xf32>
    %30 = arith.truncf %29 : vector<64x64xf32> to vector<64x64xbf16>
    %c0_13 = arith.constant 0 : index
    %c0_14 = arith.constant 0 : index
    %31 = vector.load %arg5[%c0_13, %c0_14] : memref<64x4xf32, #tpu.memory_space<vmem>>, vector<64x4xf32>
    %32 = arith.truncf %31 : vector<64x4xf32> to vector<64x4xbf16>
    %cst_15 = arith.constant dense<0.000000e+00> : vector<64x4xf32>
    %33 = tpu.matmul %30, %32, %cst_15 {dimension_numbers = #tpu.dot_dimension_numbers<[1], [0], [0], [1], [0, 0, 1, 1], [], []>} : vector<64x64xbf16>, vector<64x4xbf16>, vector<64x4xf32> -> vector<64x4xf32>
    %c0_16 = arith.constant 0 : index
    %c0_17 = arith.constant 0 : index
    %c0_18 = arith.constant 0 : index
    %34 = vector.load %arg6[%c0_16, %c0_17, %c0_18] : memref<1x64x4xf32, #tpu.memory_space<vmem>>, vector<1x64x4xf32>
    %35 = vector.shape_cast %34 : vector<1x64x4xf32> to vector<64x4xf32>
    %36 = vector.shape_cast %33 : vector<64x4xf32> to vector<1x64x4xf32>
    tpu.vector_store %arg6[%c0_16, %c0_17, %c0_18], %36 {strides = array<i32>} : memref<1x64x4xf32, #tpu.memory_space<vmem>>, vector<1x64x4xf32>,
    return
  }
  func.func @transform_0(%arg0: i32, %arg1: i32) -> (i32, i32, i32) {
    %c0_i32 = arith.constant 0 : i32
    %c0_i32_0 = arith.constant 0 : i32
    return %arg0, %arg1, %c0_i32 : i32, i32, i32
  }
  func.func @transform_1(%arg0: i32, %arg1: i32) -> (i32, i32, i32) {
    %c0_i32 = arith.constant 0 : i32
    %c0_i32_0 = arith.constant 0 : i32
    %c0_i32_1 = arith.constant 0 : i32
    return %arg0, %c0_i32, %c0_i32_0 : i32, i32, i32
  }
  func.func @transform_2(%arg0: i32, %arg1: i32) -> (i32, i32, i32) {
    %c0_i32 = arith.constant 0 : i32
    %c0_i32_0 = arith.constant 0 : i32
    %c0_i32_1 = arith.constant 0 : i32
    return %arg0, %c0_i32, %c0_i32_0 : i32, i32, i32
  }
  func.func @transform_3(%arg0: i32, %arg1: i32) -> (i32, i32) {
    %c0_i32 = arith.constant 0 : i32
    %c0_i32_0 = arith.constant 0 : i32
    %c0_i32_1 = arith.constant 0 : i32
    return %c0_i32, %c0_i32_0 : i32, i32
  }
  func.func @transform_4(%arg0: i32, %arg1: i32) -> (i32, i32, i32) {
    %c0_i32 = arith.constant 0 : i32
    %c0_i32_0 = arith.constant 0 : i32
    return %arg0, %arg1, %c0_i32 : i32, i32, i32
  }
}

module attributes {stable_mosaic.version = 11 : i64} {
  func.func @_mse_kernel(%arg0: i32, %arg1: memref<64x8xf32, #tpu.memory_space<vmem>>, %arg2: memref<64x8xf32, #tpu.memory_space<vmem>>, %arg3: memref<1x1xf32, #tpu.memory_space<vmem>>, %arg4: memref<1x1xf32, #tpu.memory_space<vmem>>) attributes {dimension_semantics = [#tpu.dimension_semantics<arbitrary>], iteration_bounds = array<i64: 1>, scalar_prefetch = 0 : i64, scratch_operands = 1 : i64, tpu.core_type = #tpu.core_type<tc>, window_params = [{transform_indices = @transform_0, window_bounds = array<i64: 64, 8>}, {transform_indices = @transform_1, window_bounds = array<i64: 64, 8>}, {pipeline_mode = #tpu.pipeline_mode<synchronous>, transform_indices = @transform_2, window_bounds = array<i64: 1, 1>}]} {
    %c0_i32 = arith.constant 0 : i32
    %0 = arith.cmpi eq, %arg0, %c0_i32 : i32
    %1 = arith.extui %0 : i1 to i32
    %c0_i32_0 = arith.constant 0 : i32
    %2 = arith.cmpi ne, %1, %c0_i32_0 : i32
    scf.if %2 {
      %cst_10 = arith.constant 0.000000e+00 : f32
      %18 = vector.broadcast %cst_10 : f32 to vector<1x1xf32>
      %c0_11 = arith.constant 0 : index
      %c0_12 = arith.constant 0 : index
      %19 = vector.load %arg4[%c0_11, %c0_12] : memref<1x1xf32, #tpu.memory_space<vmem>>, vector<1x1xf32>
      tpu.vector_store %arg4[%c0_11, %c0_12], %18 {strides = array<i32>} : memref<1x1xf32, #tpu.memory_space<vmem>>, vector<1x1xf32>,
    } else {
    }
    %c0 = arith.constant 0 : index
    %c0_1 = arith.constant 0 : index
    %3 = vector.load %arg1[%c0, %c0_1] : memref<64x8xf32, #tpu.memory_space<vmem>>, vector<64x8xf32>
    %c0_2 = arith.constant 0 : index
    %c0_3 = arith.constant 0 : index
    %4 = vector.load %arg2[%c0_2, %c0_3] : memref<64x8xf32, #tpu.memory_space<vmem>>, vector<64x8xf32>
    %5 = arith.subf %3, %4 : vector<64x8xf32>
    %c0_4 = arith.constant 0 : index
    %c0_5 = arith.constant 0 : index
    %6 = vector.load %arg4[%c0_4, %c0_5] : memref<1x1xf32, #tpu.memory_space<vmem>>, vector<1x1xf32>
    %7 = arith.mulf %5, %5 : vector<64x8xf32>
    %8 = vector.shape_cast %7 : vector<64x8xf32> to vector<1x64x8xf32>
    %cst = arith.constant dense<0.000000e+00> : vector<1xf32>
    %9 = vector.multi_reduction <add>, %8, %cst [1, 2] : vector<1x64x8xf32> to vector<1xf32>
    %10 = vector.shape_cast %9 : vector<1xf32> to vector<1x1x1xf32>
    %11 = vector.extract %10[0, 0, 0] : f32 from vector<1x1x1xf32>
    %12 = vector.broadcast %11 : f32 to vector<1x1xf32>
    %13 = arith.addf %6, %12 : vector<1x1xf32>
    %c0_6 = arith.constant 0 : index
    %c0_7 = arith.constant 0 : index
    %14 = vector.load %arg4[%c0_6, %c0_7] : memref<1x1xf32, #tpu.memory_space<vmem>>, vector<1x1xf32>
    tpu.vector_store %arg4[%c0_6, %c0_7], %13 {strides = array<i32>} : memref<1x1xf32, #tpu.memory_space<vmem>>, vector<1x1xf32>,
    %c0_i32_8 = arith.constant 0 : i32
    %15 = arith.cmpi eq, %arg0, %c0_i32_8 : i32
    %16 = arith.extui %15 : i1 to i32
    %c0_i32_9 = arith.constant 0 : i32
    %17 = arith.cmpi ne, %16, %c0_i32_9 : i32
    scf.if %17 {
      %c0_10 = arith.constant 0 : index
      %c0_11 = arith.constant 0 : index
      %18 = vector.load %arg4[%c0_10, %c0_11] : memref<1x1xf32, #tpu.memory_space<vmem>>, vector<1x1xf32>
      %cst_12 = arith.constant 0.001953125 : f32
      %19 = vector.broadcast %cst_12 : f32 to vector<1x1xf32>
      %20 = arith.mulf %18, %19 : vector<1x1xf32>
      %c0_13 = arith.constant 0 : index
      %c0_14 = arith.constant 0 : index
      %21 = vector.load %arg3[%c0_13, %c0_14] : memref<1x1xf32, #tpu.memory_space<vmem>>, vector<1x1xf32>
      tpu.vector_store %arg3[%c0_13, %c0_14], %20 {strides = array<i32>} : memref<1x1xf32, #tpu.memory_space<vmem>>, vector<1x1xf32>,
    } else {
    }
    return
  }
  func.func @transform_0(%arg0: i32) -> (i32, i32) {
    %c0_i32 = arith.constant 0 : i32
    %c0_i32_0 = arith.constant 0 : i32
    return %arg0, %c0_i32 : i32, i32
  }
  func.func @transform_1(%arg0: i32) -> (i32, i32) {
    %c0_i32 = arith.constant 0 : i32
    %c0_i32_0 = arith.constant 0 : i32
    return %arg0, %c0_i32 : i32, i32
  }
  func.func @transform_2(%arg0: i32) -> (i32, i32) {
    %c0_i32 = arith.constant 0 : i32
    %c0_i32_0 = arith.constant 0 : i32
    %c0_i32_1 = arith.constant 0 : i32
    return %c0_i32, %c0_i32_0 : i32, i32
  }
}

</mosaic_0001>

<llo_original>
// kernel: _lambda_.18
$region0: #{_lambda_.18}
  #allocation0 [shape = 'u32[]', space=smem, size = 0x4, offset = 0x4, fixed_abs, tag = 'smem constant byte address 0x4 - core index']
  #allocation1 [shape = 'u32[144,128]{1,0:T(1,128)}', space=vmem, size = 0x12000, scoped, tag = 'internal scratch']
  %s0 = inlined_call_operand.vmem [shape: f32[2,64], index: 0, kind: input, shape index: {}]
  %s1 = inlined_call_operand.vmem [shape: f32[64,64], index: 1, kind: input, shape index: {}]
  %s2 = inlined_call_operand.vmem [shape: f32[64,64], index: 2, kind: input, shape index: {}]
  %s3 = inlined_call_operand.vmem [shape: f32[2,64], index: 3, kind: output, shape index: {}]
  %s4 = sld [smem:[#allocation0]]
  $region22: #{_lambda_.18} parent=0
    _
  %s6 = ssub.s32 1, %s4
  %s7 = scalar_select 0, %s6, %s4
  // Predicated region
  $region2: #{_lambda_.18} parent=0 // pred_check
    _
  $region3: #{_lambda_.18} parent=0 // pred_check_branch
    %9 = sbr.rel (0) target = $region5
  $region4: #{_lambda_.18} parent=0 // pred_region
    _
  $region5: #{_lambda_.18} parent=0 // pred_fallthru
    _
  // Predicated region
  $region6: #{_lambda_.18} parent=0 // pred_check
    _
  $region7: #{_lambda_.18} parent=0 // pred_check_branch
    %11 = sbr.rel (0) target = $region9
  $region8: #{_lambda_.18} parent=0 // pred_region
    _
  $region9: #{_lambda_.18} parent=0 // pred_fallthru
    _
  // Predicated region
  $region10: #{_lambda_.18} parent=0 // pred_check
    _
  $region11: #{_lambda_.18} parent=0 // pred_check_branch
    %13 = sbr.rel (0) target = $region13
  $region12: #{_lambda_.18} parent=0 // pred_region
    _
  $region13: #{_lambda_.18} parent=0 // pred_fallthru
    _
  %v15 = vld [vmem:[%s0] sm:$0x3]
  %v16 = vpack.c.bf16 %v15, %v15
  %v17 = vld [vmem:[%s1] sm:$0xff]
  %v18 = vld [vmem:[%s1 + $0x8] sm:$0xff]
  %v19 = vld [vmem:[%s1 + $0x10] sm:$0xff]
  %v20 = vld [vmem:[%s1 + $0x18] sm:$0xff]
  %v21 = vld [vmem:[%s1 + $0x20] sm:$0xff]
  %v22 = vld [vmem:[%s1 + $0x28] sm:$0xff]
  %v23 = vld [vmem:[%s1 + $0x30] sm:$0xff]
  %v24 = vld [vmem:[%s1 + $0x38] sm:$0xff]
  %v25 = vpack.c.bf16 %v18, %v17
  %v26 = vpack.c.bf16 %v20, %v19
  %v27 = vpack.c.bf16 %v22, %v21
  %v28 = vpack.c.bf16 %v24, %v23
  %vm29 = vcmask 523264
  %v31 = vsel %vm29, %v16, 0
  %33 = vmatprep.subr.bf16.mxu0 0
  %34 = vmatpush1.bf16.msra.mxu0 0
  %35 = vmatprep.subr.bf16.mxu0 0
  %36 = vmatpush1.bf16.msra.mxu0 0
  %37 = vmatprep.subr.bf16.mxu0 0
  %38 = vmatpush1.bf16.msra.mxu0 0
  %39 = vmatprep.subr.bf16.mxu0 0
  %40 = vmatpush1.bf16.msra.mxu0 0
  %41 = vmatprep.subr.bf16.mxu0 0
  %42 = vmatpush1.bf16.msra.mxu0 %v28
  %43 = vmatprep.subr.bf16.mxu0 0
  %44 = vmatpush1.bf16.msra.mxu0 %v27
  %45 = vmatprep.subr.bf16.mxu0 0
  %46 = vmatpush1.bf16.msra.mxu0 %v26
  %47 = vmatprep.subr.bf16.mxu0 0
  %48 = vmatpush1.bf16.msra.mxu0 %v25
  %49 = vmatprep.subr.bf16.mxu0 0
  %50 = vmatpush2.bf16.msra.mxu0 0
  %51 = vmatprep.subr.bf16.mxu0 0
  %52 = vmatpush2.bf16.msra.mxu0 0
  %53 = vmatprep.subr.bf16.mxu0 0
  %54 = vmatpush2.bf16.msra.mxu0 0
  %55 = vmatprep.subr.bf16.mxu0 0
  %56 = vmatpush2.bf16.msra.mxu0 0
  %57 = vmatprep.subr.bf16.mxu0 0
  %58 = vmatpush2.bf16.msra.mxu0 0
  %59 = vmatprep.subr.bf16.mxu0 0
  %60 = vmatpush2.bf16.msra.mxu0 0
  %61 = vmatprep.subr.bf16.mxu0 0
  %62 = vmatpush2.bf16.msra.mxu0 0
  %63 = vmatprep.subr.bf16.mxu0 0
  %64 = vmatpush2.bf16.msra.mxu0 0
  %65 = vmatprep.mubr.bf16.mxu0 0
  %66 = vmatmul.mubr.bf16.gmra.mxu0 %v31
  %v67 = vpop.f32.mrf.mxu0
  %v68 = vadd.f32 0.0, %v67
  %v69 = vpop.f32.mrf.mxu0
  %v70 = vpop.f32.mrf.mxu0
  %v71 = vpop.f32.mrf.mxu0
  %72 = vdwg.mxu0
  %v73 = vxor.u32 %v68, 2147483648
  %v74 = vmul.f32 %v73, 1.442695
  %v75 = vpow.pop %v74
  %v76 = vadd.f32 %v75, 1.0
  %v77 = vrcp.pop %v76
  %v78 = vmul.f32 1.0, %v77
  %v79 = vmul.f32 %v68, %v78
  %v80 = vpack.c.bf16 %v79, %v79
  %v81 = vld [vmem:[%s2] sm:$0xff]
  %v82 = vld [vmem:[%s2 + $0x8] sm:$0xff]
  %v83 = vld [vmem:[%s2 + $0x10] sm:$0xff]
  %v84 = vld [vmem:[%s2 + $0x18] sm:$0xff]
  %v85 = vld [vmem:[%s2 + $0x20] sm:$0xff]
  %v86 = vld [vmem:[%s2 + $0x28] sm:$0xff]
  %v87 = vld [vmem:[%s2 + $0x30] sm:$0xff]
  %v88 = vld [vmem:[%s2 + $0x38] sm:$0xff]
  %v89 = vpack.c.bf16 %v82, %v81
  %v90 = vpack.c.bf16 %v84, %v83
  %v91 = vpack.c.bf16 %v86, %v85
  %v92 = vpack.c.bf16 %v88, %v87
  %v94 = vsel %vm29, %v80, 0
  %96 = vmatprep.subr.bf16.mxu0 0
  %97 = vmatpush1.bf16.msra.mxu0 0
  %98 = vmatprep.subr.bf16.mxu0 0
  %99 = vmatpush1.bf16.msra.mxu0 0
  %100 = vmatprep.subr.bf16.mxu0 0
  %101 = vmatpush1.bf16.msra.mxu0 0
  %102 = vmatprep.subr.bf16.mxu0 0
  %103 = vmatpush1.bf16.msra.mxu0 0
  %104 = vmatprep.subr.bf16.mxu0 0
  %105 = vmatpush1.bf16.msra.mxu0 %v92
  %106 = vmatprep.subr.bf16.mxu0 0
  %107 = vmatpush1.bf16.msra.mxu0 %v91
  %108 = vmatprep.subr.bf16.mxu0 0
  %109 = vmatpush1.bf16.msra.mxu0 %v90
  %110 = vmatprep.subr.bf16.mxu0 0
  %111 = vmatpush1.bf16.msra.mxu0 %v89
  %112 = vmatprep.subr.bf16.mxu0 0
  %113 = vmatpush2.bf16.msra.mxu0 0
  %114 = vmatprep.subr.bf16.mxu0 0
  %115 = vmatpush2.bf16.msra.mxu0 0
  %116 = vmatprep.subr.bf16.mxu0 0
  %117 = vmatpush2.bf16.msra.mxu0 0
  %118 = vmatprep.subr.bf16.mxu0 0
  %119 = vmatpush2.bf16.msra.mxu0 0
  %120 = vmatprep.subr.bf16.mxu0 0
  %121 = vmatpush2.bf16.msra.mxu0 0
  %122 = vmatprep.subr.bf16.mxu0 0
  %123 = vmatpush2.bf16.msra.mxu0 0
  %124 = vmatprep.subr.bf16.mxu0 0
  %125 = vmatpush2.bf16.msra.mxu0 0
  %126 = vmatprep.subr.bf16.mxu0 0
  %127 = vmatpush2.bf16.msra.mxu0 0
  %128 = vmatprep.mubr.bf16.mxu0 0
  %129 = vmatmul.mubr.bf16.gmra.mxu0 %v94
  %v130 = vpop.f32.mrf.mxu0
  %v131 = vadd.f32 0.0, %v130
  %v132 = vpop.f32.mrf.mxu0
  %v133 = vpop.f32.mrf.mxu0
  %v134 = vpop.f32.mrf.mxu0
  %135 = vdwg.mxu0
  %vm136 = vcmask 517120
  %137 = vst.msk [vmem:[%s3] sm:$0x3] %vm136, %v131
  // Predicated region
  $region14: #{_lambda_.18} parent=0 // pred_check
    _
  $region15: #{_lambda_.18} parent=0 // pred_check_branch
    %139 = sbr.rel (0) target = $region17
  $region16: #{_lambda_.18} parent=0 // pred_region
    _
  $region17: #{_lambda_.18} parent=0 // pred_fallthru
    _
  // Predicated region
  $region18: #{_lambda_.18} parent=0 // pred_check
    _
  $region19: #{_lambda_.18} parent=0 // pred_check_branch
    %141 = sbr.rel (0) target = $region21
  $region20: #{_lambda_.18} parent=0 // pred_region
    _
  $region21: #{_lambda_.18} parent=0 // pred_fallthru
    _

// kernel: _lambda_.19
$region0: #{_lambda_.19}
  #allocation0 [shape = 'u32[]', space=smem, size = 0x4, offset = 0x4, fixed_abs, tag = 'smem constant byte address 0x4 - core index']
  #allocation1 [shape = 'u32[144,128]{1,0:T(1,128)}', space=vmem, size = 0x12000, scoped, tag = 'internal scratch']
  %s0 = inlined_call_operand.vmem [shape: f32[2,32], index: 0, kind: input, shape index: {}]
  %s1 = inlined_call_operand.vmem [shape: f32[32,64], index: 1, kind: input, shape index: {}]
  %s2 = inlined_call_operand.vmem [shape: f32[64,64], index: 2, kind: input, shape index: {}]
  %s3 = inlined_call_operand.vmem [shape: f32[2,64], index: 3, kind: output, shape index: {}]
  %s4 = sld [smem:[#allocation0]]
  $region22: #{_lambda_.19} parent=0
    _
  %s6 = ssub.s32 1, %s4
  %s7 = scalar_select 0, %s6, %s4
  // Predicated region
  $region2: #{_lambda_.19} parent=0 // pred_check
    _
  $region3: #{_lambda_.19} parent=0 // pred_check_branch
    %9 = sbr.rel (0) target = $region5
  $region4: #{_lambda_.19} parent=0 // pred_region
    _
  $region5: #{_lambda_.19} parent=0 // pred_fallthru
    _
  // Predicated region
  $region6: #{_lambda_.19} parent=0 // pred_check
    _
  $region7: #{_lambda_.19} parent=0 // pred_check_branch
    %11 = sbr.rel (0) target = $region9
  $region8: #{_lambda_.19} parent=0 // pred_region
    _
  $region9: #{_lambda_.19} parent=0 // pred_fallthru
    _
  // Predicated region
  $region10: #{_lambda_.19} parent=0 // pred_check
    _
  $region11: #{_lambda_.19} parent=0 // pred_check_branch
    %13 = sbr.rel (0) target = $region13
  $region12: #{_lambda_.19} parent=0 // pred_region
    _
  $region13: #{_lambda_.19} parent=0 // pred_fallthru
    _
  %v15 = vld [vmem:[%s0] sm:$0x3]
  %v16 = vpack.c.bf16 %v15, %v15
  %v17 = vld [vmem:[%s1] sm:$0xff]
  %v18 = vld [vmem:[%s1 + $0x8] sm:$0xff]
  %v19 = vld [vmem:[%s1 + $0x10] sm:$0xff]
  %v20 = vld [vmem:[%s1 + $0x18] sm:$0xff]
  %v21 = vpack.c.bf16 %v18, %v17
  %v22 = vpack.c.bf16 %v20, %v19
  %vm23 = vcmask 261120
  %v25 = vsel %vm23, %v16, 0
  %27 = vmatprep.subr.bf16.mxu0 0
  %28 = vmatpush1.bf16.msra.mxu0 0
  %29 = vmatprep.subr.bf16.mxu0 0
  %30 = vmatpush1.bf16.msra.mxu0 0
  %31 = vmatprep.subr.bf16.mxu0 0
  %32 = vmatpush1.bf16.msra.mxu0 0
  %33 = vmatprep.subr.bf16.mxu0 0
  %34 = vmatpush1.bf16.msra.mxu0 0
  %35 = vmatprep.subr.bf16.mxu0 0
  %36 = vmatpush1.bf16.msra.mxu0 0
  %37 = vmatprep.subr.bf16.mxu0 0
  %38 = vmatpush1.bf16.msra.mxu0 0
  %39 = vmatprep.subr.bf16.mxu0 0
  %40 = vmatpush1.bf16.msra.mxu0 %v22
  %41 = vmatprep.subr.bf16.mxu0 0
  %42 = vmatpush1.bf16.msra.mxu0 %v21
  %43 = vmatprep.subr.bf16.mxu0 0
  %44 = vmatpush2.bf16.msra.mxu0 0
  %45 = vmatprep.subr.bf16.mxu0 0
  %46 = vmatpush2.bf16.msra.mxu0 0
  %47 = vmatprep.subr.bf16.mxu0 0
  %48 = vmatpush2.bf16.msra.mxu0 0
  %49 = vmatprep.subr.bf16.mxu0 0
  %50 = vmatpush2.bf16.msra.mxu0 0
  %51 = vmatprep.subr.bf16.mxu0 0
  %52 = vmatpush2.bf16.msra.mxu0 0
  %53 = vmatprep.subr.bf16.mxu0 0
  %54 = vmatpush2.bf16.msra.mxu0 0
  %55 = vmatprep.subr.bf16.mxu0 0
  %56 = vmatpush2.bf16.msra.mxu0 0
  %57 = vmatprep.subr.bf16.mxu0 0
  %58 = vmatpush2.bf16.msra.mxu0 0
  %59 = vmatprep.mubr.bf16.mxu0 0
  %60 = vmatmul.mubr.bf16.gmra.mxu0 %v25
  %v61 = vpop.f32.mrf.mxu0
  %v62 = vadd.f32 0.0, %v61
  %v63 = vpop.f32.mrf.mxu0
  %v64 = vpop.f32.mrf.mxu0
  %v65 = vpop.f32.mrf.mxu0
  %66 = vdwg.mxu0
  %v67 = vmul.f32 %v62, %v62
  %v68 = vmul.f32 %v62, %v67
  %v69 = vmul.f32 %v68, 0.044715
  %v70 = vadd.f32 %v62, %v69
  %v71 = vmul.f32 %v70, 0.7978846
  %v72 = vtanh.pop %v71
  %v73 = vadd.f32 %v72, 1.0
  %v74 = vmul.f32 %v73, 0.5
  %v75 = vmul.f32 %v62, %v74
  %v76 = vpack.c.bf16 %v75, %v75
  %v77 = vld [vmem:[%s2] sm:$0xff]
  %v78 = vld [vmem:[%s2 + $0x8] sm:$0xff]
  %v79 = vld [vmem:[%s2 + $0x10] sm:$0xff]
  %v80 = vld [vmem:[%s2 + $0x18] sm:$0xff]
  %v81 = vld [vmem:[%s2 + $0x20] sm:$0xff]
  %v82 = vld [vmem:[%s2 + $0x28] sm:$0xff]
  %v83 = vld [vmem:[%s2 + $0x30] sm:$0xff]
  %v84 = vld [vmem:[%s2 + $0x38] sm:$0xff]
  %v85 = vpack.c.bf16 %v78, %v77
  %v86 = vpack.c.bf16 %v80, %v79
  %v87 = vpack.c.bf16 %v82, %v81
  %v88 = vpack.c.bf16 %v84, %v83
  %vm89 = vcmask 523264
  %v91 = vsel %vm89, %v76, 0
  %93 = vmatprep.subr.bf16.mxu0 0
  %94 = vmatpush1.bf16.msra.mxu0 0
  %95 = vmatprep.subr.bf16.mxu0 0
  %96 = vmatpush1.bf16.msra.mxu0 0
  %97 = vmatprep.subr.bf16.mxu0 0
  %98 = vmatpush1.bf16.msra.mxu0 0
  %99 = vmatprep.subr.bf16.mxu0 0
  %100 = vmatpush1.bf16.msra.mxu0 0
  %101 = vmatprep.subr.bf16.mxu0 0
  %102 = vmatpush1.bf16.msra.mxu0 %v88
  %103 = vmatprep.subr.bf16.mxu0 0
  %104 = vmatpush1.bf16.msra.mxu0 %v87
  %105 = vmatprep.subr.bf16.mxu0 0
  %106 = vmatpush1.bf16.msra.mxu0 %v86
  %107 = vmatprep.subr.bf16.mxu0 0
  %108 = vmatpush1.bf16.msra.mxu0 %v85
  %109 = vmatprep.subr.bf16.mxu0 0
  %110 = vmatpush2.bf16.msra.mxu0 0
  %111 = vmatprep.subr.bf16.mxu0 0
  %112 = vmatpush2.bf16.msra.mxu0 0
  %113 = vmatprep.subr.bf16.mxu0 0
  %114 = vmatpush2.bf16.msra.mxu0 0
  %115 = vmatprep.subr.bf16.mxu0 0
  %116 = vmatpush2.bf16.msra.mxu0 0
  %117 = vmatprep.subr.bf16.mxu0 0
  %118 = vmatpush2.bf16.msra.mxu0 0
  %119 = vmatprep.subr.bf16.mxu0 0
  %120 = vmatpush2.bf16.msra.mxu0 0
  %121 = vmatprep.subr.bf16.mxu0 0
  %122 = vmatpush2.bf16.msra.mxu0 0
  %123 = vmatprep.subr.bf16.mxu0 0
  %124 = vmatpush2.bf16.msra.mxu0 0
  %125 = vmatprep.mubr.bf16.mxu0 0
  %126 = vmatmul.mubr.bf16.gmra.mxu0 %v91
  %v127 = vpop.f32.mrf.mxu0
  %v128 = vadd.f32 0.0, %v127
  %v129 = vpop.f32.mrf.mxu0
  %v130 = vpop.f32.mrf.mxu0
  %v131 = vpop.f32.mrf.mxu0
  %132 = vdwg.mxu0
  %vm133 = vcmask 517120
  %134 = vst.msk [vmem:[%s3] sm:$0x3] %vm133, %v128
  // Predicated region
  $region14: #{_lambda_.19} parent=0 // pred_check
    _
  $region15: #{_lambda_.19} parent=0 // pred_check_branch
    %136 = sbr.rel (0) target = $region17
  $region16: #{_lambda_.19} parent=0 // pred_region
    _
  $region17: #{_lambda_.19} parent=0 // pred_fallthru
    _
  // Predicated region
  $region18: #{_lambda_.19} parent=0 // pred_check
    _
  $region19: #{_lambda_.19} parent=0 // pred_check_branch
    %138 = sbr.rel (0) target = $region21
  $region20: #{_lambda_.19} parent=0 // pred_region
    _
  $region21: #{_lambda_.19} parent=0 // pred_fallthru
    _

// kernel: _lambda_.17
$region0: #{_lambda_.17}
  #allocation0 [shape = 'u32[]', space=smem, size = 0x4, offset = 0x4, fixed_abs, tag = 'smem constant byte address 0x4 - core index']
  #allocation1 [shape = 'u32[144,128]{1,0:T(1,128)}', space=vmem, size = 0x12000, scoped, tag = 'internal scratch']
  %s0 = inlined_call_operand.vmem [shape: f32[128,4], index: 0, kind: input, shape index: {}]
  %s1 = inlined_call_operand.vmem [shape: f32[4,64], index: 1, kind: input, shape index: {}]
  %s2 = inlined_call_operand.vmem [shape: f32[128,64], index: 2, kind: output, shape index: {}]
  %s3 = sld [smem:[#allocation0]]
  $region18: #{_lambda_.17} parent=0
    _
  %s5 = ssub.s32 1, %s3
  %s6 = scalar_select 0, %s5, %s3
  // Predicated region
  $region2: #{_lambda_.17} parent=0 // pred_check
    _
  $region3: #{_lambda_.17} parent=0 // pred_check_branch
    %8 = sbr.rel (0) target = $region5
  $region4: #{_lambda_.17} parent=0 // pred_region
    _
  $region5: #{_lambda_.17} parent=0 // pred_fallthru
    _
  // Predicated region
  $region6: #{_lambda_.17} parent=0 // pred_check
    _
  $region7: #{_lambda_.17} parent=0 // pred_check_branch
    %10 = sbr.rel (0) target = $region9
  $region8: #{_lambda_.17} parent=0 // pred_region
    _
  $region9: #{_lambda_.17} parent=0 // pred_fallthru
    _
  %v12 = vld [vmem:[%s0] sm:$0xff]
  %v13 = vld [vmem:[%s0 + $0x8] sm:$0xff]
  %v14 = vld [vmem:[%s0 + $0x10] sm:$0xff]
  %v15 = vld [vmem:[%s0 + $0x18] sm:$0xff]
  %v16 = vld [vmem:[%s0 + $0x20] sm:$0xff]
  %v17 = vld [vmem:[%s0 + $0x28] sm:$0xff]
  %v18 = vld [vmem:[%s0 + $0x30] sm:$0xff]
  %v19 = vld [vmem:[%s0 + $0x38] sm:$0xff]
  %v20 = vld [vmem:[%s0 + $0x40] sm:$0xff]
  %v21 = vld [vmem:[%s0 + $0x48] sm:$0xff]
  %v22 = vld [vmem:[%s0 + $0x50] sm:$0xff]
  %v23 = vld [vmem:[%s0 + $0x58] sm:$0xff]
  %v24 = vld [vmem:[%s0 + $0x60] sm:$0xff]
  %v25 = vld [vmem:[%s0 + $0x68] sm:$0xff]
  %v26 = vld [vmem:[%s0 + $0x70] sm:$0xff]
  %v27 = vld [vmem:[%s0 + $0x78] sm:$0xff]
  %v28 = vpack.c.bf16 %v13, %v12
  %v29 = vpack.c.bf16 %v15, %v14
  %v30 = vpack.c.bf16 %v17, %v16
  %v31 = vpack.c.bf16 %v19, %v18
  %v32 = vpack.c.bf16 %v21, %v20
  %v33 = vpack.c.bf16 %v23, %v22
  %v34 = vpack.c.bf16 %v25, %v24
  %v35 = vpack.c.bf16 %v27, %v26
  %v36 = vld [vmem:[%s1] sm:$0xf]
  %v37 = vpack.c.bf16 %v36, %v36
  %vm38 = vcmask 31744
  %v40 = vsel %vm38, %v28, 0
  %v43 = vsel %vm38, %v29, 0
  %v46 = vsel %vm38, %v30, 0
  %v49 = vsel %vm38, %v31, 0
  %v52 = vsel %vm38, %v32, 0
  %v55 = vsel %vm38, %v33, 0
  %v58 = vsel %vm38, %v34, 0
  %v61 = vsel %vm38, %v35, 0
  %vm63 = vcmask 1041408
  %v65 = vsel %vm63, %v37, 0
  %67 = vmatprep.subr.bf16.mxu0 0
  %68 = vmatpush1.bf16.msra.mxu0 0
  %69 = vmatprep.subr.bf16.mxu0 0
  %70 = vmatpush1.bf16.msra.mxu0 0
  %71 = vmatprep.subr.bf16.mxu0 0
  %72 = vmatpush1.bf16.msra.mxu0 0
  %73 = vmatprep.subr.bf16.mxu0 0
  %74 = vmatpush1.bf16.msra.mxu0 0
  %75 = vmatprep.subr.bf16.mxu0 0
  %76 = vmatpush1.bf16.msra.mxu0 0
  %77 = vmatprep.subr.bf16.mxu0 0
  %78 = vmatpush1.bf16.msra.mxu0 0
  %79 = vmatprep.subr.bf16.mxu0 0
  %80 = vmatpush1.bf16.msra.mxu0 0
  %81 = vmatprep.subr.bf16.mxu0 0
  %82 = vmatpush1.bf16.msra.mxu0 %v65
  %83 = vmatprep.subr.bf16.mxu0 0
  %84 = vmatpush2.bf16.msra.mxu0 0
  %85 = vmatprep.subr.bf16.mxu0 0
  %86 = vmatpush2.bf16.msra.mxu0 0
  %87 = vmatprep.subr.bf16.mxu0 0
  %88 = vmatpush2.bf16.msra.mxu0 0
  %89 = vmatprep.subr.bf16.mxu0 0
  %90 = vmatpush2.bf16.msra.mxu0 0
  %91 = vmatprep.subr.bf16.mxu0 0
  %92 = vmatpush2.bf16.msra.mxu0 0
  %93 = vmatprep.subr.bf16.mxu0 0
  %94 = vmatpush2.bf16.msra.mxu0 0
  %95 = vmatprep.subr.bf16.mxu0 0
  %96 = vmatpush2.bf16.msra.mxu0 0
  %97 = vmatprep.subr.bf16.mxu0 0
  %98 = vmatpush2.bf16.msra.mxu0 0
  %99 = vmatprep.mubr.bf16.mxu0 0
  %100 = vmatmul.mubr.bf16.gmra.mxu0 %v40
  %v101 = vpop.f32.mrf.mxu0
  %v102 = vadd.f32 0.0, %v101
  %v103 = vpop.f32.mrf.mxu0
  %v104 = vpop.f32.mrf.mxu0
  %v105 = vadd.f32 0.0, %v104
  %v106 = vpop.f32.mrf.mxu0
  %107 = vmatprep.mubr.bf16.mxu0 0
  %108 = vmatmul.mubr.bf16.gmra.mxu0 %v43
  %v109 = vpop.f32.mrf.mxu0
  %v110 = vadd.f32 0.0, %v109
  %v111 = vpop.f32.mrf.mxu0
  %v112 = vpop.f32.mrf.mxu0
  %v113 = vadd.f32 0.0, %v112
  %v114 = vpop.f32.mrf.mxu0
  %115 = vmatprep.mubr.bf16.mxu0 0
  %116 = vmatmul.mubr.bf16.gmra.mxu0 %v46
  %v117 = vpop.f32.mrf.mxu0
  %v118 = vadd.f32 0.0, %v117
  %v119 = vpop.f32.mrf.mxu0
  %v120 = vpop.f32.mrf.mxu0
  %v121 = vadd.f32 0.0, %v120
  %v122 = vpop.f32.mrf.mxu0
  %123 = vmatprep.mubr.bf16.mxu0 0
  %124 = vmatmul.mubr.bf16.gmra.mxu0 %v49
  %v125 = vpop.f32.mrf.mxu0
  %v126 = vadd.f32 0.0, %v125
  %v127 = vpop.f32.mrf.mxu0
  %v128 = vpop.f32.mrf.mxu0
  %v129 = vadd.f32 0.0, %v128
  %v130 = vpop.f32.mrf.mxu0
  %131 = vmatprep.mubr.bf16.mxu0 0
  %132 = vmatmul.mubr.bf16.gmra.mxu0 %v52
  %v133 = vpop.f32.mrf.mxu0
  %v134 = vadd.f32 0.0, %v133
  %v135 = vpop.f32.mrf.mxu0
  %v136 = vpop.f32.mrf.mxu0
  %v137 = vadd.f32 0.0, %v136
  %v138 = vpop.f32.mrf.mxu0
  %139 = vmatprep.mubr.bf16.mxu0 0
  %140 = vmatmul.mubr.bf16.gmra.mxu0 %v55
  %v141 = vpop.f32.mrf.mxu0
  %v142 = vadd.f32 0.0, %v141
  %v143 = vpop.f32.mrf.mxu0
  %v144 = vpop.f32.mrf.mxu0
  %v145 = vadd.f32 0.0, %v144
  %v146 = vpop.f32.mrf.mxu0
  %147 = vmatprep.mubr.bf16.mxu0 0
  %148 = vmatmul.mubr.bf16.gmra.mxu0 %v58
  %v149 = vpop.f32.mrf.mxu0
  %v150 = vadd.f32 0.0, %v149
  %v151 = vpop.f32.mrf.mxu0
  %v152 = vpop.f32.mrf.mxu0
  %v153 = vadd.f32 0.0, %v152
  %v154 = vpop.f32.mrf.mxu0
  %155 = vmatprep.mubr.bf16.mxu0 0
  %156 = vmatmul.mubr.bf16.gmra.mxu0 %v61
  %v157 = vpop.f32.mrf.mxu0
  %v158 = vadd.f32 0.0, %v157
  %v159 = vpop.f32.mrf.mxu0
  %v160 = vpop.f32.mrf.mxu0
  %v161 = vadd.f32 0.0, %v160
  %v162 = vpop.f32.mrf.mxu0
  %163 = vdwg.mxu0
  %vm164 = vcmask 523264
  %165 = vst.msk [vmem:[%s2] sm:$0xff] %vm164, %v102
  %166 = vst.msk [vmem:[%s2 + $0x8] sm:$0xff] %vm164, %v105
  %167 = vst.msk [vmem:[%s2 + $0x10] sm:$0xff] %vm164, %v110
  %168 = vst.msk [vmem:[%s2 + $0x18] sm:$0xff] %vm164, %v113
  %169 = vst.msk [vmem:[%s2 + $0x20] sm:$0xff] %vm164, %v118
  %170 = vst.msk [vmem:[%s2 + $0x28] sm:$0xff] %vm164, %v121
  %171 = vst.msk [vmem:[%s2 + $0x30] sm:$0xff] %vm164, %v126
  %172 = vst.msk [vmem:[%s2 + $0x38] sm:$0xff] %vm164, %v129
  %173 = vst.msk [vmem:[%s2 + $0x40] sm:$0xff] %vm164, %v134
  %174 = vst.msk [vmem:[%s2 + $0x48] sm:$0xff] %vm164, %v137
  %175 = vst.msk [vmem:[%s2 + $0x50] sm:$0xff] %vm164, %v142
  %176 = vst.msk [vmem:[%s2 + $0x58] sm:$0xff] %vm164, %v145
  %177 = vst.msk [vmem:[%s2 + $0x60] sm:$0xff] %vm164, %v150
  %178 = vst.msk [vmem:[%s2 + $0x68] sm:$0xff] %vm164, %v153
  %179 = vst.msk [vmem:[%s2 + $0x70] sm:$0xff] %vm164, %v158
  %180 = vst.msk [vmem:[%s2 + $0x78] sm:$0xff] %vm164, %v161
  // Predicated region
  $region10: #{_lambda_.17} parent=0 // pred_check
    _
  $region11: #{_lambda_.17} parent=0 // pred_check_branch
    %182 = sbr.rel (0) target = $region13
  $region12: #{_lambda_.17} parent=0 // pred_region
    _
  $region13: #{_lambda_.17} parent=0 // pred_fallthru
    _
  // Predicated region
  $region14: #{_lambda_.17} parent=0 // pred_check
    _
  $region15: #{_lambda_.17} parent=0 // pred_check_branch
    %184 = sbr.rel (0) target = $region17
  $region16: #{_lambda_.17} parent=0 // pred_region
    _
  $region17: #{_lambda_.17} parent=0 // pred_fallthru
    _

// kernel: _lambda_.20
$region0: #{_lambda_.20}
  #allocation0 [shape = 'u32[]', space=smem, size = 0x4, offset = 0x4, fixed_abs, tag = 'smem constant byte address 0x4 - core index']
  #allocation1 [shape = 'u32[144,128]{1,0:T(1,128)}', space=vmem, size = 0x12000, scoped, tag = 'internal scratch']
  %s0 = inlined_call_operand.vmem [shape: f32[2,64], index: 0, kind: input, shape index: {}]
  %s1 = inlined_call_operand.vmem [shape: f32[64,384], index: 1, kind: input, shape index: {}]
  %s2 = inlined_call_operand.vmem [shape: f32[2,384], index: 2, kind: output, shape index: {}]
  %s3 = sld [smem:[#allocation0]]
  $region18: #{_lambda_.20} parent=0
    _
  %s5 = ssub.s32 1, %s3
  %s6 = scalar_select 0, %s5, %s3
  // Predicated region
  $region2: #{_lambda_.20} parent=0 // pred_check
    _
  $region3: #{_lambda_.20} parent=0 // pred_check_branch
    %8 = sbr.rel (0) target = $region5
  $region4: #{_lambda_.20} parent=0 // pred_region
    _
  $region5: #{_lambda_.20} parent=0 // pred_fallthru
    _
  // Predicated region
  $region6: #{_lambda_.20} parent=0 // pred_check
    _
  $region7: #{_lambda_.20} parent=0 // pred_check_branch
    %10 = sbr.rel (0) target = $region9
  $region8: #{_lambda_.20} parent=0 // pred_region
    _
  $region9: #{_lambda_.20} parent=0 // pred_fallthru
    _
  %v12 = vld [vmem:[%s0] sm:$0x3]
  %v13 = vxor.u32 %v12, 2147483648
  %v14 = vmul.f32 %v13, 1.442695
  %v15 = vpow.pop %v14
  %v16 = vadd.f32 %v15, 1.0
  %v17 = vrcp.pop %v16
  %v18 = vmul.f32 1.0, %v17
  %v19 = vmul.f32 %v12, %v18
  %v20 = vpack.c.bf16 %v19, %v19
  %v21 = vld [vmem:[%s1] sm:$0xff]
  %v22 = vld [vmem:[%s1 + $0x8] sm:$0xff]
  %v23 = vld [vmem:[%s1 + $0x10] sm:$0xff]
  %v24 = vld [vmem:[%s1 + $0x18] sm:$0xff]
  %v25 = vld [vmem:[%s1 + $0x20] sm:$0xff]
  %v26 = vld [vmem:[%s1 + $0x28] sm:$0xff]
  %v27 = vld [vmem:[%s1 + $0x30] sm:$0xff]
  %v28 = vld [vmem:[%s1 + $0x38] sm:$0xff]
  %v29 = vld [vmem:[%s1 + $0x40] sm:$0xff]
  %v30 = vld [vmem:[%s1 + $0x48] sm:$0xff]
  %v31 = vld [vmem:[%s1 + $0x50] sm:$0xff]
  %v32 = vld [vmem:[%s1 + $0x58] sm:$0xff]
  %v33 = vld [vmem:[%s1 + $0x60] sm:$0xff]
  %v34 = vld [vmem:[%s1 + $0x68] sm:$0xff]
  %v35 = vld [vmem:[%s1 + $0x70] sm:$0xff]
  %v36 = vld [vmem:[%s1 + $0x78] sm:$0xff]
  %v37 = vld [vmem:[%s1 + $0x80] sm:$0xff]
  %v38 = vld [vmem:[%s1 + $0x88] sm:$0xff]
  %v39 = vld [vmem:[%s1 + $0x90] sm:$0xff]
  %v40 = vld [vmem:[%s1 + $0x98] sm:$0xff]
  %v41 = vld [vmem:[%s1 + $0xa0] sm:$0xff]
  %v42 = vld [vmem:[%s1 + $0xa8] sm:$0xff]
  %v43 = vld [vmem:[%s1 + $0xb0] sm:$0xff]
  %v44 = vld [vmem:[%s1 + $0xb8] sm:$0xff]
  %v45 = vpack.c.bf16 %v24, %v21
  %v46 = vpack.c.bf16 %v25, %v22
  %v47 = vpack.c.bf16 %v26, %v23
  %v48 = vpack.c.bf16 %v30, %v27
  %v49 = vpack.c.bf16 %v31, %v28
  %v50 = vpack.c.bf16 %v32, %v29
  %v51 = vpack.c.bf16 %v36, %v33
  %v52 = vpack.c.bf16 %v37, %v34
  %v53 = vpack.c.bf16 %v38, %v35
  %v54 = vpack.c.bf16 %v42, %v39
  %v55 = vpack.c.bf16 %v43, %v40
  %v56 = vpack.c.bf16 %v44, %v41
  %vm57 = vcmask 523264
  %v59 = vsel %vm57, %v20, 0
  %61 = vmatprep.subr.bf16.mxu0 0
  %62 = vmatpush1.bf16.msra.mxu0 0
  %63 = vmatprep.subr.bf16.mxu0 0
  %64 = vmatpush1.bf16.msra.mxu0 0
  %65 = vmatprep.subr.bf16.mxu0 0
  %66 = vmatpush1.bf16.msra.mxu0 0
  %67 = vmatprep.subr.bf16.mxu0 0
  %68 = vmatpush1.bf16.msra.mxu0 0
  %69 = vmatprep.subr.bf16.mxu0 %v55
  %70 = vmatpush1.bf16.msra.mxu0 %v54
  %71 = vmatprep.subr.bf16.mxu0 %v52
  %72 = vmatpush1.bf16.msra.mxu0 %v51
  %73 = vmatprep.subr.bf16.mxu0 %v49
  %74 = vmatpush1.bf16.msra.mxu0 %v48
  %75 = vmatprep.subr.bf16.mxu0 %v46
  %76 = vmatpush1.bf16.msra.mxu0 %v45
  %77 = vmatprep.subr.bf16.mxu0 0
  %78 = vmatpush2.bf16.msra.mxu0 0
  %79 = vmatprep.subr.bf16.mxu0 0
  %80 = vmatpush2.bf16.msra.mxu0 0
  %81 = vmatprep.subr.bf16.mxu0 0
  %82 = vmatpush2.bf16.msra.mxu0 0
  %83 = vmatprep.subr.bf16.mxu0 0
  %84 = vmatpush2.bf16.msra.mxu0 0
  %85 = vmatprep.subr.bf16.mxu0 0
  %86 = vmatpush2.bf16.msra.mxu0 0
  %87 = vmatprep.subr.bf16.mxu0 0
  %88 = vmatpush2.bf16.msra.mxu0 0
  %89 = vmatprep.subr.bf16.mxu0 0
  %90 = vmatpush2.bf16.msra.mxu0 0
  %91 = vmatprep.subr.bf16.mxu0 0
  %92 = vmatpush2.bf16.msra.mxu0 0
  %93 = vmatprep.mubr.bf16.mxu0 0
  %94 = vmatmul.mubr.bf16.gmra.mxu0 %v59
  %v95 = vpop.f32.mrf.mxu0
  %v96 = vadd.f32 0.0, %v95
  %v97 = vpop.f32.mrf.mxu0
  %v98 = vadd.f32 0.0, %v97
  %v99 = vpop.f32.mrf.mxu0
  %v100 = vpop.f32.mrf.mxu0
  %101 = vdwg.mxu0
  %102 = vmatprep.subr.bf16.mxu0 0
  %103 = vmatpush1.bf16.msra.mxu0 0
  %104 = vmatprep.subr.bf16.mxu0 0
  %105 = vmatpush1.bf16.msra.mxu0 0
  %106 = vmatprep.subr.bf16.mxu0 0
  %107 = vmatpush1.bf16.msra.mxu0 0
  %108 = vmatprep.subr.bf16.mxu0 0
  %109 = vmatpush1.bf16.msra.mxu0 0
  %110 = vmatprep.subr.bf16.mxu0 0
  %111 = vmatpush1.bf16.msra.mxu0 %v56
  %112 = vmatprep.subr.bf16.mxu0 0
  %113 = vmatpush1.bf16.msra.mxu0 %v53
  %114 = vmatprep.subr.bf16.mxu0 0
  %115 = vmatpush1.bf16.msra.mxu0 %v50
  %116 = vmatprep.subr.bf16.mxu0 0
  %117 = vmatpush1.bf16.msra.mxu0 %v47
  %118 = vmatprep.subr.bf16.mxu0 0
  %119 = vmatpush2.bf16.msra.mxu0 0
  %120 = vmatprep.subr.bf16.mxu0 0
  %121 = vmatpush2.bf16.msra.mxu0 0
  %122 = vmatprep.subr.bf16.mxu0 0
  %123 = vmatpush2.bf16.msra.mxu0 0
  %124 = vmatprep.subr.bf16.mxu0 0
  %125 = vmatpush2.bf16.msra.mxu0 0
  %126 = vmatprep.subr.bf16.mxu0 0
  %127 = vmatpush2.bf16.msra.mxu0 0
  %128 = vmatprep.subr.bf16.mxu0 0
  %129 = vmatpush2.bf16.msra.mxu0 0
  %130 = vmatprep.subr.bf16.mxu0 0
  %131 = vmatpush2.bf16.msra.mxu0 0
  %132 = vmatprep.subr.bf16.mxu0 0
  %133 = vmatpush2.bf16.msra.mxu0 0
  %134 = vmatprep.mubr.bf16.mxu0 0
  %135 = vmatmul.mubr.bf16.gmra.mxu0 %v59
  %v136 = vpop.f32.mrf.mxu0
  %v137 = vadd.f32 0.0, %v136
  %v138 = vpop.f32.mrf.mxu0
  %v139 = vpop.f32.mrf.mxu0
  %v140 = vpop.f32.mrf.mxu0
  %141 = vdwg.mxu0
  %v145 = vcombine.low %v96, %v98
  %v147 = vunpack.c.l.s4 1983009808
  %v148 = vunpack.c.0.s8 %v147
  %v149 = vlaneseq
  %v150 = vshrl.u32 %v149, 7
  %v151 = vsub.s32 %v148, %v150
  %v152 = vrot.slane %v145, %v151
  %v154 = vunpack.c.l.s4 1983009808
  %v155 = vunpack.c.0.s8 %v154
  %v156 = vlaneseq
  %v157 = vshrl.u32 %v156, 7
  %v158 = vsub.s32 %v155, %v157
  %v159 = vrot.slane %v137, %v158
  %v160 = vcombine.low %v152, %v159
  %162 = vst [vmem:[%s2] sm:$0x3f] %v160
  // Predicated region
  $region10: #{_lambda_.20} parent=0 // pred_check
    _
  $region11: #{_lambda_.20} parent=0 // pred_check_branch
    %164 = sbr.rel (0) target = $region13
  $region12: #{_lambda_.20} parent=0 // pred_region
    _
  $region13: #{_lambda_.20} parent=0 // pred_fallthru
    _
  // Predicated region
  $region14: #{_lambda_.20} parent=0 // pred_check
    _
  $region15: #{_lambda_.20} parent=0 // pred_check_branch
    %166 = sbr.rel (0) target = $region17
  $region16: #{_lambda_.20} parent=0 // pred_region
    _
  $region17: #{_lambda_.20} parent=0 // pred_fallthru
    _

// kernel: _lambda_.22
$region0: #{_lambda_.22}
  #allocation0 [shape = 'u32[]', space=smem, size = 0x4, offset = 0x4, fixed_abs, tag = 'smem constant byte address 0x4 - core index']
  #allocation1 [shape = 'u32[144,128]{1,0:T(1,128)}', space=vmem, size = 0x12000, scoped, tag = 'internal scratch']
  %s0 = inlined_call_operand.vmem [shape: f32[16,32], index: 0, kind: input, shape index: {}]
  %s1 = inlined_call_operand.vmem [shape: f32[32,64], index: 1, kind: input, shape index: {}]
  %s2 = inlined_call_operand.vmem [shape: f32[16,64], index: 2, kind: output, shape index: {}]
  %s3 = sld [smem:[#allocation0]]
  $region18: #{_lambda_.22} parent=0
    _
  %s5 = ssub.s32 1, %s3
  %s6 = scalar_select 0, %s5, %s3
  // Predicated region
  $region2: #{_lambda_.22} parent=0 // pred_check
    _
  $region3: #{_lambda_.22} parent=0 // pred_check_branch
    %8 = sbr.rel (0) target = $region5
  $region4: #{_lambda_.22} parent=0 // pred_region
    _
  $region5: #{_lambda_.22} parent=0 // pred_fallthru
    _
  // Predicated region
  $region6: #{_lambda_.22} parent=0 // pred_check
    _
  $region7: #{_lambda_.22} parent=0 // pred_check_branch
    %10 = sbr.rel (0) target = $region9
  $region8: #{_lambda_.22} parent=0 // pred_region
    _
  $region9: #{_lambda_.22} parent=0 // pred_fallthru
    _
  %v12 = vld [vmem:[%s0] sm:$0xff]
  %v13 = vld [vmem:[%s0 + $0x8] sm:$0xff]
  %v14 = vpack.c.bf16 %v13, %v12
  %v15 = vld [vmem:[%s1] sm:$0xff]
  %v16 = vld [vmem:[%s1 + $0x8] sm:$0xff]
  %v17 = vld [vmem:[%s1 + $0x10] sm:$0xff]
  %v18 = vld [vmem:[%s1 + $0x18] sm:$0xff]
  %v19 = vpack.c.bf16 %v16, %v15
  %v20 = vpack.c.bf16 %v18, %v17
  %vm21 = vcmask 261120
  %v23 = vsel %vm21, %v14, 0
  %25 = vmatprep.subr.bf16.mxu0 0
  %26 = vmatpush1.bf16.msra.mxu0 0
  %27 = vmatprep.subr.bf16.mxu0 0
  %28 = vmatpush1.bf16.msra.mxu0 0
  %29 = vmatprep.subr.bf16.mxu0 0
  %30 = vmatpush1.bf16.msra.mxu0 0
  %31 = vmatprep.subr.bf16.mxu0 0
  %32 = vmatpush1.bf16.msra.mxu0 0
  %33 = vmatprep.subr.bf16.mxu0 0
  %34 = vmatpush1.bf16.msra.mxu0 0
  %35 = vmatprep.subr.bf16.mxu0 0
  %36 = vmatpush1.bf16.msra.mxu0 0
  %37 = vmatprep.subr.bf16.mxu0 0
  %38 = vmatpush1.bf16.msra.mxu0 %v20
  %39 = vmatprep.subr.bf16.mxu0 0
  %40 = vmatpush1.bf16.msra.mxu0 %v19
  %41 = vmatprep.subr.bf16.mxu0 0
  %42 = vmatpush2.bf16.msra.mxu0 0
  %43 = vmatprep.subr.bf16.mxu0 0
  %44 = vmatpush2.bf16.msra.mxu0 0
  %45 = vmatprep.subr.bf16.mxu0 0
  %46 = vmatpush2.bf16.msra.mxu0 0
  %47 = vmatprep.subr.bf16.mxu0 0
  %48 = vmatpush2.bf16.msra.mxu0 0
  %49 = vmatprep.subr.bf16.mxu0 0
  %50 = vmatpush2.bf16.msra.mxu0 0
  %51 = vmatprep.subr.bf16.mxu0 0
  %52 = vmatpush2.bf16.msra.mxu0 0
  %53 = vmatprep.subr.bf16.mxu0 0
  %54 = vmatpush2.bf16.msra.mxu0 0
  %55 = vmatprep.subr.bf16.mxu0 0
  %56 = vmatpush2.bf16.msra.mxu0 0
  %57 = vmatprep.mubr.bf16.mxu0 0
  %58 = vmatmul.mubr.bf16.gmra.mxu0 %v23
  %v59 = vpop.f32.mrf.mxu0
  %v60 = vadd.f32 0.0, %v59
  %v61 = vpop.f32.mrf.mxu0
  %v62 = vpop.f32.mrf.mxu0
  %v63 = vadd.f32 0.0, %v62
  %v64 = vpop.f32.mrf.mxu0
  %65 = vdwg.mxu0
  %vm66 = vcmask 523264
  %67 = vst.msk [vmem:[%s2] sm:$0xff] %vm66, %v60
  %68 = vst.msk [vmem:[%s2 + $0x8] sm:$0xff] %vm66, %v63
  // Predicated region
  $region10: #{_lambda_.22} parent=0 // pred_check
    _
  $region11: #{_lambda_.22} parent=0 // pred_check_branch
    %70 = sbr.rel (0) target = $region13
  $region12: #{_lambda_.22} parent=0 // pred_region
    _
  $region13: #{_lambda_.22} parent=0 // pred_fallthru
    _
  // Predicated region
  $region14: #{_lambda_.22} parent=0 // pred_check
    _
  $region15: #{_lambda_.22} parent=0 // pred_check_branch
    %72 = sbr.rel (0) target = $region17
  $region16: #{_lambda_.22} parent=0 // pred_region
    _
  $region17: #{_lambda_.22} parent=0 // pred_fallthru
    _

// kernel: _lambda_.23
$region0: #{_lambda_.23}
  #allocation0 [shape = 'u32[]', space=smem, size = 0x4, offset = 0x4, fixed_abs, tag = 'smem constant byte address 0x4 - core index']
  #allocation1 [shape = 'u32[144,128]{1,0:T(1,128)}', space=vmem, size = 0x12000, scoped, tag = 'internal scratch']
  %s0 = inlined_call_operand.vmem [shape: f32[16,64], index: 0, kind: input, shape index: {}]
  %s1 = inlined_call_operand.vmem [shape: f32[64,128], index: 1, kind: input, shape index: {}]
  %s2 = inlined_call_operand.vmem [shape: f32[16,128], index: 2, kind: output, shape index: {}]
  %s3 = sld [smem:[#allocation0]]
  $region18: #{_lambda_.23} parent=0
    _
  %s5 = ssub.s32 1, %s3
  %s6 = scalar_select 0, %s5, %s3
  // Predicated region
  $region2: #{_lambda_.23} parent=0 // pred_check
    _
  $region3: #{_lambda_.23} parent=0 // pred_check_branch
    %8 = sbr.rel (0) target = $region5
  $region4: #{_lambda_.23} parent=0 // pred_region
    _
  $region5: #{_lambda_.23} parent=0 // pred_fallthru
    _
  // Predicated region
  $region6: #{_lambda_.23} parent=0 // pred_check
    _
  $region7: #{_lambda_.23} parent=0 // pred_check_branch
    %10 = sbr.rel (0) target = $region9
  $region8: #{_lambda_.23} parent=0 // pred_region
    _
  $region9: #{_lambda_.23} parent=0 // pred_fallthru
    _
  %v12 = vld [vmem:[%s0] sm:$0xff]
  %v13 = vld [vmem:[%s0 + $0x8] sm:$0xff]
  %v14 = vpack.c.bf16 %v13, %v12
  %v15 = vld [vmem:[%s1] sm:$0xff]
  %v16 = vld [vmem:[%s1 + $0x8] sm:$0xff]
  %v17 = vld [vmem:[%s1 + $0x10] sm:$0xff]
  %v18 = vld [vmem:[%s1 + $0x18] sm:$0xff]
  %v19 = vld [vmem:[%s1 + $0x20] sm:$0xff]
  %v20 = vld [vmem:[%s1 + $0x28] sm:$0xff]
  %v21 = vld [vmem:[%s1 + $0x30] sm:$0xff]
  %v22 = vld [vmem:[%s1 + $0x38] sm:$0xff]
  %v23 = vpack.c.bf16 %v16, %v15
  %v24 = vpack.c.bf16 %v18, %v17
  %v25 = vpack.c.bf16 %v20, %v19
  %v26 = vpack.c.bf16 %v22, %v21
  %vm27 = vcmask 523264
  %v29 = vsel %vm27, %v14, 0
  %31 = vmatprep.subr.bf16.mxu0 0
  %32 = vmatpush1.bf16.msra.mxu0 0
  %33 = vmatprep.subr.bf16.mxu0 0
  %34 = vmatpush1.bf16.msra.mxu0 0
  %35 = vmatprep.subr.bf16.mxu0 0
  %36 = vmatpush1.bf16.msra.mxu0 0
  %37 = vmatprep.subr.bf16.mxu0 0
  %38 = vmatpush1.bf16.msra.mxu0 0
  %39 = vmatprep.subr.bf16.mxu0 0
  %40 = vmatpush1.bf16.msra.mxu0 %v26
  %41 = vmatprep.subr.bf16.mxu0 0
  %42 = vmatpush1.bf16.msra.mxu0 %v25
  %43 = vmatprep.subr.bf16.mxu0 0
  %44 = vmatpush1.bf16.msra.mxu0 %v24
  %45 = vmatprep.subr.bf16.mxu0 0
  %46 = vmatpush1.bf16.msra.mxu0 %v23
  %47 = vmatprep.subr.bf16.mxu0 0
  %48 = vmatpush2.bf16.msra.mxu0 0
  %49 = vmatprep.subr.bf16.mxu0 0
  %50 = vmatpush2.bf16.msra.mxu0 0
  %51 = vmatprep.subr.bf16.mxu0 0
  %52 = vmatpush2.bf16.msra.mxu0 0
  %53 = vmatprep.subr.bf16.mxu0 0
  %54 = vmatpush2.bf16.msra.mxu0 0
  %55 = vmatprep.subr.bf16.mxu0 0
  %56 = vmatpush2.bf16.msra.mxu0 0
  %57 = vmatprep.subr.bf16.mxu0 0
  %58 = vmatpush2.bf16.msra.mxu0 0
  %59 = vmatprep.subr.bf16.mxu0 0
  %60 = vmatpush2.bf16.msra.mxu0 0
  %61 = vmatprep.subr.bf16.mxu0 0
  %62 = vmatpush2.bf16.msra.mxu0 0
  %63 = vmatprep.mubr.bf16.mxu0 0
  %64 = vmatmul.mubr.bf16.gmra.mxu0 %v29
  %v65 = vpop.f32.mrf.mxu0
  %v66 = vadd.f32 0.0, %v65
  %v67 = vpop.f32.mrf.mxu0
  %v68 = vpop.f32.mrf.mxu0
  %v69 = vadd.f32 0.0, %v68
  %v70 = vpop.f32.mrf.mxu0
  %71 = vdwg.mxu0
  %72 = vst [vmem:[%s2] sm:$0xff] %v66
  %73 = vst [vmem:[%s2 + $0x8] sm:$0xff] %v69
  // Predicated region
  $region10: #{_lambda_.23} parent=0 // pred_check
    _
  $region11: #{_lambda_.23} parent=0 // pred_check_branch
    %75 = sbr.rel (0) target = $region13
  $region12: #{_lambda_.23} parent=0 // pred_region
    _
  $region13: #{_lambda_.23} parent=0 // pred_fallthru
    _
  // Predicated region
  $region14: #{_lambda_.23} parent=0 // pred_check
    _
  $region15: #{_lambda_.23} parent=0 // pred_check_branch
    %77 = sbr.rel (0) target = $region17
  $region16: #{_lambda_.23} parent=0 // pred_region
    _
  $region17: #{_lambda_.23} parent=0 // pred_fallthru
    _

// kernel: _lambda_.21
$region0: #{_lambda_.21}
  #allocation0 [shape = 'u32[]', space=smem, size = 0x4, offset = 0x4, fixed_abs, tag = 'smem constant byte address 0x4 - core index']
  #allocation1 [shape = 'u32[144,128]{1,0:T(1,128)}', space=vmem, size = 0x12000, scoped, tag = 'internal scratch']
  %s0 = inlined_call_operand.vmem [shape: f32[2,64,64], index: 0, kind: input, shape index: {}]
  %s1 = inlined_call_operand.vmem [shape: f32[2,1,64], index: 1, kind: input, shape index: {}]
  %s2 = inlined_call_operand.vmem [shape: f32[2,1,64], index: 2, kind: input, shape index: {}]
  %s3 = inlined_call_operand.vmem [shape: f32[64,192], index: 3, kind: input, shape index: {}]
  %s4 = inlined_call_operand.vmem [shape: f32[2,64,192], index: 4, kind: output, shape index: {}]
  %s5 = sld [smem:[#allocation0]]
  $region49: #{_lambda_.21} parent=0
    _
  %s7 = ssub.s32 1, %s5
  %s8 = scalar_select 0, %s7, %s5
  loop: start=0, step=1, limit=4
  $region2: #{_lambda_.21} parent=0 // loop_pre_header
    _
  $region3: #{_lambda_.21} parent=0 // loop_header
    %s10 = sphi 0, %s14
    %p11 = scmp.ge.s32.totalorder %s10, 4
    %s17 = sphi 0, %s29
    %s18 = sphi 0, %s25
    %s19 = sphi 0, %s17
    %s20 = sphi 0, %s18
    %s21 = sphi 0, %s19
    %s22 = sphi 0, %s20
    %s34 = sphi 0, %s36
    %s37 = sphi 0, %s34
    %s38 = sphi 0, %s37
    %s54 = sphi 0, %s38
    %s60 = sphi 0, %s62
    %s63 = sphi 0, %s60
    %s64 = sphi 0, %s63
    %s80 = sphi 0, %s64
    %s86 = sphi 0, %s88
    %s89 = sphi 0, %s86
    %s90 = sphi 0, %s89
    %s106 = sphi 0, %s90
    %s110 = sphi 0, %s110
    %s112 = sphi 0, %s110
    %s113 = sphi 0, %s112
    %s127 = sphi 0, %s113
    %s135 = sphi 0, %s137
    %s138 = sphi 0, %s135
    %s139 = sphi 0, %s138
    %s155 = sphi 0, %s139
  $region4: #{_lambda_.21} parent=0 // loop_header_branch
    %13 = sbr.rel (%p11) target = $region8
  $region5: #{_lambda_.21} parent=0 // loop_body
    %s15 = ssub.s32 %s10, 1
    %s16 = ssub.s32 %s10, 2
    %s23 = sadd.s32 1, %s18
    %p24 = scmp.ge.s32.totalorder %s23, 1
    %s25 = scalar_select %p24, 0, %s23
    %s26 = sadd.s32 1, %s17
    %s27 = scalar_select %p24, %s26, %s17
    %p28 = scmp.ge.s32.totalorder %s27, 2
    %s29 = scalar_select %p28, 0, %s27
    %s30 = ssub.s32 %s17, %s29
    %s31 = ssub.s32 %s18, %s25
    %s32 = sor.u32 %s30, %s31
    %p33 = scmp.eq.s32.totalorder %s32, 0
    %s35 = sadd.s32 %s34, 1
    %s36 = scalar_select %p33, %s34, %s35
    %p39 = pneg %p33
    %p40 = scmp.eq.s32.totalorder %s10, 1
    %p41 = por %p39, %p40
    %p42 = scmp.ne.s32.totalorder %s34, %s37
    %p43 = scmp.eq.s32.totalorder %s10, 0
    %p44 = por %p42, %p43
    %p45 = scmp.ne.s32.totalorder %s34, %s37
    %p46 = scmp.eq.s32.totalorder %s15, 1
    %p47 = por %p45, %p46
    %p48 = scmp.ne.s32.totalorder %s37, %s38
    %p49 = scmp.eq.s32.totalorder %s15, 0
    %p50 = por %p48, %p49
    %p51 = scmp.ne.s32.totalorder %s37, %s38
    %p52 = scmp.eq.s32.totalorder %s16, 1
    %p53 = por %p51, %p52
    %p55 = scmp.ne.s32.totalorder %s38, %s54
    %p56 = scmp.eq.s32.totalorder %s16, 0
    %p57 = por %p55, %p56
    %s58 = ssub.s32 %s17, %s29
    %p59 = scmp.eq.s32.totalorder %s58, 0
    %s61 = sadd.s32 %s60, 1
    %s62 = scalar_select %p59, %s60, %s61
    %p65 = pneg %p59
    %p66 = scmp.eq.s32.totalorder %s10, 1
    %p67 = por %p65, %p66
    %p68 = scmp.ne.s32.totalorder %s60, %s63
    %p69 = scmp.eq.s32.totalorder %s10, 0
    %p70 = por %p68, %p69
    %p71 = scmp.ne.s32.totalorder %s60, %s63
    %p72 = scmp.eq.s32.totalorder %s15, 1
    %p73 = por %p71, %p72
    %p74 = scmp.ne.s32.totalorder %s63, %s64
    %p75 = scmp.eq.s32.totalorder %s15, 0
    %p76 = por %p74, %p75
    %p77 = scmp.ne.s32.totalorder %s63, %s64
    %p78 = scmp.eq.s32.totalorder %s16, 1
    %p79 = por %p77, %p78
    %p81 = scmp.ne.s32.totalorder %s64, %s80
    %p82 = scmp.eq.s32.totalorder %s16, 0
    %p83 = por %p81, %p82
    %s84 = ssub.s32 %s17, %s29
    %p85 = scmp.eq.s32.totalorder %s84, 0
    %s87 = sadd.s32 %s86, 1
    %s88 = scalar_select %p85, %s86, %s87
    %p91 = pneg %p85
    %p92 = scmp.eq.s32.totalorder %s10, 1
    %p93 = por %p91, %p92
    %p94 = scmp.ne.s32.totalorder %s86, %s89
    %p95 = scmp.eq.s32.totalorder %s10, 0
    %p96 = por %p94, %p95
    %p97 = scmp.ne.s32.totalorder %s86, %s89
    %p98 = scmp.eq.s32.totalorder %s15, 1
    %p99 = por %p97, %p98
    %p100 = scmp.ne.s32.totalorder %s89, %s90
    %p101 = scmp.eq.s32.totalorder %s15, 0
    %p102 = por %p100, %p101
    %p103 = scmp.ne.s32.totalorder %s89, %s90
    %p104 = scmp.eq.s32.totalorder %s16, 1
    %p105 = por %p103, %p104
    %p107 = scmp.ne.s32.totalorder %s90, %s106
    %p108 = scmp.eq.s32.totalorder %s16, 0
    %p109 = por %p107, %p108
    %s111 = sadd.s32 %s110, 1
    %p114 = scmp.eq.s32.totalorder %s10, 1
    %p115 = scmp.ne.s32.totalorder %s110, %s112
    %p116 = scmp.eq.s32.totalorder %s10, 0
    %p117 = por %p115, %p116
    %p118 = scmp.ne.s32.totalorder %s110, %s112
    %p119 = scmp.eq.s32.totalorder %s15, 1
    %p120 = por %p118, %p119
    %p121 = scmp.ne.s32.totalorder %s112, %s113
    %p122 = scmp.eq.s32.totalorder %s15, 0
    %p123 = por %p121, %p122
    %p124 = scmp.ne.s32.totalorder %s112, %s113
    %p125 = scmp.eq.s32.totalorder %s16, 1
    %p126 = por %p124, %p125
    %p128 = scmp.ne.s32.totalorder %s113, %s127
    %p129 = scmp.eq.s32.totalorder %s16, 0
    %p130 = por %p128, %p129
    %s131 = ssub.s32 %s17, %s29
    %s132 = ssub.s32 %s18, %s25
    %s133 = sor.u32 %s131, %s132
    %p134 = scmp.eq.s32.totalorder %s133, 0
    %s136 = sadd.s32 %s135, 1
    %s137 = scalar_select %p134, %s135, %s136
    %p140 = pneg %p134
    %p141 = scmp.eq.s32.totalorder %s10, 1
    %p142 = por %p140, %p141
    %p143 = scmp.ne.s32.totalorder %s135, %s138
    %p144 = scmp.eq.s32.totalorder %s10, 0
    %p145 = por %p143, %p144
    %p146 = scmp.ne.s32.totalorder %s135, %s138
    %p147 = scmp.eq.s32.totalorder %s15, 1
    %p148 = por %p146, %p147
    %p149 = scmp.ne.s32.totalorder %s138, %s139
    %p150 = scmp.eq.s32.totalorder %s15, 0
    %p151 = por %p149, %p150
    %p152 = scmp.ne.s32.totalorder %s138, %s139
    %p153 = scmp.eq.s32.totalorder %s16, 1
    %p154 = por %p152, %p153
    %p156 = scmp.ne.s32.totalorder %s139, %s155
    %p157 = scmp.eq.s32.totalorder %s16, 0
    %p158 = por %p156, %p157
    %p159 = scmp.le.s32.totalorder 1, %s10
    %p160 = scmp.lt.s32.totalorder %s10, 3
    %p161 = pnand %p159, %p160
    %p162 = pneg %p161
    // Predicated region
    $region9: #{_lambda_.21} parent=5 // pred_check
      _
    $region10: #{_lambda_.21} parent=5 // pred_check_branch
      %164 = sbr.rel (%p161) target = $region12
    $region11: #{_lambda_.21} parent=5 // pred_region
      %s165 = ssub.s32 %s10, 1
      // Predicated region
      $region13: #{_lambda_.21} parent=11 // pred_check
        %p166 = pneg %p123
      $region14: #{_lambda_.21} parent=11 // pred_check_branch
        %168 = sbr.rel (%p166) target = $region16
      $region15: #{_lambda_.21} parent=11 // pred_region
        _
      $region16: #{_lambda_.21} parent=11 // pred_fallthru
        _
    $region12: #{_lambda_.21} parent=5 // pred_fallthru
      _
    %p169 = scmp.lt.s32.totalorder %s10, 2
    // Predicated region
    $region17: #{_lambda_.21} parent=5 // pred_check
      %p170 = pneg %p169
    $region18: #{_lambda_.21} parent=5 // pred_check_branch
      %172 = sbr.rel (%p170) target = $region20
    $region19: #{_lambda_.21} parent=5 // pred_region
      // Predicated region
      $region21: #{_lambda_.21} parent=19 // pred_check
        %p173 = pneg %p44
      $region22: #{_lambda_.21} parent=19 // pred_check_branch
        %175 = sbr.rel (%p173) target = $region24
      $region23: #{_lambda_.21} parent=19 // pred_region
        %s176 = smul.u32 8, %s18
        %p177 = scmp.lt.s32.totalorder %s17, 1
        %s178 = scalar_select %p177, %s17, 1
        %p179 = scmp.lt.s32.totalorder %s176, 7
        %s180 = scalar_select %p179, %s176, 7
        %s181 = smul.addr %s178, 8
        %s182 = sadd.s32 %s180, %s181
        %s183 = smul.addr %s182, 8
        %s184 = scalar_lea.vmem %s0, %s183
        %s185 = smul.u32 8, %s18
      $region24: #{_lambda_.21} parent=19 // pred_fallthru
        _
      // Predicated region
      $region25: #{_lambda_.21} parent=19 // pred_check
        %p186 = pneg %p70
      $region26: #{_lambda_.21} parent=19 // pred_check_branch
        %188 = sbr.rel (%p186) target = $region28
      $region27: #{_lambda_.21} parent=19 // pred_region
        %p189 = scmp.lt.s32.totalorder %s17, 1
        %s190 = scalar_select %p189, %s17, 1
        %s191 = scalar_lea.vmem %s1, %s190
      $region28: #{_lambda_.21} parent=19 // pred_fallthru
        _
      // Predicated region
      $region29: #{_lambda_.21} parent=19 // pred_check
        %p192 = pneg %p96
      $region30: #{_lambda_.21} parent=19 // pred_check_branch
        %194 = sbr.rel (%p192) target = $region32
      $region31: #{_lambda_.21} parent=19 // pred_region
        %p195 = scmp.lt.s32.totalorder %s17, 1
        %s196 = scalar_select %p195, %s17, 1
        %s197 = scalar_lea.vmem %s2, %s196
      $region32: #{_lambda_.21} parent=19 // pred_fallthru
        _
    $region20: #{_lambda_.21} parent=5 // pred_fallthru
      _
    %p198 = scmp.le.s32.totalorder 1, %s10
    %p199 = scmp.lt.s32.totalorder %s10, 3
    %p200 = pnand %p198, %p199
    %p201 = pneg %p200
    // Predicated region
    $region33: #{_lambda_.21} parent=5 // pred_check
      _
    $region34: #{_lambda_.21} parent=5 // pred_check_branch
      %203 = sbr.rel (%p200) target = $region36
    $region35: #{_lambda_.21} parent=5 // pred_region
      %s204 = ssub.s32 %s10, 1
      %s205 = smul.u32 8, %s20
      %p206 = scmp.lt.s32.totalorder %s19, 1
      %s207 = scalar_select %p206, %s19, 1
      %p208 = scmp.lt.s32.totalorder %s205, 7
      %s209 = scalar_select %p208, %s205, 7
      %s210 = smul.addr %s207, 8
      %s211 = sadd.s32 %s209, %s210
      %s212 = smul.addr %s211, 8
      %s213 = scalar_lea.vmem %s0, %s212
      %p214 = pneg %p50
      %p215 = pneg %p47
      %p216 = scmp.lt.s32.totalorder %s19, 1
      %s217 = scalar_select %p216, %s19, 1
      %s218 = scalar_lea.vmem %s1, %s217
      %p219 = pneg %p76
      %p220 = pneg %p73
      %p221 = scmp.lt.s32.totalorder %s19, 1
      %s222 = scalar_select %p221, %s19, 1
      %s223 = scalar_lea.vmem %s2, %s222
      %p224 = pneg %p102
      %p225 = pneg %p99
      %p226 = pneg %p123
      %p227 = pneg %p120
      %p228 = pneg %p151
      %p229 = pneg %p148
      %s230 = smul.u32 8, %s20
      %p231 = scmp.lt.s32.totalorder %s19, 1
      %s232 = scalar_select %p231, %s19, 1
      %p233 = scmp.lt.s32.totalorder %s230, 7
      %s234 = scalar_select %p233, %s230, 7
      %s235 = smul.addr %s234, 2
      %s236 = smul.addr %s232, 16
      %s237 = sadd.s32 %s235, %s236
      %s238 = smul.addr %s237, 8
      %s239 = scalar_lea.vmem %s4, %s238
      %s240 = smul.u32 8, %s20
      %p241 = scmp.lt.s32.totalorder %s19, 1
      %s242 = scalar_select %p241, %s19, 1
      %p243 = scmp.lt.s32.totalorder %s240, 7
      %s244 = scalar_select %p243, %s240, 7
      %s245 = smul.addr %s242, 8
      %s246 = sadd.s32 %s244, %s245
      %s247 = smul.addr %s246, 8
      %s248 = scalar_lea.vmem %s0, %s247
      %s249 = smul.u32 8, %s20
      %p250 = scmp.lt.s32.totalorder %s19, 1
      %s251 = scalar_select %p250, %s19, 1
      %s252 = scalar_lea.vmem %s1, %s251
      %p253 = scmp.lt.s32.totalorder %s19, 1
      %s254 = scalar_select %p253, %s19, 1
      %s255 = scalar_lea.vmem %s2, %s254
      %s256 = smul.u32 8, %s20
      %p257 = scmp.lt.s32.totalorder %s19, 1
      %s258 = scalar_select %p257, %s19, 1
      %p259 = scmp.lt.s32.totalorder %s256, 7
      %s260 = scalar_select %p259, %s256, 7
      %s261 = smul.addr %s260, 2
      %s262 = smul.addr %s258, 16
      %s263 = sadd.s32 %s261, %s262
      %s264 = smul.addr %s263, 8
      %s265 = scalar_lea.vmem %s4, %s264
      %s266 = smul.u32 8, %s20
      %v268 = vld [vmem:[%s248] sm:$0xff]
      %v269 = vld [vmem:[%s248 + $0x8] sm:$0xff]
      %v270 = vld [vmem:[%s248 + $0x10] sm:$0xff]
      %v271 = vld [vmem:[%s248 + $0x18] sm:$0xff]
      %v272 = vld [vmem:[%s248 + $0x20] sm:$0xff]
      %v273 = vld [vmem:[%s248 + $0x28] sm:$0xff]
      %v274 = vld [vmem:[%s248 + $0x30] sm:$0xff]
      %v275 = vld [vmem:[%s248 + $0x38] sm:$0xff]
      %v276 = vld [vmem:[%s252] sm:$0x1]
      %v277 = vld [vmem:[%s255] sm:$0x1]
      %vm278 = vcmask 523264
      %v279 = vsel %vm278, %v268, 0.0
      %280 = vadd.xlane.f32.xlu0 %v279
      %v281 = vpop.xlane.xlu0 %280
      %v282 = vsel %vm278, %v269, 0.0
      %283 = vadd.xlane.f32.xlu0 %v282
      %v284 = vpop.xlane.xlu0 %283
      %v285 = vsel %vm278, %v270, 0.0
      %286 = vadd.xlane.f32.xlu0 %v285
      %v287 = vpop.xlane.xlu0 %286
      %v288 = vsel %vm278, %v271, 0.0
      %289 = vadd.xlane.f32.xlu0 %v288
      %v290 = vpop.xlane.xlu0 %289
      %v291 = vsel %vm278, %v272, 0.0
      %292 = vadd.xlane.f32.xlu0 %v291
      %v293 = vpop.xlane.xlu0 %292
      %v294 = vsel %vm278, %v273, 0.0
      %295 = vadd.xlane.f32.xlu0 %v294
      %v296 = vpop.xlane.xlu0 %295
      %v297 = vsel %vm278, %v274, 0.0
      %298 = vadd.xlane.f32.xlu0 %v297
      %v299 = vpop.xlane.xlu0 %298
      %v300 = vsel %vm278, %v275, 0.0
      %301 = vadd.xlane.f32.xlu0 %v300
      %v302 = vpop.xlane.xlu0 %301
      %v303 = vrcp.pop 64.0
      %v304 = vmul.f32 %v281, %v303
      %v305 = vmul.f32 %v284, %v303
      %v306 = vmul.f32 %v287, %v303
      %v307 = vmul.f32 %v290, %v303
      %v308 = vmul.f32 %v293, %v303
      %v309 = vmul.f32 %v296, %v303
      %v310 = vmul.f32 %v299, %v303
      %v311 = vmul.f32 %v302, %v303
      %v312 = vsub.f32 %v268, %v304
      %v313 = vsub.f32 %v269, %v305
      %v314 = vsub.f32 %v270, %v306
      %v315 = vsub.f32 %v271, %v307
      %v316 = vsub.f32 %v272, %v308
      %v317 = vsub.f32 %v273, %v309
      %v318 = vsub.f32 %v274, %v310
      %v319 = vsub.f32 %v275, %v311
      %v320 = vmul.f32 %v312, %v312
      %v321 = vmul.f32 %v313, %v313
      %v322 = vmul.f32 %v314, %v314
      %v323 = vmul.f32 %v315, %v315
      %v324 = vmul.f32 %v316, %v316
      %v325 = vmul.f32 %v317, %v317
      %v326 = vmul.f32 %v318, %v318
      %v327 = vmul.f32 %v319, %v319
      %v328 = vsel %vm278, %v320, 0.0
      %329 = vadd.xlane.f32.xlu0 %v328
      %v330 = vpop.xlane.xlu0 %329
      %v331 = vsel %vm278, %v321, 0.0
      %332 = vadd.xlane.f32.xlu0 %v331
      %v333 = vpop.xlane.xlu0 %332
      %v334 = vsel %vm278, %v322, 0.0
      %335 = vadd.xlane.f32.xlu0 %v334
      %v336 = vpop.xlane.xlu0 %335
      %v337 = vsel %vm278, %v323, 0.0
      %338 = vadd.xlane.f32.xlu0 %v337
      %v339 = vpop.xlane.xlu0 %338
      %v340 = vsel %vm278, %v324, 0.0
      %341 = vadd.xlane.f32.xlu0 %v340
      %v342 = vpop.xlane.xlu0 %341
      %v343 = vsel %vm278, %v325, 0.0
      %344 = vadd.xlane.f32.xlu0 %v343
      %v345 = vpop.xlane.xlu0 %344
      %v346 = vsel %vm278, %v326, 0.0
      %347 = vadd.xlane.f32.xlu0 %v346
      %v348 = vpop.xlane.xlu0 %347
      %v349 = vsel %vm278, %v327, 0.0
      %350 = vadd.xlane.f32.xlu0 %v349
      %v351 = vpop.xlane.xlu0 %350
      %v352 = vmul.f32 %v330, %v303
      %v353 = vmul.f32 %v333, %v303
      %v354 = vmul.f32 %v336, %v303
      %v355 = vmul.f32 %v339, %v303
      %v356 = vmul.f32 %v342, %v303
      %v357 = vmul.f32 %v345, %v303
      %v358 = vmul.f32 %v348, %v303
      %v359 = vmul.f32 %v351, %v303
      %v360 = vadd.f32 %v352, 1e-06
      %v361 = vadd.f32 %v353, 1e-06
      %v362 = vadd.f32 %v354, 1e-06
      %v363 = vadd.f32 %v355, 1e-06
      %v364 = vadd.f32 %v356, 1e-06
      %v365 = vadd.f32 %v357, 1e-06
      %v366 = vadd.f32 %v358, 1e-06
      %v367 = vadd.f32 %v359, 1e-06
      %v368 = vrsqrt.pop %v360
      %v369 = vrsqrt.pop %v361
      %v370 = vrsqrt.pop %v362
      %v371 = vrsqrt.pop %v363
      %v372 = vrsqrt.pop %v364
      %v373 = vrsqrt.pop %v365
      %v374 = vrsqrt.pop %v366
      %v375 = vrsqrt.pop %v367
      %v376 = vmul.f32 %v312, %v368
      %v377 = vmul.f32 %v313, %v369
      %v378 = vmul.f32 %v314, %v370
      %v379 = vmul.f32 %v315, %v371
      %v380 = vmul.f32 %v316, %v372
      %v381 = vmul.f32 %v317, %v373
      %v382 = vmul.f32 %v318, %v374
      %v383 = vmul.f32 %v319, %v375
      %v384 = vadd.f32 %v277, 1.0
      %v386 = vlaneseq
      %v387 = vshrl.u32 %v386, 7
      %v388 = vsub.s32 0, %v387
      %v389 = vrot.slane %v384, %v388
      %v391 = vmul.f32 %v376, %v389
      %v392 = vmul.f32 %v377, %v389
      %v393 = vmul.f32 %v378, %v389
      %v394 = vmul.f32 %v379, %v389
      %v395 = vmul.f32 %v380, %v389
      %v396 = vmul.f32 %v381, %v389
      %v397 = vmul.f32 %v382, %v389
      %v398 = vmul.f32 %v383, %v389
      %v400 = vlaneseq
      %v401 = vshrl.u32 %v400, 7
      %v402 = vsub.s32 0, %v401
      %v403 = vrot.slane %v276, %v402
      %v405 = vadd.f32 %v391, %v403
      %v406 = vadd.f32 %v392, %v403
      %v407 = vadd.f32 %v393, %v403
      %v408 = vadd.f32 %v394, %v403
      %v409 = vadd.f32 %v395, %v403
      %v410 = vadd.f32 %v396, %v403
      %v411 = vadd.f32 %v397, %v403
      %v412 = vadd.f32 %v398, %v403
      %v413 = vpack.c.bf16 %v406, %v405
      %v414 = vpack.c.bf16 %v408, %v407
      %v415 = vpack.c.bf16 %v410, %v409
      %v416 = vpack.c.bf16 %v412, %v411
      %v417 = vld [vmem:[%s3] sm:$0xff]
      %v418 = vld [vmem:[%s3 + $0x8] sm:$0xff]
      %v419 = vld [vmem:[%s3 + $0x10] sm:$0xff]
      %v420 = vld [vmem:[%s3 + $0x18] sm:$0xff]
      %v421 = vld [vmem:[%s3 + $0x20] sm:$0xff]
      %v422 = vld [vmem:[%s3 + $0x28] sm:$0xff]
      %v423 = vld [vmem:[%s3 + $0x30] sm:$0xff]
      %v424 = vld [vmem:[%s3 + $0x38] sm:$0xff]
      %v425 = vld [vmem:[%s3 + $0x40] sm:$0xff]
      %v426 = vld [vmem:[%s3 + $0x48] sm:$0xff]
      %v427 = vld [vmem:[%s3 + $0x50] sm:$0xff]
      %v428 = vld [vmem:[%s3 + $0x58] sm:$0xff]
      %v429 = vld [vmem:[%s3 + $0x60] sm:$0xff]
      %v430 = vld [vmem:[%s3 + $0x68] sm:$0xff]
      %v431 = vld [vmem:[%s3 + $0x70] sm:$0xff]
      %v432 = vld [vmem:[%s3 + $0x78] sm:$0xff]
      %v433 = vpack.c.bf16 %v419, %v417
      %v434 = vpack.c.bf16 %v420, %v418
      %v435 = vpack.c.bf16 %v423, %v421
      %v436 = vpack.c.bf16 %v424, %v422
      %v437 = vpack.c.bf16 %v427, %v425
      %v438 = vpack.c.bf16 %v428, %v426
      %v439 = vpack.c.bf16 %v431, %v429
      %v440 = vpack.c.bf16 %v432, %v430
      %v442 = vsel %vm278, %v413, 0
      %v445 = vsel %vm278, %v414, 0
      %v448 = vsel %vm278, %v415, 0
      %v451 = vsel %vm278, %v416, 0
      %453 = vmatprep.subr.bf16.mxu0 0
      %454 = vmatpush1.bf16.msra.mxu0 0
      %455 = vmatprep.subr.bf16.mxu0 0
      %456 = vmatpush1.bf16.msra.mxu0 0
      %457 = vmatprep.subr.bf16.mxu0 0
      %458 = vmatpush1.bf16.msra.mxu0 0
      %459 = vmatprep.subr.bf16.mxu0 0
      %460 = vmatpush1.bf16.msra.mxu0 0
      %461 = vmatprep.subr.bf16.mxu0 %v440
      %462 = vmatpush1.bf16.msra.mxu0 %v439
      %463 = vmatprep.subr.bf16.mxu0 %v438
      %464 = vmatpush1.bf16.msra.mxu0 %v437
      %465 = vmatprep.subr.bf16.mxu0 %v436
      %466 = vmatpush1.bf16.msra.mxu0 %v435
      %467 = vmatprep.subr.bf16.mxu0 %v434
      %468 = vmatpush1.bf16.msra.mxu0 %v433
      %469 = vmatprep.subr.bf16.mxu0 0
      %470 = vmatpush2.bf16.msra.mxu0 0
      %471 = vmatprep.subr.bf16.mxu0 0
      %472 = vmatpush2.bf16.msra.mxu0 0
      %473 = vmatprep.subr.bf16.mxu0 0
      %474 = vmatpush2.bf16.msra.mxu0 0
      %475 = vmatprep.subr.bf16.mxu0 0
      %476 = vmatpush2.bf16.msra.mxu0 0
      %477 = vmatprep.subr.bf16.mxu0 0
      %478 = vmatpush2.bf16.msra.mxu0 0
      %479 = vmatprep.subr.bf16.mxu0 0
      %480 = vmatpush2.bf16.msra.mxu0 0
      %481 = vmatprep.subr.bf16.mxu0 0
      %482 = vmatpush2.bf16.msra.mxu0 0
      %483 = vmatprep.subr.bf16.mxu0 0
      %484 = vmatpush2.bf16.msra.mxu0 0
      %485 = vmatprep.mubr.bf16.mxu0 0
      %486 = vmatmul.mubr.bf16.gmra.mxu0 %v442
      %v487 = vpop.f32.mrf.mxu0
      %v488 = vadd.f32 0.0, %v487
      %v489 = vpop.f32.mrf.mxu0
      %v490 = vadd.f32 0.0, %v489
      %v491 = vpop.f32.mrf.mxu0
      %v492 = vadd.f32 0.0, %v491
      %v493 = vpop.f32.mrf.mxu0
      %v494 = vadd.f32 0.0, %v493
      %495 = vmatprep.mubr.bf16.mxu0 0
      %496 = vmatmul.mubr.bf16.gmra.mxu0 %v445
      %v497 = vpop.f32.mrf.mxu0
      %v498 = vadd.f32 0.0, %v497
      %v499 = vpop.f32.mrf.mxu0
      %v500 = vadd.f32 0.0, %v499
      %v501 = vpop.f32.mrf.mxu0
      %v502 = vadd.f32 0.0, %v501
      %v503 = vpop.f32.mrf.mxu0
      %v504 = vadd.f32 0.0, %v503
      %505 = vmatprep.mubr.bf16.mxu0 0
      %506 = vmatmul.mubr.bf16.gmra.mxu0 %v448
      %v507 = vpop.f32.mrf.mxu0
      %v508 = vadd.f32 0.0, %v507
      %v509 = vpop.f32.mrf.mxu0
      %v510 = vadd.f32 0.0, %v509
      %v511 = vpop.f32.mrf.mxu0
      %v512 = vadd.f32 0.0, %v511
      %v513 = vpop.f32.mrf.mxu0
      %v514 = vadd.f32 0.0, %v513
      %515 = vmatprep.mubr.bf16.mxu0 0
      %516 = vmatmul.mubr.bf16.gmra.mxu0 %v451
      %v517 = vpop.f32.mrf.mxu0
      %v518 = vadd.f32 0.0, %v517
      %v519 = vpop.f32.mrf.mxu0
      %v520 = vadd.f32 0.0, %v519
      %v521 = vpop.f32.mrf.mxu0
      %v522 = vadd.f32 0.0, %v521
      %v523 = vpop.f32.mrf.mxu0
      %v524 = vadd.f32 0.0, %v523
      %525 = vdwg.mxu0
      %526 = vst [vmem:[%s265] sm:$0xff] %v488
      %527 = vst.msk [vmem:[%s265 + $0x8] sm:$0xff] %vm278, %v490
      %528 = vst [vmem:[%s265 + $0x10] sm:$0xff] %v492
      %529 = vst.msk [vmem:[%s265 + $0x18] sm:$0xff] %vm278, %v494
      %530 = vst [vmem:[%s265 + $0x20] sm:$0xff] %v498
      %531 = vst.msk [vmem:[%s265 + $0x28] sm:$0xff] %vm278, %v500
      %532 = vst [vmem:[%s265 + $0x30] sm:$0xff] %v502
      %533 = vst.msk [vmem:[%s265 + $0x38] sm:$0xff] %vm278, %v504
      %534 = vst [vmem:[%s265 + $0x40] sm:$0xff] %v508
      %535 = vst.msk [vmem:[%s265 + $0x48] sm:$0xff] %vm278, %v510
      %536 = vst [vmem:[%s265 + $0x50] sm:$0xff] %v512
      %537 = vst.msk [vmem:[%s265 + $0x58] sm:$0xff] %vm278, %v514
      %538 = vst [vmem:[%s265 + $0x60] sm:$0xff] %v518
      %539 = vst.msk [vmem:[%s265 + $0x68] sm:$0xff] %vm278, %v520
      %540 = vst [vmem:[%s265 + $0x70] sm:$0xff] %v522
      %541 = vst.msk [vmem:[%s265 + $0x78] sm:$0xff] %vm278, %v524
      %s542 = smul.u32 8, %s20
      %p543 = scmp.lt.s32.totalorder %s19, 1
      %s544 = scalar_select %p543, %s19, 1
      %p545 = scmp.lt.s32.totalorder %s542, 7
      %s546 = scalar_select %p545, %s542, 7
      %s547 = smul.addr %s546, 2
      %s548 = smul.addr %s544, 16
      %s549 = sadd.s32 %s547, %s548
      %s550 = smul.addr %s549, 8
      %s551 = scalar_lea.vmem %s4, %s550
      // Predicated region
      $region37: #{_lambda_.21} parent=35 // pred_check
        %p552 = pneg %p148
      $region38: #{_lambda_.21} parent=35 // pred_check_branch
        %554 = sbr.rel (%p552) target = $region40
      $region39: #{_lambda_.21} parent=35 // pred_region
        %s555 = smul.u32 8, %s20
      $region40: #{_lambda_.21} parent=35 // pred_fallthru
        _
    $region36: #{_lambda_.21} parent=5 // pred_fallthru
      _
    %p556 = scmp.le.s32.totalorder 2, %s10
    // Predicated region
    $region41: #{_lambda_.21} parent=5 // pred_check
      %p557 = pneg %p556
    $region42: #{_lambda_.21} parent=5 // pred_check_branch
      %559 = sbr.rel (%p557) target = $region44
    $region43: #{_lambda_.21} parent=5 // pred_region
      %s560 = ssub.s32 %s10, 2
      // Predicated region
      $region45: #{_lambda_.21} parent=43 // pred_check
        %p561 = pneg %p154
      $region46: #{_lambda_.21} parent=43 // pred_check_branch
        %563 = sbr.rel (%p561) target = $region48
      $region47: #{_lambda_.21} parent=43 // pred_region
        %s564 = smul.u32 8, %s22
        %p565 = scmp.lt.s32.totalorder %s21, 1
        %s566 = scalar_select %p565, %s21, 1
        %p567 = scmp.lt.s32.totalorder %s564, 7
        %s568 = scalar_select %p567, %s564, 7
        %s569 = smul.addr %s568, 2
        %s570 = smul.addr %s566, 16
        %s571 = sadd.s32 %s569, %s570
        %s572 = smul.addr %s571, 8
        %s573 = scalar_lea.vmem %s4, %s572
      $region48: #{_lambda_.21} parent=43 // pred_fallthru
        _
    $region44: #{_lambda_.21} parent=5 // pred_fallthru
      _
  $region6: #{_lambda_.21} parent=0 // loop_footer
    %s14 = sadd.s32 1, %s10
  $region7: #{_lambda_.21} parent=0 // loop_footer_branch
    %9 = sbr.rel target = $region3
  $region8: #{_lambda_.21} parent=0 // loop_exit
    _

// kernel: _lambda_.31
$region0: #{_lambda_.31}
  #allocation0 [shape = 'u32[]', space=smem, size = 0x4, offset = 0x4, fixed_abs, tag = 'smem constant byte address 0x4 - core index']
  #allocation1 [shape = 'u32[144,128]{1,0:T(1,128)}', space=vmem, size = 0x12000, scoped, tag = 'internal scratch']
  %s0 = inlined_call_operand.vmem [shape: f32[2,64], index: 0, kind: input, shape index: {}]
  %s1 = inlined_call_operand.vmem [shape: f32[64,128], index: 1, kind: input, shape index: {}]
  %s2 = inlined_call_operand.vmem [shape: f32[2,128], index: 2, kind: output, shape index: {}]
  %s3 = sld [smem:[#allocation0]]
  $region18: #{_lambda_.31} parent=0
    _
  %s5 = ssub.s32 1, %s3
  %s6 = scalar_select 0, %s5, %s3
  // Predicated region
  $region2: #{_lambda_.31} parent=0 // pred_check
    _
  $region3: #{_lambda_.31} parent=0 // pred_check_branch
    %8 = sbr.rel (0) target = $region5
  $region4: #{_lambda_.31} parent=0 // pred_region
    _
  $region5: #{_lambda_.31} parent=0 // pred_fallthru
    _
  // Predicated region
  $region6: #{_lambda_.31} parent=0 // pred_check
    _
  $region7: #{_lambda_.31} parent=0 // pred_check_branch
    %10 = sbr.rel (0) target = $region9
  $region8: #{_lambda_.31} parent=0 // pred_region
    _
  $region9: #{_lambda_.31} parent=0 // pred_fallthru
    _
  %v12 = vld [vmem:[%s0] sm:$0x3]
  %v13 = vxor.u32 %v12, 2147483648
  %v14 = vmul.f32 %v13, 1.442695
  %v15 = vpow.pop %v14
  %v16 = vadd.f32 %v15, 1.0
  %v17 = vrcp.pop %v16
  %v18 = vmul.f32 1.0, %v17
  %v19 = vmul.f32 %v12, %v18
  %v20 = vpack.c.bf16 %v19, %v19
  %v21 = vld [vmem:[%s1] sm:$0xff]
  %v22 = vld [vmem:[%s1 + $0x8] sm:$0xff]
  %v23 = vld [vmem:[%s1 + $0x10] sm:$0xff]
  %v24 = vld [vmem:[%s1 + $0x18] sm:$0xff]
  %v25 = vld [vmem:[%s1 + $0x20] sm:$0xff]
  %v26 = vld [vmem:[%s1 + $0x28] sm:$0xff]
  %v27 = vld [vmem:[%s1 + $0x30] sm:$0xff]
  %v28 = vld [vmem:[%s1 + $0x38] sm:$0xff]
  %v29 = vpack.c.bf16 %v22, %v21
  %v30 = vpack.c.bf16 %v24, %v23
  %v31 = vpack.c.bf16 %v26, %v25
  %v32 = vpack.c.bf16 %v28, %v27
  %vm33 = vcmask 523264
  %v35 = vsel %vm33, %v20, 0
  %37 = vmatprep.subr.bf16.mxu0 0
  %38 = vmatpush1.bf16.msra.mxu0 0
  %39 = vmatprep.subr.bf16.mxu0 0
  %40 = vmatpush1.bf16.msra.mxu0 0
  %41 = vmatprep.subr.bf16.mxu0 0
  %42 = vmatpush1.bf16.msra.mxu0 0
  %43 = vmatprep.subr.bf16.mxu0 0
  %44 = vmatpush1.bf16.msra.mxu0 0
  %45 = vmatprep.subr.bf16.mxu0 0
  %46 = vmatpush1.bf16.msra.mxu0 %v32
  %47 = vmatprep.subr.bf16.mxu0 0
  %48 = vmatpush1.bf16.msra.mxu0 %v31
  %49 = vmatprep.subr.bf16.mxu0 0
  %50 = vmatpush1.bf16.msra.mxu0 %v30
  %51 = vmatprep.subr.bf16.mxu0 0
  %52 = vmatpush1.bf16.msra.mxu0 %v29
  %53 = vmatprep.subr.bf16.mxu0 0
  %54 = vmatpush2.bf16.msra.mxu0 0
  %55 = vmatprep.subr.bf16.mxu0 0
  %56 = vmatpush2.bf16.msra.mxu0 0
  %57 = vmatprep.subr.bf16.mxu0 0
  %58 = vmatpush2.bf16.msra.mxu0 0
  %59 = vmatprep.subr.bf16.mxu0 0
  %60 = vmatpush2.bf16.msra.mxu0 0
  %61 = vmatprep.subr.bf16.mxu0 0
  %62 = vmatpush2.bf16.msra.mxu0 0
  %63 = vmatprep.subr.bf16.mxu0 0
  %64 = vmatpush2.bf16.msra.mxu0 0
  %65 = vmatprep.subr.bf16.mxu0 0
  %66 = vmatpush2.bf16.msra.mxu0 0
  %67 = vmatprep.subr.bf16.mxu0 0
  %68 = vmatpush2.bf16.msra.mxu0 0
  %69 = vmatprep.mubr.bf16.mxu0 0
  %70 = vmatmul.mubr.bf16.gmra.mxu0 %v35
  %v71 = vpop.f32.mrf.mxu0
  %v72 = vadd.f32 0.0, %v71
  %v73 = vpop.f32.mrf.mxu0
  %v74 = vpop.f32.mrf.mxu0
  %v75 = vpop.f32.mrf.mxu0
  %76 = vdwg.mxu0
  %77 = vst [vmem:[%s2] sm:$0x3] %v72
  // Predicated region
  $region10: #{_lambda_.31} parent=0 // pred_check
    _
  $region11: #{_lambda_.31} parent=0 // pred_check_branch
    %79 = sbr.rel (0) target = $region13
  $region12: #{_lambda_.31} parent=0 // pred_region
    _
  $region13: #{_lambda_.31} parent=0 // pred_fallthru
    _
  // Predicated region
  $region14: #{_lambda_.31} parent=0 // pred_check
    _
  $region15: #{_lambda_.31} parent=0 // pred_check_branch
    %81 = sbr.rel (0) target = $region17
  $region16: #{_lambda_.31} parent=0 // pred_region
    _
  $region17: #{_lambda_.31} parent=0 // pred_fallthru
    _

// kernel: _lambda_.25
$region0: #{_lambda_.25}
  #allocation0 [shape = 'u32[]', space=smem, size = 0x4, offset = 0x4, fixed_abs, tag = 'smem constant byte address 0x4 - core index']
  #allocation1 [shape = 'u32[144,128]{1,0:T(1,128)}', space=vmem, size = 0x12000, scoped, tag = 'internal scratch']
  %s0 = inlined_call_operand.vmem [shape: f32[2,64,64], index: 0, kind: input, shape index: {}]
  %s1 = inlined_call_operand.vmem [shape: f32[2,1,64], index: 1, kind: input, shape index: {}]
  %s2 = inlined_call_operand.vmem [shape: f32[2,1,64], index: 2, kind: input, shape index: {}]
  %s3 = inlined_call_operand.vmem [shape: f32[2,1,64], index: 3, kind: input, shape index: {}]
  %s4 = inlined_call_operand.vmem [shape: f32[64,256], index: 4, kind: input, shape index: {}]
  %s5 = inlined_call_operand.vmem [shape: f32[256,64], index: 5, kind: input, shape index: {}]
  %s6 = inlined_call_operand.vmem [shape: f32[2,64,64], index: 6, kind: output, shape index: {}]
  %s7 = sld [smem:[#allocation0]]
  $region57: #{_lambda_.25} parent=0
    _
  %s9 = ssub.s32 1, %s7
  %s10 = scalar_select 0, %s9, %s7
  loop: start=0, step=1, limit=4
  $region2: #{_lambda_.25} parent=0 // loop_pre_header
    _
  $region3: #{_lambda_.25} parent=0 // loop_header
    %s12 = sphi 0, %s16
    %p13 = scmp.ge.s32.totalorder %s12, 4
    %s19 = sphi 0, %s31
    %s20 = sphi 0, %s27
    %s21 = sphi 0, %s19
    %s22 = sphi 0, %s20
    %s23 = sphi 0, %s21
    %s24 = sphi 0, %s22
    %s36 = sphi 0, %s38
    %s39 = sphi 0, %s36
    %s40 = sphi 0, %s39
    %s56 = sphi 0, %s40
    %s62 = sphi 0, %s64
    %s65 = sphi 0, %s62
    %s66 = sphi 0, %s65
    %s82 = sphi 0, %s66
    %s88 = sphi 0, %s90
    %s91 = sphi 0, %s88
    %s92 = sphi 0, %s91
    %s108 = sphi 0, %s92
    %s114 = sphi 0, %s116
    %s117 = sphi 0, %s114
    %s118 = sphi 0, %s117
    %s134 = sphi 0, %s118
    %s138 = sphi 0, %s138
    %s140 = sphi 0, %s138
    %s141 = sphi 0, %s140
    %s155 = sphi 0, %s141
    %s159 = sphi 0, %s159
    %s161 = sphi 0, %s159
    %s162 = sphi 0, %s161
    %s176 = sphi 0, %s162
    %s184 = sphi 0, %s186
    %s187 = sphi 0, %s184
    %s188 = sphi 0, %s187
    %s204 = sphi 0, %s188
  $region4: #{_lambda_.25} parent=0 // loop_header_branch
    %15 = sbr.rel (%p13) target = $region8
  $region5: #{_lambda_.25} parent=0 // loop_body
    %s17 = ssub.s32 %s12, 1
    %s18 = ssub.s32 %s12, 2
    %s25 = sadd.s32 1, %s20
    %p26 = scmp.ge.s32.totalorder %s25, 1
    %s27 = scalar_select %p26, 0, %s25
    %s28 = sadd.s32 1, %s19
    %s29 = scalar_select %p26, %s28, %s19
    %p30 = scmp.ge.s32.totalorder %s29, 2
    %s31 = scalar_select %p30, 0, %s29
    %s32 = ssub.s32 %s19, %s31
    %s33 = ssub.s32 %s20, %s27
    %s34 = sor.u32 %s32, %s33
    %p35 = scmp.eq.s32.totalorder %s34, 0
    %s37 = sadd.s32 %s36, 1
    %s38 = scalar_select %p35, %s36, %s37
    %p41 = pneg %p35
    %p42 = scmp.eq.s32.totalorder %s12, 1
    %p43 = por %p41, %p42
    %p44 = scmp.ne.s32.totalorder %s36, %s39
    %p45 = scmp.eq.s32.totalorder %s12, 0
    %p46 = por %p44, %p45
    %p47 = scmp.ne.s32.totalorder %s36, %s39
    %p48 = scmp.eq.s32.totalorder %s17, 1
    %p49 = por %p47, %p48
    %p50 = scmp.ne.s32.totalorder %s39, %s40
    %p51 = scmp.eq.s32.totalorder %s17, 0
    %p52 = por %p50, %p51
    %p53 = scmp.ne.s32.totalorder %s39, %s40
    %p54 = scmp.eq.s32.totalorder %s18, 1
    %p55 = por %p53, %p54
    %p57 = scmp.ne.s32.totalorder %s40, %s56
    %p58 = scmp.eq.s32.totalorder %s18, 0
    %p59 = por %p57, %p58
    %s60 = ssub.s32 %s19, %s31
    %p61 = scmp.eq.s32.totalorder %s60, 0
    %s63 = sadd.s32 %s62, 1
    %s64 = scalar_select %p61, %s62, %s63
    %p67 = pneg %p61
    %p68 = scmp.eq.s32.totalorder %s12, 1
    %p69 = por %p67, %p68
    %p70 = scmp.ne.s32.totalorder %s62, %s65
    %p71 = scmp.eq.s32.totalorder %s12, 0
    %p72 = por %p70, %p71
    %p73 = scmp.ne.s32.totalorder %s62, %s65
    %p74 = scmp.eq.s32.totalorder %s17, 1
    %p75 = por %p73, %p74
    %p76 = scmp.ne.s32.totalorder %s65, %s66
    %p77 = scmp.eq.s32.totalorder %s17, 0
    %p78 = por %p76, %p77
    %p79 = scmp.ne.s32.totalorder %s65, %s66
    %p80 = scmp.eq.s32.totalorder %s18, 1
    %p81 = por %p79, %p80
    %p83 = scmp.ne.s32.totalorder %s66, %s82
    %p84 = scmp.eq.s32.totalorder %s18, 0
    %p85 = por %p83, %p84
    %s86 = ssub.s32 %s19, %s31
    %p87 = scmp.eq.s32.totalorder %s86, 0
    %s89 = sadd.s32 %s88, 1
    %s90 = scalar_select %p87, %s88, %s89
    %p93 = pneg %p87
    %p94 = scmp.eq.s32.totalorder %s12, 1
    %p95 = por %p93, %p94
    %p96 = scmp.ne.s32.totalorder %s88, %s91
    %p97 = scmp.eq.s32.totalorder %s12, 0
    %p98 = por %p96, %p97
    %p99 = scmp.ne.s32.totalorder %s88, %s91
    %p100 = scmp.eq.s32.totalorder %s17, 1
    %p101 = por %p99, %p100
    %p102 = scmp.ne.s32.totalorder %s91, %s92
    %p103 = scmp.eq.s32.totalorder %s17, 0
    %p104 = por %p102, %p103
    %p105 = scmp.ne.s32.totalorder %s91, %s92
    %p106 = scmp.eq.s32.totalorder %s18, 1
    %p107 = por %p105, %p106
    %p109 = scmp.ne.s32.totalorder %s92, %s108
    %p110 = scmp.eq.s32.totalorder %s18, 0
    %p111 = por %p109, %p110
    %s112 = ssub.s32 %s19, %s31
    %p113 = scmp.eq.s32.totalorder %s112, 0
    %s115 = sadd.s32 %s114, 1
    %s116 = scalar_select %p113, %s114, %s115
    %p119 = pneg %p113
    %p120 = scmp.eq.s32.totalorder %s12, 1
    %p121 = por %p119, %p120
    %p122 = scmp.ne.s32.totalorder %s114, %s117
    %p123 = scmp.eq.s32.totalorder %s12, 0
    %p124 = por %p122, %p123
    %p125 = scmp.ne.s32.totalorder %s114, %s117
    %p126 = scmp.eq.s32.totalorder %s17, 1
    %p127 = por %p125, %p126
    %p128 = scmp.ne.s32.totalorder %s117, %s118
    %p129 = scmp.eq.s32.totalorder %s17, 0
    %p130 = por %p128, %p129
    %p131 = scmp.ne.s32.totalorder %s117, %s118
    %p132 = scmp.eq.s32.totalorder %s18, 1
    %p133 = por %p131, %p132
    %p135 = scmp.ne.s32.totalorder %s118, %s134
    %p136 = scmp.eq.s32.totalorder %s18, 0
    %p137 = por %p135, %p136
    %s139 = sadd.s32 %s138, 1
    %p142 = scmp.eq.s32.totalorder %s12, 1
    %p143 = scmp.ne.s32.totalorder %s138, %s140
    %p144 = scmp.eq.s32.totalorder %s12, 0
    %p145 = por %p143, %p144
    %p146 = scmp.ne.s32.totalorder %s138, %s140
    %p147 = scmp.eq.s32.totalorder %s17, 1
    %p148 = por %p146, %p147
    %p149 = scmp.ne.s32.totalorder %s140, %s141
    %p150 = scmp.eq.s32.totalorder %s17, 0
    %p151 = por %p149, %p150
    %p152 = scmp.ne.s32.totalorder %s140, %s141
    %p153 = scmp.eq.s32.totalorder %s18, 1
    %p154 = por %p152, %p153
    %p156 = scmp.ne.s32.totalorder %s141, %s155
    %p157 = scmp.eq.s32.totalorder %s18, 0
    %p158 = por %p156, %p157
    %s160 = sadd.s32 %s159, 1
    %p163 = scmp.eq.s32.totalorder %s12, 1
    %p164 = scmp.ne.s32.totalorder %s159, %s161
    %p165 = scmp.eq.s32.totalorder %s12, 0
    %p166 = por %p164, %p165
    %p167 = scmp.ne.s32.totalorder %s159, %s161
    %p168 = scmp.eq.s32.totalorder %s17, 1
    %p169 = por %p167, %p168
    %p170 = scmp.ne.s32.totalorder %s161, %s162
    %p171 = scmp.eq.s32.totalorder %s17, 0
    %p172 = por %p170, %p171
    %p173 = scmp.ne.s32.totalorder %s161, %s162
    %p174 = scmp.eq.s32.totalorder %s18, 1
    %p175 = por %p173, %p174
    %p177 = scmp.ne.s32.totalorder %s162, %s176
    %p178 = scmp.eq.s32.totalorder %s18, 0
    %p179 = por %p177, %p178
    %s180 = ssub.s32 %s19, %s31
    %s181 = ssub.s32 %s20, %s27
    %s182 = sor.u32 %s180, %s181
    %p183 = scmp.eq.s32.totalorder %s182, 0
    %s185 = sadd.s32 %s184, 1
    %s186 = scalar_select %p183, %s184, %s185
    %p189 = pneg %p183
    %p190 = scmp.eq.s32.totalorder %s12, 1
    %p191 = por %p189, %p190
    %p192 = scmp.ne.s32.totalorder %s184, %s187
    %p193 = scmp.eq.s32.totalorder %s12, 0
    %p194 = por %p192, %p193
    %p195 = scmp.ne.s32.totalorder %s184, %s187
    %p196 = scmp.eq.s32.totalorder %s17, 1
    %p197 = por %p195, %p196
    %p198 = scmp.ne.s32.totalorder %s187, %s188
    %p199 = scmp.eq.s32.totalorder %s17, 0
    %p200 = por %p198, %p199
    %p201 = scmp.ne.s32.totalorder %s187, %s188
    %p202 = scmp.eq.s32.totalorder %s18, 1
    %p203 = por %p201, %p202
    %p205 = scmp.ne.s32.totalorder %s188, %s204
    %p206 = scmp.eq.s32.totalorder %s18, 0
    %p207 = por %p205, %p206
    %p208 = scmp.le.s32.totalorder 1, %s12
    %p209 = scmp.lt.s32.totalorder %s12, 3
    %p210 = pnand %p208, %p209
    %p211 = pneg %p210
    // Predicated region
    $region9: #{_lambda_.25} parent=5 // pred_check
      _
    $region10: #{_lambda_.25} parent=5 // pred_check_branch
      %213 = sbr.rel (%p210) target = $region12
    $region11: #{_lambda_.25} parent=5 // pred_region
      %s214 = ssub.s32 %s12, 1
      // Predicated region
      $region13: #{_lambda_.25} parent=11 // pred_check
        %p215 = pneg %p151
      $region14: #{_lambda_.25} parent=11 // pred_check_branch
        %217 = sbr.rel (%p215) target = $region16
      $region15: #{_lambda_.25} parent=11 // pred_region
        _
      $region16: #{_lambda_.25} parent=11 // pred_fallthru
        _
      // Predicated region
      $region17: #{_lambda_.25} parent=11 // pred_check
        %p218 = pneg %p172
      $region18: #{_lambda_.25} parent=11 // pred_check_branch
        %220 = sbr.rel (%p218) target = $region20
      $region19: #{_lambda_.25} parent=11 // pred_region
        _
      $region20: #{_lambda_.25} parent=11 // pred_fallthru
        _
    $region12: #{_lambda_.25} parent=5 // pred_fallthru
      _
    %p221 = scmp.lt.s32.totalorder %s12, 2
    // Predicated region
    $region21: #{_lambda_.25} parent=5 // pred_check
      %p222 = pneg %p221
    $region22: #{_lambda_.25} parent=5 // pred_check_branch
      %224 = sbr.rel (%p222) target = $region24
    $region23: #{_lambda_.25} parent=5 // pred_region
      // Predicated region
      $region25: #{_lambda_.25} parent=23 // pred_check
        %p225 = pneg %p46
      $region26: #{_lambda_.25} parent=23 // pred_check_branch
        %227 = sbr.rel (%p225) target = $region28
      $region27: #{_lambda_.25} parent=23 // pred_region
        %s228 = smul.u32 8, %s20
        %p229 = scmp.lt.s32.totalorder %s19, 1
        %s230 = scalar_select %p229, %s19, 1
        %p231 = scmp.lt.s32.totalorder %s228, 7
        %s232 = scalar_select %p231, %s228, 7
        %s233 = smul.addr %s230, 8
        %s234 = sadd.s32 %s232, %s233
        %s235 = smul.addr %s234, 8
        %s236 = scalar_lea.vmem %s0, %s235
        %s237 = smul.u32 8, %s20
      $region28: #{_lambda_.25} parent=23 // pred_fallthru
        _
      // Predicated region
      $region29: #{_lambda_.25} parent=23 // pred_check
        %p238 = pneg %p72
      $region30: #{_lambda_.25} parent=23 // pred_check_branch
        %240 = sbr.rel (%p238) target = $region32
      $region31: #{_lambda_.25} parent=23 // pred_region
        %p241 = scmp.lt.s32.totalorder %s19, 1
        %s242 = scalar_select %p241, %s19, 1
        %s243 = scalar_lea.vmem %s1, %s242
      $region32: #{_lambda_.25} parent=23 // pred_fallthru
        _
      // Predicated region
      $region33: #{_lambda_.25} parent=23 // pred_check
        %p244 = pneg %p98
      $region34: #{_lambda_.25} parent=23 // pred_check_branch
        %246 = sbr.rel (%p244) target = $region36
      $region35: #{_lambda_.25} parent=23 // pred_region
        %p247 = scmp.lt.s32.totalorder %s19, 1
        %s248 = scalar_select %p247, %s19, 1
        %s249 = scalar_lea.vmem %s2, %s248
      $region36: #{_lambda_.25} parent=23 // pred_fallthru
        _
      // Predicated region
      $region37: #{_lambda_.25} parent=23 // pred_check
        %p250 = pneg %p124
      $region38: #{_lambda_.25} parent=23 // pred_check_branch
        %252 = sbr.rel (%p250) target = $region40
      $region39: #{_lambda_.25} parent=23 // pred_region
        %p253 = scmp.lt.s32.totalorder %s19, 1
        %s254 = scalar_select %p253, %s19, 1
        %s255 = scalar_lea.vmem %s3, %s254
      $region40: #{_lambda_.25} parent=23 // pred_fallthru
        _
    $region24: #{_lambda_.25} parent=5 // pred_fallthru
      _
    %p256 = scmp.le.s32.totalorder 1, %s12
    %p257 = scmp.lt.s32.totalorder %s12, 3
    %p258 = pnand %p256, %p257
    %p259 = pneg %p258
    // Predicated region
    $region41: #{_lambda_.25} parent=5 // pred_check
      _
    $region42: #{_lambda_.25} parent=5 // pred_check_branch
      %261 = sbr.rel (%p258) target = $region44
    $region43: #{_lambda_.25} parent=5 // pred_region
      %s262 = ssub.s32 %s12, 1
      %s263 = smul.u32 8, %s22
      %p264 = scmp.lt.s32.totalorder %s21, 1
      %s265 = scalar_select %p264, %s21, 1
      %p266 = scmp.lt.s32.totalorder %s263, 7
      %s267 = scalar_select %p266, %s263, 7
      %s268 = smul.addr %s265, 8
      %s269 = sadd.s32 %s267, %s268
      %s270 = smul.addr %s269, 8
      %s271 = scalar_lea.vmem %s0, %s270
      %p272 = pneg %p52
      %p273 = pneg %p49
      %p274 = scmp.lt.s32.totalorder %s21, 1
      %s275 = scalar_select %p274, %s21, 1
      %s276 = scalar_lea.vmem %s1, %s275
      %p277 = pneg %p78
      %p278 = pneg %p75
      %p279 = scmp.lt.s32.totalorder %s21, 1
      %s280 = scalar_select %p279, %s21, 1
      %s281 = scalar_lea.vmem %s2, %s280
      %p282 = pneg %p104
      %p283 = pneg %p101
      %p284 = scmp.lt.s32.totalorder %s21, 1
      %s285 = scalar_select %p284, %s21, 1
      %s286 = scalar_lea.vmem %s3, %s285
      %p287 = pneg %p130
      %p288 = pneg %p127
      %p289 = pneg %p151
      %p290 = pneg %p148
      %p291 = pneg %p172
      %p292 = pneg %p169
      %p293 = pneg %p200
      %p294 = pneg %p197
      %s295 = smul.u32 8, %s22
      %p296 = scmp.lt.s32.totalorder %s21, 1
      %s297 = scalar_select %p296, %s21, 1
      %p298 = scmp.lt.s32.totalorder %s295, 7
      %s299 = scalar_select %p298, %s295, 7
      %s300 = smul.addr %s297, 8
      %s301 = sadd.s32 %s299, %s300
      %s302 = smul.addr %s301, 8
      %s303 = scalar_lea.vmem %s6, %s302
      %s304 = smul.u32 8, %s22
      %p305 = scmp.lt.s32.totalorder %s21, 1
      %s306 = scalar_select %p305, %s21, 1
      %p307 = scmp.lt.s32.totalorder %s304, 7
      %s308 = scalar_select %p307, %s304, 7
      %s309 = smul.addr %s306, 8
      %s310 = sadd.s32 %s308, %s309
      %s311 = smul.addr %s310, 8
      %s312 = scalar_lea.vmem %s0, %s311
      %s313 = smul.u32 8, %s22
      %p314 = scmp.lt.s32.totalorder %s21, 1
      %s315 = scalar_select %p314, %s21, 1
      %s316 = scalar_lea.vmem %s1, %s315
      %p317 = scmp.lt.s32.totalorder %s21, 1
      %s318 = scalar_select %p317, %s21, 1
      %s319 = scalar_lea.vmem %s2, %s318
      %p320 = scmp.lt.s32.totalorder %s21, 1
      %s321 = scalar_select %p320, %s21, 1
      %s322 = scalar_lea.vmem %s3, %s321
      %s323 = smul.u32 8, %s22
      %p324 = scmp.lt.s32.totalorder %s21, 1
      %s325 = scalar_select %p324, %s21, 1
      %p326 = scmp.lt.s32.totalorder %s323, 7
      %s327 = scalar_select %p326, %s323, 7
      %s328 = smul.addr %s325, 8
      %s329 = sadd.s32 %s327, %s328
      %s330 = smul.addr %s329, 8
      %s331 = scalar_lea.vmem %s6, %s330
      %s332 = smul.u32 8, %s22
      %v334 = vld [vmem:[%s312] sm:$0xff]
      %v335 = vld [vmem:[%s312 + $0x8] sm:$0xff]
      %v336 = vld [vmem:[%s312 + $0x10] sm:$0xff]
      %v337 = vld [vmem:[%s312 + $0x18] sm:$0xff]
      %v338 = vld [vmem:[%s312 + $0x20] sm:$0xff]
      %v339 = vld [vmem:[%s312 + $0x28] sm:$0xff]
      %v340 = vld [vmem:[%s312 + $0x30] sm:$0xff]
      %v341 = vld [vmem:[%s312 + $0x38] sm:$0xff]
      %v342 = vld [vmem:[%s316] sm:$0x1]
      %v343 = vld [vmem:[%s319] sm:$0x1]
      %vm344 = vcmask 523264
      %v345 = vsel %vm344, %v334, 0.0
      %346 = vadd.xlane.f32.xlu0 %v345
      %v347 = vpop.xlane.xlu0 %346
      %v348 = vsel %vm344, %v335, 0.0
      %349 = vadd.xlane.f32.xlu0 %v348
      %v350 = vpop.xlane.xlu0 %349
      %v351 = vsel %vm344, %v336, 0.0
      %352 = vadd.xlane.f32.xlu0 %v351
      %v353 = vpop.xlane.xlu0 %352
      %v354 = vsel %vm344, %v337, 0.0
      %355 = vadd.xlane.f32.xlu0 %v354
      %v356 = vpop.xlane.xlu0 %355
      %v357 = vsel %vm344, %v338, 0.0
      %358 = vadd.xlane.f32.xlu0 %v357
      %v359 = vpop.xlane.xlu0 %358
      %v360 = vsel %vm344, %v339, 0.0
      %361 = vadd.xlane.f32.xlu0 %v360
      %v362 = vpop.xlane.xlu0 %361
      %v363 = vsel %vm344, %v340, 0.0
      %364 = vadd.xlane.f32.xlu0 %v363
      %v365 = vpop.xlane.xlu0 %364
      %v366 = vsel %vm344, %v341, 0.0
      %367 = vadd.xlane.f32.xlu0 %v366
      %v368 = vpop.xlane.xlu0 %367
      %v369 = vrcp.pop 64.0
      %v370 = vmul.f32 %v347, %v369
      %v371 = vmul.f32 %v350, %v369
      %v372 = vmul.f32 %v353, %v369
      %v373 = vmul.f32 %v356, %v369
      %v374 = vmul.f32 %v359, %v369
      %v375 = vmul.f32 %v362, %v369
      %v376 = vmul.f32 %v365, %v369
      %v377 = vmul.f32 %v368, %v369
      %v378 = vsub.f32 %v334, %v370
      %v379 = vsub.f32 %v335, %v371
      %v380 = vsub.f32 %v336, %v372
      %v381 = vsub.f32 %v337, %v373
      %v382 = vsub.f32 %v338, %v374
      %v383 = vsub.f32 %v339, %v375
      %v384 = vsub.f32 %v340, %v376
      %v385 = vsub.f32 %v341, %v377
      %v386 = vmul.f32 %v378, %v378
      %v387 = vmul.f32 %v379, %v379
      %v388 = vmul.f32 %v380, %v380
      %v389 = vmul.f32 %v381, %v381
      %v390 = vmul.f32 %v382, %v382
      %v391 = vmul.f32 %v383, %v383
      %v392 = vmul.f32 %v384, %v384
      %v393 = vmul.f32 %v385, %v385
      %v394 = vsel %vm344, %v386, 0.0
      %395 = vadd.xlane.f32.xlu0 %v394
      %v396 = vpop.xlane.xlu0 %395
      %v397 = vsel %vm344, %v387, 0.0
      %398 = vadd.xlane.f32.xlu0 %v397
      %v399 = vpop.xlane.xlu0 %398
      %v400 = vsel %vm344, %v388, 0.0
      %401 = vadd.xlane.f32.xlu0 %v400
      %v402 = vpop.xlane.xlu0 %401
      %v403 = vsel %vm344, %v389, 0.0
      %404 = vadd.xlane.f32.xlu0 %v403
      %v405 = vpop.xlane.xlu0 %404
      %v406 = vsel %vm344, %v390, 0.0
      %407 = vadd.xlane.f32.xlu0 %v406
      %v408 = vpop.xlane.xlu0 %407
      %v409 = vsel %vm344, %v391, 0.0
      %410 = vadd.xlane.f32.xlu0 %v409
      %v411 = vpop.xlane.xlu0 %410
      %v412 = vsel %vm344, %v392, 0.0
      %413 = vadd.xlane.f32.xlu0 %v412
      %v414 = vpop.xlane.xlu0 %413
      %v415 = vsel %vm344, %v393, 0.0
      %416 = vadd.xlane.f32.xlu0 %v415
      %v417 = vpop.xlane.xlu0 %416
      %v418 = vmul.f32 %v396, %v369
      %v419 = vmul.f32 %v399, %v369
      %v420 = vmul.f32 %v402, %v369
      %v421 = vmul.f32 %v405, %v369
      %v422 = vmul.f32 %v408, %v369
      %v423 = vmul.f32 %v411, %v369
      %v424 = vmul.f32 %v414, %v369
      %v425 = vmul.f32 %v417, %v369
      %v426 = vadd.f32 %v418, 1e-06
      %v427 = vadd.f32 %v419, 1e-06
      %v428 = vadd.f32 %v420, 1e-06
      %v429 = vadd.f32 %v421, 1e-06
      %v430 = vadd.f32 %v422, 1e-06
      %v431 = vadd.f32 %v423, 1e-06
      %v432 = vadd.f32 %v424, 1e-06
      %v433 = vadd.f32 %v425, 1e-06
      %v434 = vrsqrt.pop %v426
      %v435 = vrsqrt.pop %v427
      %v436 = vrsqrt.pop %v428
      %v437 = vrsqrt.pop %v429
      %v438 = vrsqrt.pop %v430
      %v439 = vrsqrt.pop %v431
      %v440 = vrsqrt.pop %v432
      %v441 = vrsqrt.pop %v433
      %v442 = vmul.f32 %v378, %v434
      %v443 = vmul.f32 %v379, %v435
      %v444 = vmul.f32 %v380, %v436
      %v445 = vmul.f32 %v381, %v437
      %v446 = vmul.f32 %v382, %v438
      %v447 = vmul.f32 %v383, %v439
      %v448 = vmul.f32 %v384, %v440
      %v449 = vmul.f32 %v385, %v441
      %v450 = vadd.f32 %v343, 1.0
      %v452 = vlaneseq
      %v453 = vshrl.u32 %v452, 7
      %v454 = vsub.s32 0, %v453
      %v455 = vrot.slane %v450, %v454
      %v457 = vmul.f32 %v442, %v455
      %v458 = vmul.f32 %v443, %v455
      %v459 = vmul.f32 %v444, %v455
      %v460 = vmul.f32 %v445, %v455
      %v461 = vmul.f32 %v446, %v455
      %v462 = vmul.f32 %v447, %v455
      %v463 = vmul.f32 %v448, %v455
      %v464 = vmul.f32 %v449, %v455
      %v466 = vlaneseq
      %v467 = vshrl.u32 %v466, 7
      %v468 = vsub.s32 0, %v467
      %v469 = vrot.slane %v342, %v468
      %v471 = vadd.f32 %v457, %v469
      %v472 = vadd.f32 %v458, %v469
      %v473 = vadd.f32 %v459, %v469
      %v474 = vadd.f32 %v460, %v469
      %v475 = vadd.f32 %v461, %v469
      %v476 = vadd.f32 %v462, %v469
      %v477 = vadd.f32 %v463, %v469
      %v478 = vadd.f32 %v464, %v469
      %v479 = vpack.c.bf16 %v472, %v471
      %v480 = vpack.c.bf16 %v474, %v473
      %v481 = vpack.c.bf16 %v476, %v475
      %v482 = vpack.c.bf16 %v478, %v477
      %v483 = vld [vmem:[%s4] sm:$0xff]
      %v484 = vld [vmem:[%s4 + $0x8] sm:$0xff]
      %v485 = vld [vmem:[%s4 + $0x10] sm:$0xff]
      %v486 = vld [vmem:[%s4 + $0x18] sm:$0xff]
      %v487 = vld [vmem:[%s4 + $0x20] sm:$0xff]
      %v488 = vld [vmem:[%s4 + $0x28] sm:$0xff]
      %v489 = vld [vmem:[%s4 + $0x30] sm:$0xff]
      %v490 = vld [vmem:[%s4 + $0x38] sm:$0xff]
      %v491 = vld [vmem:[%s4 + $0x40] sm:$0xff]
      %v492 = vld [vmem:[%s4 + $0x48] sm:$0xff]
      %v493 = vld [vmem:[%s4 + $0x50] sm:$0xff]
      %v494 = vld [vmem:[%s4 + $0x58] sm:$0xff]
      %v495 = vld [vmem:[%s4 + $0x60] sm:$0xff]
      %v496 = vld [vmem:[%s4 + $0x68] sm:$0xff]
      %v497 = vld [vmem:[%s4 + $0x70] sm:$0xff]
      %v498 = vld [vmem:[%s4 + $0x78] sm:$0xff]
      %v499 = vpack.c.bf16 %v485, %v483
      %v500 = vpack.c.bf16 %v486, %v484
      %v501 = vpack.c.bf16 %v489, %v487
      %v502 = vpack.c.bf16 %v490, %v488
      %v503 = vpack.c.bf16 %v493, %v491
      %v504 = vpack.c.bf16 %v494, %v492
      %v505 = vpack.c.bf16 %v497, %v495
      %v506 = vpack.c.bf16 %v498, %v496
      %v508 = vsel %vm344, %v479, 0
      %v511 = vsel %vm344, %v480, 0
      %v514 = vsel %vm344, %v481, 0
      %v517 = vsel %vm344, %v482, 0
      %519 = vmatprep.subr.bf16.mxu0 0
      %520 = vmatpush1.bf16.msra.mxu0 0
      %521 = vmatprep.subr.bf16.mxu0 0
      %522 = vmatpush1.bf16.msra.mxu0 0
      %523 = vmatprep.subr.bf16.mxu0 0
      %524 = vmatpush1.bf16.msra.mxu0 0
      %525 = vmatprep.subr.bf16.mxu0 0
      %526 = vmatpush1.bf16.msra.mxu0 0
      %527 = vmatprep.subr.bf16.mxu0 %v506
      %528 = vmatpush1.bf16.msra.mxu0 %v505
      %529 = vmatprep.subr.bf16.mxu0 %v504
      %530 = vmatpush1.bf16.msra.mxu0 %v503
      %531 = vmatprep.subr.bf16.mxu0 %v502
      %532 = vmatpush1.bf16.msra.mxu0 %v501
      %533 = vmatprep.subr.bf16.mxu0 %v500
      %534 = vmatpush1.bf16.msra.mxu0 %v499
      %535 = vmatprep.subr.bf16.mxu0 0
      %536 = vmatpush2.bf16.msra.mxu0 0
      %537 = vmatprep.subr.bf16.mxu0 0
      %538 = vmatpush2.bf16.msra.mxu0 0
      %539 = vmatprep.subr.bf16.mxu0 0
      %540 = vmatpush2.bf16.msra.mxu0 0
      %541 = vmatprep.subr.bf16.mxu0 0
      %542 = vmatpush2.bf16.msra.mxu0 0
      %543 = vmatprep.subr.bf16.mxu0 0
      %544 = vmatpush2.bf16.msra.mxu0 0
      %545 = vmatprep.subr.bf16.mxu0 0
      %546 = vmatpush2.bf16.msra.mxu0 0
      %547 = vmatprep.subr.bf16.mxu0 0
      %548 = vmatpush2.bf16.msra.mxu0 0
      %549 = vmatprep.subr.bf16.mxu0 0
      %550 = vmatpush2.bf16.msra.mxu0 0
      %551 = vmatprep.mubr.bf16.mxu0 0
      %552 = vmatmul.mubr.bf16.gmra.mxu0 %v508
      %v553 = vpop.f32.mrf.mxu0
      %v554 = vadd.f32 0.0, %v553
      %v555 = vpop.f32.mrf.mxu0
      %v556 = vadd.f32 0.0, %v555
      %v557 = vpop.f32.mrf.mxu0
      %v558 = vadd.f32 0.0, %v557
      %v559 = vpop.f32.mrf.mxu0
      %v560 = vadd.f32 0.0, %v559
      %561 = vmatprep.mubr.bf16.mxu0 0
      %562 = vmatmul.mubr.bf16.gmra.mxu0 %v511
      %v563 = vpop.f32.mrf.mxu0
      %v564 = vadd.f32 0.0, %v563
      %v565 = vpop.f32.mrf.mxu0
      %v566 = vadd.f32 0.0, %v565
      %v567 = vpop.f32.mrf.mxu0
      %v568 = vadd.f32 0.0, %v567
      %v569 = vpop.f32.mrf.mxu0
      %v570 = vadd.f32 0.0, %v569
      %571 = vmatprep.mubr.bf16.mxu0 0
      %572 = vmatmul.mubr.bf16.gmra.mxu0 %v514
      %v573 = vpop.f32.mrf.mxu0
      %v574 = vadd.f32 0.0, %v573
      %v575 = vpop.f32.mrf.mxu0
      %v576 = vadd.f32 0.0, %v575
      %v577 = vpop.f32.mrf.mxu0
      %v578 = vadd.f32 0.0, %v577
      %v579 = vpop.f32.mrf.mxu0
      %v580 = vadd.f32 0.0, %v579
      %581 = vmatprep.mubr.bf16.mxu0 0
      %582 = vmatmul.mubr.bf16.gmra.mxu0 %v517
      %v583 = vpop.f32.mrf.mxu0
      %v584 = vadd.f32 0.0, %v583
      %v585 = vpop.f32.mrf.mxu0
      %v586 = vadd.f32 0.0, %v585
      %v587 = vpop.f32.mrf.mxu0
      %v588 = vadd.f32 0.0, %v587
      %v589 = vpop.f32.mrf.mxu0
      %v590 = vadd.f32 0.0, %v589
      %591 = vdwg.mxu0
      %v592 = vmul.f32 %v554, %v554
      %v593 = vmul.f32 %v556, %v556
      %v594 = vmul.f32 %v558, %v558
      %v595 = vmul.f32 %v560, %v560
      %v596 = vmul.f32 %v564, %v564
      %v597 = vmul.f32 %v566, %v566
      %v598 = vmul.f32 %v568, %v568
      %v599 = vmul.f32 %v570, %v570
      %v600 = vmul.f32 %v574, %v574
      %v601 = vmul.f32 %v576, %v576
      %v602 = vmul.f32 %v578, %v578
      %v603 = vmul.f32 %v580, %v580
      %v604 = vmul.f32 %v584, %v584
      %v605 = vmul.f32 %v586, %v586
      %v606 = vmul.f32 %v588, %v588
      %v607 = vmul.f32 %v590, %v590
      %v608 = vmul.f32 %v554, %v592
      %v609 = vmul.f32 %v556, %v593
      %v610 = vmul.f32 %v558, %v594
      %v611 = vmul.f32 %v560, %v595
      %v612 = vmul.f32 %v564, %v596
      %v613 = vmul.f32 %v566, %v597
      %v614 = vmul.f32 %v568, %v598
      %v615 = vmul.f32 %v570, %v599
      %v616 = vmul.f32 %v574, %v600
      %v617 = vmul.f32 %v576, %v601
      %v618 = vmul.f32 %v578, %v602
      %v619 = vmul.f32 %v580, %v603
      %v620 = vmul.f32 %v584, %v604
      %v621 = vmul.f32 %v586, %v605
      %v622 = vmul.f32 %v588, %v606
      %v623 = vmul.f32 %v590, %v607
      %v624 = vmul.f32 %v608, 0.044715
      %v625 = vmul.f32 %v609, 0.044715
      %v626 = vmul.f32 %v610, 0.044715
      %v627 = vmul.f32 %v611, 0.044715
      %v628 = vmul.f32 %v612, 0.044715
      %v629 = vmul.f32 %v613, 0.044715
      %v630 = vmul.f32 %v614, 0.044715
      %v631 = vmul.f32 %v615, 0.044715
      %v632 = vmul.f32 %v616, 0.044715
      %v633 = vmul.f32 %v617, 0.044715
      %v634 = vmul.f32 %v618, 0.044715
      %v635 = vmul.f32 %v619, 0.044715
      %v636 = vmul.f32 %v620, 0.044715
      %v637 = vmul.f32 %v621, 0.044715
      %v638 = vmul.f32 %v622, 0.044715
      %v639 = vmul.f32 %v623, 0.044715
      %v640 = vadd.f32 %v554, %v624
      %v641 = vadd.f32 %v556, %v625
      %v642 = vadd.f32 %v558, %v626
      %v643 = vadd.f32 %v560, %v627
      %v644 = vadd.f32 %v564, %v628
      %v645 = vadd.f32 %v566, %v629
      %v646 = vadd.f32 %v568, %v630
      %v647 = vadd.f32 %v570, %v631
      %v648 = vadd.f32 %v574, %v632
      %v649 = vadd.f32 %v576, %v633
      %v650 = vadd.f32 %v578, %v634
      %v651 = vadd.f32 %v580, %v635
      %v652 = vadd.f32 %v584, %v636
      %v653 = vadd.f32 %v586, %v637
      %v654 = vadd.f32 %v588, %v638
      %v655 = vadd.f32 %v590, %v639
      %v656 = vmul.f32 %v640, 0.7978846
      %v657 = vmul.f32 %v641, 0.7978846
      %v658 = vmul.f32 %v642, 0.7978846
      %v659 = vmul.f32 %v643, 0.7978846
      %v660 = vmul.f32 %v644, 0.7978846
      %v661 = vmul.f32 %v645, 0.7978846
      %v662 = vmul.f32 %v646, 0.7978846
      %v663 = vmul.f32 %v647, 0.7978846
      %v664 = vmul.f32 %v648, 0.7978846
      %v665 = vmul.f32 %v649, 0.7978846
      %v666 = vmul.f32 %v650, 0.7978846
      %v667 = vmul.f32 %v651, 0.7978846
      %v668 = vmul.f32 %v652, 0.7978846
      %v669 = vmul.f32 %v653, 0.7978846
      %v670 = vmul.f32 %v654, 0.7978846
      %v671 = vmul.f32 %v655, 0.7978846
      %v672 = vtanh.pop %v656
      %v673 = vtanh.pop %v657
      %v674 = vtanh.pop %v658
      %v675 = vtanh.pop %v659
      %v676 = vtanh.pop %v660
      %v677 = vtanh.pop %v661
      %v678 = vtanh.pop %v662
      %v679 = vtanh.pop %v663
      %v680 = vtanh.pop %v664
      %v681 = vtanh.pop %v665
      %v682 = vtanh.pop %v666
      %v683 = vtanh.pop %v667
      %v684 = vtanh.pop %v668
      %v685 = vtanh.pop %v669
      %v686 = vtanh.pop %v670
      %v687 = vtanh.pop %v671
      %v688 = vadd.f32 %v672, 1.0
      %v689 = vadd.f32 %v673, 1.0
      %v690 = vadd.f32 %v674, 1.0
      %v691 = vadd.f32 %v675, 1.0
      %v692 = vadd.f32 %v676, 1.0
      %v693 = vadd.f32 %v677, 1.0
      %v694 = vadd.f32 %v678, 1.0
      %v695 = vadd.f32 %v679, 1.0
      %v696 = vadd.f32 %v680, 1.0
      %v697 = vadd.f32 %v681, 1.0
      %v698 = vadd.f32 %v682, 1.0
      %v699 = vadd.f32 %v683, 1.0
      %v700 = vadd.f32 %v684, 1.0
      %v701 = vadd.f32 %v685, 1.0
      %v702 = vadd.f32 %v686, 1.0
      %v703 = vadd.f32 %v687, 1.0
      %v704 = vmul.f32 %v688, 0.5
      %v705 = vmul.f32 %v689, 0.5
      %v706 = vmul.f32 %v690, 0.5
      %v707 = vmul.f32 %v691, 0.5
      %v708 = vmul.f32 %v692, 0.5
      %v709 = vmul.f32 %v693, 0.5
      %v710 = vmul.f32 %v694, 0.5
      %v711 = vmul.f32 %v695, 0.5
      %v712 = vmul.f32 %v696, 0.5
      %v713 = vmul.f32 %v697, 0.5
      %v714 = vmul.f32 %v698, 0.5
      %v715 = vmul.f32 %v699, 0.5
      %v716 = vmul.f32 %v700, 0.5
      %v717 = vmul.f32 %v701, 0.5
      %v718 = vmul.f32 %v702, 0.5
      %v719 = vmul.f32 %v703, 0.5
      %v720 = vmul.f32 %v554, %v704
      %v721 = vmul.f32 %v556, %v705
      %v722 = vmul.f32 %v558, %v706
      %v723 = vmul.f32 %v560, %v707
      %v724 = vmul.f32 %v564, %v708
      %v725 = vmul.f32 %v566, %v709
      %v726 = vmul.f32 %v568, %v710
      %v727 = vmul.f32 %v570, %v711
      %v728 = vmul.f32 %v574, %v712
      %v729 = vmul.f32 %v576, %v713
      %v730 = vmul.f32 %v578, %v714
      %v731 = vmul.f32 %v580, %v715
      %v732 = vmul.f32 %v584, %v716
      %v733 = vmul.f32 %v586, %v717
      %v734 = vmul.f32 %v588, %v718
      %v735 = vmul.f32 %v590, %v719
      %v736 = vpack.c.bf16 %v722, %v720
      %v737 = vpack.c.bf16 %v723, %v721
      %v738 = vpack.c.bf16 %v726, %v724
      %v739 = vpack.c.bf16 %v727, %v725
      %v740 = vpack.c.bf16 %v730, %v728
      %v741 = vpack.c.bf16 %v731, %v729
      %v742 = vpack.c.bf16 %v734, %v732
      %v743 = vpack.c.bf16 %v735, %v733
      %v744 = vld [vmem:[%s5] sm:$0xff]
      %v745 = vld [vmem:[%s5 + $0x8] sm:$0xff]
      %v746 = vld [vmem:[%s5 + $0x10] sm:$0xff]
      %v747 = vld [vmem:[%s5 + $0x18] sm:$0xff]
      %v748 = vld [vmem:[%s5 + $0x20] sm:$0xff]
      %v749 = vld [vmem:[%s5 + $0x28] sm:$0xff]
      %v750 = vld [vmem:[%s5 + $0x30] sm:$0xff]
      %v751 = vld [vmem:[%s5 + $0x38] sm:$0xff]
      %v752 = vld [vmem:[%s5 + $0x40] sm:$0xff]
      %v753 = vld [vmem:[%s5 + $0x48] sm:$0xff]
      %v754 = vld [vmem:[%s5 + $0x50] sm:$0xff]
      %v755 = vld [vmem:[%s5 + $0x58] sm:$0xff]
      %v756 = vld [vmem:[%s5 + $0x60] sm:$0xff]
      %v757 = vld [vmem:[%s5 + $0x68] sm:$0xff]
      %v758 = vld [vmem:[%s5 + $0x70] sm:$0xff]
      %v759 = vld [vmem:[%s5 + $0x78] sm:$0xff]
      %v760 = vld [vmem:[%s5 + $0x80] sm:$0xff]
      %v761 = vld [vmem:[%s5 + $0x88] sm:$0xff]
      %v762 = vld [vmem:[%s5 + $0x90] sm:$0xff]
      %v763 = vld [vmem:[%s5 + $0x98] sm:$0xff]
      %v764 = vld [vmem:[%s5 + $0xa0] sm:$0xff]
      %v765 = vld [vmem:[%s5 + $0xa8] sm:$0xff]
      %v766 = vld [vmem:[%s5 + $0xb0] sm:$0xff]
      %v767 = vld [vmem:[%s5 + $0xb8] sm:$0xff]
      %v768 = vld [vmem:[%s5 + $0xc0] sm:$0xff]
      %v769 = vld [vmem:[%s5 + $0xc8] sm:$0xff]
      %v770 = vld [vmem:[%s5 + $0xd0] sm:$0xff]
      %v771 = vld [vmem:[%s5 + $0xd8] sm:$0xff]
      %v772 = vld [vmem:[%s5 + $0xe0] sm:$0xff]
      %v773 = vld [vmem:[%s5 + $0xe8] sm:$0xff]
      %v774 = vld [vmem:[%s5 + $0xf0] sm:$0xff]
      %v775 = vld [vmem:[%s5 + $0xf8] sm:$0xff]
      %v776 = vpack.c.bf16 %v745, %v744
      %v777 = vpack.c.bf16 %v747, %v746
      %v778 = vpack.c.bf16 %v749, %v748
      %v779 = vpack.c.bf16 %v751, %v750
      %v780 = vpack.c.bf16 %v753, %v752
      %v781 = vpack.c.bf16 %v755, %v754
      %v782 = vpack.c.bf16 %v757, %v756
      %v783 = vpack.c.bf16 %v759, %v758
      %v784 = vpack.c.bf16 %v761, %v760
      %v785 = vpack.c.bf16 %v763, %v762
      %v786 = vpack.c.bf16 %v765, %v764
      %v787 = vpack.c.bf16 %v767, %v766
      %v788 = vpack.c.bf16 %v769, %v768
      %v789 = vpack.c.bf16 %v771, %v770
      %v790 = vpack.c.bf16 %v773, %v772
      %v791 = vpack.c.bf16 %v775, %v774
      %792 = vmatprep.subr.bf16.mxu0 0
      %793 = vmatpush1.bf16.msra.mxu0 %v783
      %794 = vmatprep.subr.bf16.mxu0 0
      %795 = vmatpush1.bf16.msra.mxu0 %v782
      %796 = vmatprep.subr.bf16.mxu0 0
      %797 = vmatpush1.bf16.msra.mxu0 %v781
      %798 = vmatprep.subr.bf16.mxu0 0
      %799 = vmatpush1.bf16.msra.mxu0 %v780
      %800 = vmatprep.subr.bf16.mxu0 0
      %801 = vmatpush1.bf16.msra.mxu0 %v779
      %802 = vmatprep.subr.bf16.mxu0 0
      %803 = vmatpush1.bf16.msra.mxu0 %v778
      %804 = vmatprep.subr.bf16.mxu0 0
      %805 = vmatpush1.bf16.msra.mxu0 %v777
      %806 = vmatprep.subr.bf16.mxu0 0
      %807 = vmatpush1.bf16.msra.mxu0 %v776
      %808 = vmatprep.subr.bf16.mxu0 0
      %809 = vmatpush2.bf16.msra.mxu0 %v791
      %810 = vmatprep.subr.bf16.mxu0 0
      %811 = vmatpush2.bf16.msra.mxu0 %v790
      %812 = vmatprep.subr.bf16.mxu0 0
      %813 = vmatpush2.bf16.msra.mxu0 %v789
      %814 = vmatprep.subr.bf16.mxu0 0
      %815 = vmatpush2.bf16.msra.mxu0 %v788
      %816 = vmatprep.subr.bf16.mxu0 0
      %817 = vmatpush2.bf16.msra.mxu0 %v787
      %818 = vmatprep.subr.bf16.mxu0 0
      %819 = vmatpush2.bf16.msra.mxu0 %v786
      %820 = vmatprep.subr.bf16.mxu0 0
      %821 = vmatpush2.bf16.msra.mxu0 %v785
      %822 = vmatprep.subr.bf16.mxu0 0
      %823 = vmatpush2.bf16.msra.mxu0 %v784
      %824 = vmatprep.mubr.bf16.mxu0 %v737
      %825 = vmatmul.mubr.bf16.gmra.mxu0 %v736
      %v826 = vpop.f32.mrf.mxu0
      %v827 = vadd.f32 0.0, %v826
      %v828 = vpop.f32.mrf.mxu0
      %v829 = vpop.f32.mrf.mxu0
      %v830 = vadd.f32 0.0, %v829
      %v831 = vpop.f32.mrf.mxu0
      %832 = vmatprep.mubr.bf16.mxu0 %v739
      %833 = vmatmul.mubr.bf16.gmra.mxu0 %v738
      %v834 = vpop.f32.mrf.mxu0
      %v835 = vadd.f32 0.0, %v834
      %v836 = vpop.f32.mrf.mxu0
      %v837 = vpop.f32.mrf.mxu0
      %v838 = vadd.f32 0.0, %v837
      %v839 = vpop.f32.mrf.mxu0
      %840 = vmatprep.mubr.bf16.mxu0 %v741
      %841 = vmatmul.mubr.bf16.gmra.mxu0 %v740
      %v842 = vpop.f32.mrf.mxu0
      %v843 = vadd.f32 0.0, %v842
      %v844 = vpop.f32.mrf.mxu0
      %v845 = vpop.f32.mrf.mxu0
      %v846 = vadd.f32 0.0, %v845
      %v847 = vpop.f32.mrf.mxu0
      %848 = vmatprep.mubr.bf16.mxu0 %v743
      %849 = vmatmul.mubr.bf16.gmra.mxu0 %v742
      %v850 = vpop.f32.mrf.mxu0
      %v851 = vadd.f32 0.0, %v850
      %v852 = vpop.f32.mrf.mxu0
      %v853 = vpop.f32.mrf.mxu0
      %v854 = vadd.f32 0.0, %v853
      %v855 = vpop.f32.mrf.mxu0
      %856 = vdwg.mxu0
      %v857 = vld [vmem:[%s322] sm:$0x1]
      %v859 = vlaneseq
      %v860 = vshrl.u32 %v859, 7
      %v861 = vsub.s32 0, %v860
      %v862 = vrot.slane %v857, %v861
      %v864 = vmul.f32 %v862, %v827
      %v865 = vmul.f32 %v862, %v830
      %v866 = vmul.f32 %v862, %v835
      %v867 = vmul.f32 %v862, %v838
      %v868 = vmul.f32 %v862, %v843
      %v869 = vmul.f32 %v862, %v846
      %v870 = vmul.f32 %v862, %v851
      %v871 = vmul.f32 %v862, %v854
      %v872 = vadd.f32 %v334, %v864
      %v873 = vadd.f32 %v335, %v865
      %v874 = vadd.f32 %v336, %v866
      %v875 = vadd.f32 %v337, %v867
      %v876 = vadd.f32 %v338, %v868
      %v877 = vadd.f32 %v339, %v869
      %v878 = vadd.f32 %v340, %v870
      %v879 = vadd.f32 %v341, %v871
      %880 = vst.msk [vmem:[%s331] sm:$0xff] %vm344, %v872
      %881 = vst.msk [vmem:[%s331 + $0x8] sm:$0xff] %vm344, %v873
      %882 = vst.msk [vmem:[%s331 + $0x10] sm:$0xff] %vm344, %v874
      %883 = vst.msk [vmem:[%s331 + $0x18] sm:$0xff] %vm344, %v875
      %884 = vst.msk [vmem:[%s331 + $0x20] sm:$0xff] %vm344, %v876
      %885 = vst.msk [vmem:[%s331 + $0x28] sm:$0xff] %vm344, %v877
      %886 = vst.msk [vmem:[%s331 + $0x30] sm:$0xff] %vm344, %v878
      %887 = vst.msk [vmem:[%s331 + $0x38] sm:$0xff] %vm344, %v879
      %s888 = smul.u32 8, %s22
      %p889 = scmp.lt.s32.totalorder %s21, 1
      %s890 = scalar_select %p889, %s21, 1
      %p891 = scmp.lt.s32.totalorder %s888, 7
      %s892 = scalar_select %p891, %s888, 7
      %s893 = smul.addr %s890, 8
      %s894 = sadd.s32 %s892, %s893
      %s895 = smul.addr %s894, 8
      %s896 = scalar_lea.vmem %s6, %s895
      // Predicated region
      $region45: #{_lambda_.25} parent=43 // pred_check
        %p897 = pneg %p197
      $region46: #{_lambda_.25} parent=43 // pred_check_branch
        %899 = sbr.rel (%p897) target = $region48
      $region47: #{_lambda_.25} parent=43 // pred_region
        %s900 = smul.u32 8, %s22
      $region48: #{_lambda_.25} parent=43 // pred_fallthru
        _
    $region44: #{_lambda_.25} parent=5 // pred_fallthru
      _
    %p901 = scmp.le.s32.totalorder 2, %s12
    // Predicated region
    $region49: #{_lambda_.25} parent=5 // pred_check
      %p902 = pneg %p901
    $region50: #{_lambda_.25} parent=5 // pred_check_branch
      %904 = sbr.rel (%p902) target = $region52
    $region51: #{_lambda_.25} parent=5 // pred_region
      %s905 = ssub.s32 %s12, 2
      // Predicated region
      $region53: #{_lambda_.25} parent=51 // pred_check
        %p906 = pneg %p203
      $region54: #{_lambda_.25} parent=51 // pred_check_branch
        %908 = sbr.rel (%p906) target = $region56
      $region55: #{_lambda_.25} parent=51 // pred_region
        %s909 = smul.u32 8, %s24
        %p910 = scmp.lt.s32.totalorder %s23, 1
        %s911 = scalar_select %p910, %s23, 1
        %p912 = scmp.lt.s32.totalorder %s909, 7
        %s913 = scalar_select %p912, %s909, 7
        %s914 = smul.addr %s911, 8
        %s915 = sadd.s32 %s913, %s914
        %s916 = smul.addr %s915, 8
        %s917 = scalar_lea.vmem %s6, %s916
      $region56: #{_lambda_.25} parent=51 // pred_fallthru
        _
    $region52: #{_lambda_.25} parent=5 // pred_fallthru
      _
  $region6: #{_lambda_.25} parent=0 // loop_footer
    %s16 = sadd.s32 1, %s12
  $region7: #{_lambda_.25} parent=0 // loop_footer_branch
    %11 = sbr.rel target = $region3
  $region8: #{_lambda_.25} parent=0 // loop_exit
    _

// kernel: _lambda_.24
$region0: #{_lambda_.24}
  #allocation0 [shape = 'u32[]', space=smem, size = 0x4, offset = 0x4, fixed_abs, tag = 'smem constant byte address 0x4 - core index']
  #allocation1 [shape = 'u32[144,128]{1,0:T(1,128)}', space=vmem, size = 0x12000, scoped, tag = 'internal scratch']
  %s0 = inlined_call_operand.vmem [shape: f32[2,64,64], index: 0, kind: input, shape index: {}]
  %s1 = inlined_call_operand.vmem [shape: f32[2,64,64], index: 1, kind: input, shape index: {}]
  %s2 = inlined_call_operand.vmem [shape: f32[2,72,64], index: 2, kind: input, shape index: {}]
  %s3 = inlined_call_operand.vmem [shape: f32[2,72,64], index: 3, kind: input, shape index: {}]
  %s4 = inlined_call_operand.vmem [shape: f32[2,1,64], index: 4, kind: input, shape index: {}]
  %s5 = inlined_call_operand.vmem [shape: f32[64,64], index: 5, kind: input, shape index: {}]
  %s6 = inlined_call_operand.vmem [shape: f32[2,64,64], index: 6, kind: output, shape index: {}]
  %s7 = sld [smem:[#allocation0]]
  $region57: #{_lambda_.24} parent=0
    _
  %s9 = ssub.s32 1, %s7
  %s10 = scalar_select 0, %s9, %s7
  loop: start=0, step=1, limit=4
  $region2: #{_lambda_.24} parent=0 // loop_pre_header
    _
  $region3: #{_lambda_.24} parent=0 // loop_header
    %s12 = sphi 0, %s16
    %p13 = scmp.ge.s32.totalorder %s12, 4
    %s22 = sphi 0, %s24
    %s25 = sphi 0, %s22
    %s26 = sphi 0, %s25
    %s42 = sphi 0, %s26
    %s48 = sphi 0, %s50
    %s51 = sphi 0, %s48
    %s52 = sphi 0, %s51
    %s68 = sphi 0, %s52
    %s74 = sphi 0, %s76
    %s77 = sphi 0, %s74
    %s78 = sphi 0, %s77
    %s94 = sphi 0, %s78
    %s100 = sphi 0, %s102
    %s103 = sphi 0, %s100
    %s104 = sphi 0, %s103
    %s120 = sphi 0, %s104
    %s126 = sphi 0, %s128
    %s129 = sphi 0, %s126
    %s130 = sphi 0, %s129
    %s146 = sphi 0, %s130
    %s150 = sphi 0, %s150
    %s152 = sphi 0, %s150
    %s153 = sphi 0, %s152
    %s167 = sphi 0, %s153
    %s173 = sphi 0, %s175
    %s176 = sphi 0, %s173
    %s177 = sphi 0, %s176
    %s193 = sphi 0, %s177
  $region4: #{_lambda_.24} parent=0 // loop_header_branch
    %15 = sbr.rel (%p13) target = $region8
  $region5: #{_lambda_.24} parent=0 // loop_body
    %s17 = ssub.s32 %s12, 1
    %s18 = ssub.s32 %s12, 2
    %s19 = sadd.s32 %s12, 1
    %s20 = ssub.s32 %s12, %s19
    %p21 = scmp.eq.s32.totalorder %s20, 0
    %s23 = sadd.s32 %s22, 1
    %s24 = scalar_select %p21, %s22, %s23
    %p27 = pneg %p21
    %p28 = scmp.eq.s32.totalorder %s12, 1
    %p29 = por %p27, %p28
    %p30 = scmp.ne.s32.totalorder %s22, %s25
    %p31 = scmp.eq.s32.totalorder %s12, 0
    %p32 = por %p30, %p31
    %p33 = scmp.ne.s32.totalorder %s22, %s25
    %p34 = scmp.eq.s32.totalorder %s17, 1
    %p35 = por %p33, %p34
    %p36 = scmp.ne.s32.totalorder %s25, %s26
    %p37 = scmp.eq.s32.totalorder %s17, 0
    %p38 = por %p36, %p37
    %p39 = scmp.ne.s32.totalorder %s25, %s26
    %p40 = scmp.eq.s32.totalorder %s18, 1
    %p41 = por %p39, %p40
    %p43 = scmp.ne.s32.totalorder %s26, %s42
    %p44 = scmp.eq.s32.totalorder %s18, 0
    %p45 = por %p43, %p44
    %s46 = ssub.s32 %s12, %s19
    %p47 = scmp.eq.s32.totalorder %s46, 0
    %s49 = sadd.s32 %s48, 1
    %s50 = scalar_select %p47, %s48, %s49
    %p53 = pneg %p47
    %p54 = scmp.eq.s32.totalorder %s12, 1
    %p55 = por %p53, %p54
    %p56 = scmp.ne.s32.totalorder %s48, %s51
    %p57 = scmp.eq.s32.totalorder %s12, 0
    %p58 = por %p56, %p57
    %p59 = scmp.ne.s32.totalorder %s48, %s51
    %p60 = scmp.eq.s32.totalorder %s17, 1
    %p61 = por %p59, %p60
    %p62 = scmp.ne.s32.totalorder %s51, %s52
    %p63 = scmp.eq.s32.totalorder %s17, 0
    %p64 = por %p62, %p63
    %p65 = scmp.ne.s32.totalorder %s51, %s52
    %p66 = scmp.eq.s32.totalorder %s18, 1
    %p67 = por %p65, %p66
    %p69 = scmp.ne.s32.totalorder %s52, %s68
    %p70 = scmp.eq.s32.totalorder %s18, 0
    %p71 = por %p69, %p70
    %s72 = ssub.s32 %s12, %s19
    %p73 = scmp.eq.s32.totalorder %s72, 0
    %s75 = sadd.s32 %s74, 1
    %s76 = scalar_select %p73, %s74, %s75
    %p79 = pneg %p73
    %p80 = scmp.eq.s32.totalorder %s12, 1
    %p81 = por %p79, %p80
    %p82 = scmp.ne.s32.totalorder %s74, %s77
    %p83 = scmp.eq.s32.totalorder %s12, 0
    %p84 = por %p82, %p83
    %p85 = scmp.ne.s32.totalorder %s74, %s77
    %p86 = scmp.eq.s32.totalorder %s17, 1
    %p87 = por %p85, %p86
    %p88 = scmp.ne.s32.totalorder %s77, %s78
    %p89 = scmp.eq.s32.totalorder %s17, 0
    %p90 = por %p88, %p89
    %p91 = scmp.ne.s32.totalorder %s77, %s78
    %p92 = scmp.eq.s32.totalorder %s18, 1
    %p93 = por %p91, %p92
    %p95 = scmp.ne.s32.totalorder %s78, %s94
    %p96 = scmp.eq.s32.totalorder %s18, 0
    %p97 = por %p95, %p96
    %s98 = ssub.s32 %s12, %s19
    %p99 = scmp.eq.s32.totalorder %s98, 0
    %s101 = sadd.s32 %s100, 1
    %s102 = scalar_select %p99, %s100, %s101
    %p105 = pneg %p99
    %p106 = scmp.eq.s32.totalorder %s12, 1
    %p107 = por %p105, %p106
    %p108 = scmp.ne.s32.totalorder %s100, %s103
    %p109 = scmp.eq.s32.totalorder %s12, 0
    %p110 = por %p108, %p109
    %p111 = scmp.ne.s32.totalorder %s100, %s103
    %p112 = scmp.eq.s32.totalorder %s17, 1
    %p113 = por %p111, %p112
    %p114 = scmp.ne.s32.totalorder %s103, %s104
    %p115 = scmp.eq.s32.totalorder %s17, 0
    %p116 = por %p114, %p115
    %p117 = scmp.ne.s32.totalorder %s103, %s104
    %p118 = scmp.eq.s32.totalorder %s18, 1
    %p119 = por %p117, %p118
    %p121 = scmp.ne.s32.totalorder %s104, %s120
    %p122 = scmp.eq.s32.totalorder %s18, 0
    %p123 = por %p121, %p122
    %s124 = ssub.s32 %s12, %s19
    %p125 = scmp.eq.s32.totalorder %s124, 0
    %s127 = sadd.s32 %s126, 1
    %s128 = scalar_select %p125, %s126, %s127
    %p131 = pneg %p125
    %p132 = scmp.eq.s32.totalorder %s12, 1
    %p133 = por %p131, %p132
    %p134 = scmp.ne.s32.totalorder %s126, %s129
    %p135 = scmp.eq.s32.totalorder %s12, 0
    %p136 = por %p134, %p135
    %p137 = scmp.ne.s32.totalorder %s126, %s129
    %p138 = scmp.eq.s32.totalorder %s17, 1
    %p139 = por %p137, %p138
    %p140 = scmp.ne.s32.totalorder %s129, %s130
    %p141 = scmp.eq.s32.totalorder %s17, 0
    %p142 = por %p140, %p141
    %p143 = scmp.ne.s32.totalorder %s129, %s130
    %p144 = scmp.eq.s32.totalorder %s18, 1
    %p145 = por %p143, %p144
    %p147 = scmp.ne.s32.totalorder %s130, %s146
    %p148 = scmp.eq.s32.totalorder %s18, 0
    %p149 = por %p147, %p148
    %s151 = sadd.s32 %s150, 1
    %p154 = scmp.eq.s32.totalorder %s12, 1
    %p155 = scmp.ne.s32.totalorder %s150, %s152
    %p156 = scmp.eq.s32.totalorder %s12, 0
    %p157 = por %p155, %p156
    %p158 = scmp.ne.s32.totalorder %s150, %s152
    %p159 = scmp.eq.s32.totalorder %s17, 1
    %p160 = por %p158, %p159
    %p161 = scmp.ne.s32.totalorder %s152, %s153
    %p162 = scmp.eq.s32.totalorder %s17, 0
    %p163 = por %p161, %p162
    %p164 = scmp.ne.s32.totalorder %s152, %s153
    %p165 = scmp.eq.s32.totalorder %s18, 1
    %p166 = por %p164, %p165
    %p168 = scmp.ne.s32.totalorder %s153, %s167
    %p169 = scmp.eq.s32.totalorder %s18, 0
    %p170 = por %p168, %p169
    %s171 = ssub.s32 %s12, %s19
    %p172 = scmp.eq.s32.totalorder %s171, 0
    %s174 = sadd.s32 %s173, 1
    %s175 = scalar_select %p172, %s173, %s174
    %p178 = pneg %p172
    %p179 = scmp.eq.s32.totalorder %s12, 1
    %p180 = por %p178, %p179
    %p181 = scmp.ne.s32.totalorder %s173, %s176
    %p182 = scmp.eq.s32.totalorder %s12, 0
    %p183 = por %p181, %p182
    %p184 = scmp.ne.s32.totalorder %s173, %s176
    %p185 = scmp.eq.s32.totalorder %s17, 1
    %p186 = por %p184, %p185
    %p187 = scmp.ne.s32.totalorder %s176, %s177
    %p188 = scmp.eq.s32.totalorder %s17, 0
    %p189 = por %p187, %p188
    %p190 = scmp.ne.s32.totalorder %s176, %s177
    %p191 = scmp.eq.s32.totalorder %s18, 1
    %p192 = por %p190, %p191
    %p194 = scmp.ne.s32.totalorder %s177, %s193
    %p195 = scmp.eq.s32.totalorder %s18, 0
    %p196 = por %p194, %p195
    %p197 = scmp.le.s32.totalorder 1, %s12
    %p198 = scmp.lt.s32.totalorder %s12, 3
    %p199 = pnand %p197, %p198
    %p200 = pneg %p199
    // Predicated region
    $region9: #{_lambda_.24} parent=5 // pred_check
      _
    $region10: #{_lambda_.24} parent=5 // pred_check_branch
      %202 = sbr.rel (%p199) target = $region12
    $region11: #{_lambda_.24} parent=5 // pred_region
      %s203 = ssub.s32 %s12, 1
      // Predicated region
      $region13: #{_lambda_.24} parent=11 // pred_check
        %p204 = pneg %p163
      $region14: #{_lambda_.24} parent=11 // pred_check_branch
        %206 = sbr.rel (%p204) target = $region16
      $region15: #{_lambda_.24} parent=11 // pred_region
        _
      $region16: #{_lambda_.24} parent=11 // pred_fallthru
        _
    $region12: #{_lambda_.24} parent=5 // pred_fallthru
      _
    %p207 = scmp.lt.s32.totalorder %s12, 2
    // Predicated region
    $region17: #{_lambda_.24} parent=5 // pred_check
      %p208 = pneg %p207
    $region18: #{_lambda_.24} parent=5 // pred_check_branch
      %210 = sbr.rel (%p208) target = $region20
    $region19: #{_lambda_.24} parent=5 // pred_region
      // Predicated region
      $region21: #{_lambda_.24} parent=19 // pred_check
        %p211 = pneg %p32
      $region22: #{_lambda_.24} parent=19 // pred_check_branch
        %213 = sbr.rel (%p211) target = $region24
      $region23: #{_lambda_.24} parent=19 // pred_region
        %p214 = scmp.lt.s32.totalorder %s12, 1
        %s215 = scalar_select %p214, %s12, 1
        %s216 = smul.addr %s215, 8
        %s217 = smul.addr %s216, 8
        %s218 = scalar_lea.vmem %s0, %s217
      $region24: #{_lambda_.24} parent=19 // pred_fallthru
        _
      // Predicated region
      $region25: #{_lambda_.24} parent=19 // pred_check
        %p219 = pneg %p58
      $region26: #{_lambda_.24} parent=19 // pred_check_branch
        %221 = sbr.rel (%p219) target = $region28
      $region27: #{_lambda_.24} parent=19 // pred_region
        %p222 = scmp.lt.s32.totalorder %s12, 1
        %s223 = scalar_select %p222, %s12, 1
        %s224 = smul.addr %s223, 8
        %s225 = smul.addr %s224, 8
        %s226 = scalar_lea.vmem %s1, %s225
      $region28: #{_lambda_.24} parent=19 // pred_fallthru
        _
      // Predicated region
      $region29: #{_lambda_.24} parent=19 // pred_check
        %p227 = pneg %p84
      $region30: #{_lambda_.24} parent=19 // pred_check_branch
        %229 = sbr.rel (%p227) target = $region32
      $region31: #{_lambda_.24} parent=19 // pred_region
        %p230 = scmp.lt.s32.totalorder %s12, 1
        %s231 = scalar_select %p230, %s12, 1
        %s232 = smul.addr %s231, 9
        %s233 = smul.addr %s232, 8
        %s234 = scalar_lea.vmem %s2, %s233
      $region32: #{_lambda_.24} parent=19 // pred_fallthru
        _
      // Predicated region
      $region33: #{_lambda_.24} parent=19 // pred_check
        %p235 = pneg %p110
      $region34: #{_lambda_.24} parent=19 // pred_check_branch
        %237 = sbr.rel (%p235) target = $region36
      $region35: #{_lambda_.24} parent=19 // pred_region
        %p238 = scmp.lt.s32.totalorder %s12, 1
        %s239 = scalar_select %p238, %s12, 1
        %s240 = smul.addr %s239, 9
        %s241 = smul.addr %s240, 8
        %s242 = scalar_lea.vmem %s3, %s241
      $region36: #{_lambda_.24} parent=19 // pred_fallthru
        _
      // Predicated region
      $region37: #{_lambda_.24} parent=19 // pred_check
        %p243 = pneg %p136
      $region38: #{_lambda_.24} parent=19 // pred_check_branch
        %245 = sbr.rel (%p243) target = $region40
      $region39: #{_lambda_.24} parent=19 // pred_region
        %p246 = scmp.lt.s32.totalorder %s12, 1
        %s247 = scalar_select %p246, %s12, 1
        %s248 = scalar_lea.vmem %s4, %s247
      $region40: #{_lambda_.24} parent=19 // pred_fallthru
        _
    $region20: #{_lambda_.24} parent=5 // pred_fallthru
      _
    %p249 = scmp.le.s32.totalorder 1, %s12
    %p250 = scmp.lt.s32.totalorder %s12, 3
    %p251 = pnand %p249, %p250
    %p252 = pneg %p251
    // Predicated region
    $region41: #{_lambda_.24} parent=5 // pred_check
      _
    $region42: #{_lambda_.24} parent=5 // pred_check_branch
      %254 = sbr.rel (%p251) target = $region44
    $region43: #{_lambda_.24} parent=5 // pred_region
      %s255 = ssub.s32 %s12, 1
      %p256 = scmp.lt.s32.totalorder %s17, 1
      %s257 = scalar_select %p256, %s17, 1
      %s258 = smul.addr %s257, 8
      %s259 = smul.addr %s258, 8
      %s260 = scalar_lea.vmem %s0, %s259
      %p261 = pneg %p38
      %p262 = pneg %p35
      %p263 = scmp.lt.s32.totalorder %s17, 1
      %s264 = scalar_select %p263, %s17, 1
      %s265 = smul.addr %s264, 8
      %s266 = smul.addr %s265, 8
      %s267 = scalar_lea.vmem %s1, %s266
      %p268 = pneg %p64
      %p269 = pneg %p61
      %p270 = scmp.lt.s32.totalorder %s17, 1
      %s271 = scalar_select %p270, %s17, 1
      %s272 = smul.addr %s271, 9
      %s273 = smul.addr %s272, 8
      %s274 = scalar_lea.vmem %s2, %s273
      %p275 = pneg %p90
      %p276 = pneg %p87
      %p277 = scmp.lt.s32.totalorder %s17, 1
      %s278 = scalar_select %p277, %s17, 1
      %s279 = smul.addr %s278, 9
      %s280 = smul.addr %s279, 8
      %s281 = scalar_lea.vmem %s3, %s280
      %p282 = pneg %p116
      %p283 = pneg %p113
      %p284 = scmp.lt.s32.totalorder %s17, 1
      %s285 = scalar_select %p284, %s17, 1
      %s286 = scalar_lea.vmem %s4, %s285
      %p287 = pneg %p142
      %p288 = pneg %p139
      %p289 = pneg %p163
      %p290 = pneg %p160
      %p291 = pneg %p189
      %p292 = pneg %p186
      %p293 = scmp.lt.s32.totalorder %s17, 1
      %s294 = scalar_select %p293, %s17, 1
      %s295 = smul.addr %s294, 8
      %s296 = smul.addr %s295, 8
      %s297 = scalar_lea.vmem %s6, %s296
      %p298 = scmp.lt.s32.totalorder %s17, 1
      %s299 = scalar_select %p298, %s17, 1
      %s300 = smul.addr %s299, 8
      %s301 = smul.addr %s300, 8
      %s302 = scalar_lea.vmem %s0, %s301
      %p303 = scmp.lt.s32.totalorder %s17, 1
      %s304 = scalar_select %p303, %s17, 1
      %s305 = smul.addr %s304, 8
      %s306 = smul.addr %s305, 8
      %s307 = scalar_lea.vmem %s1, %s306
      %p308 = scmp.lt.s32.totalorder %s17, 1
      %s309 = scalar_select %p308, %s17, 1
      %s310 = smul.addr %s309, 9
      %s311 = smul.addr %s310, 8
      %s312 = scalar_lea.vmem %s2, %s311
      %p313 = scmp.lt.s32.totalorder %s17, 1
      %s314 = scalar_select %p313, %s17, 1
      %s315 = smul.addr %s314, 9
      %s316 = smul.addr %s315, 8
      %s317 = scalar_lea.vmem %s3, %s316
      %p318 = scmp.lt.s32.totalorder %s17, 1
      %s319 = scalar_select %p318, %s17, 1
      %s320 = scalar_lea.vmem %s4, %s319
      %p321 = scmp.lt.s32.totalorder %s17, 1
      %s322 = scalar_select %p321, %s17, 1
      %s323 = smul.addr %s322, 8
      %s324 = smul.addr %s323, 8
      %s325 = scalar_lea.vmem %s6, %s324
      %v327 = vld [vmem:[%s302] sm:$0xff]
      %v328 = vld [vmem:[%s302 + $0x8] sm:$0xff]
      %v329 = vld [vmem:[%s302 + $0x10] sm:$0xff]
      %v330 = vld [vmem:[%s302 + $0x18] sm:$0xff]
      %v331 = vld [vmem:[%s302 + $0x20] sm:$0xff]
      %v332 = vld [vmem:[%s302 + $0x28] sm:$0xff]
      %v333 = vld [vmem:[%s302 + $0x30] sm:$0xff]
      %v334 = vld [vmem:[%s302 + $0x38] sm:$0xff]
      %v335 = vld [vmem:[%s307] sm:$0xff]
      %v336 = vld [vmem:[%s307 + $0x8] sm:$0xff]
      %v337 = vld [vmem:[%s307 + $0x10] sm:$0xff]
      %v338 = vld [vmem:[%s307 + $0x18] sm:$0xff]
      %v339 = vld [vmem:[%s307 + $0x20] sm:$0xff]
      %v340 = vld [vmem:[%s307 + $0x28] sm:$0xff]
      %v341 = vld [vmem:[%s307 + $0x30] sm:$0xff]
      %v342 = vld [vmem:[%s307 + $0x38] sm:$0xff]
      %v343 = vld [vmem:[%s312] sm:$0xff]
      %v344 = vld [vmem:[%s312 + $0x8] sm:$0xff]
      %v345 = vld [vmem:[%s312 + $0x10] sm:$0xff]
      %v346 = vld [vmem:[%s312 + $0x18] sm:$0xff]
      %v347 = vld [vmem:[%s312 + $0x20] sm:$0xff]
      %v348 = vld [vmem:[%s312 + $0x28] sm:$0xff]
      %v349 = vld [vmem:[%s312 + $0x30] sm:$0xff]
      %v350 = vld [vmem:[%s312 + $0x38] sm:$0xff]
      %v351 = vld [vmem:[%s312 + $0x40] sm:$0xff]
      %v352 = vld [vmem:[%s317] sm:$0xff]
      %v353 = vld [vmem:[%s317 + $0x8] sm:$0xff]
      %v354 = vld [vmem:[%s317 + $0x10] sm:$0xff]
      %v355 = vld [vmem:[%s317 + $0x18] sm:$0xff]
      %v356 = vld [vmem:[%s317 + $0x20] sm:$0xff]
      %v357 = vld [vmem:[%s317 + $0x28] sm:$0xff]
      %v358 = vld [vmem:[%s317 + $0x30] sm:$0xff]
      %v359 = vld [vmem:[%s317 + $0x38] sm:$0xff]
      %v360 = vld [vmem:[%s317 + $0x40] sm:$0xff]
      %v361 = vld [vmem:[%s5] sm:$0xff]
      %v362 = vld [vmem:[%s5 + $0x8] sm:$0xff]
      %v363 = vld [vmem:[%s5 + $0x10] sm:$0xff]
      %v364 = vld [vmem:[%s5 + $0x18] sm:$0xff]
      %v365 = vld [vmem:[%s5 + $0x20] sm:$0xff]
      %v366 = vld [vmem:[%s5 + $0x28] sm:$0xff]
      %v367 = vld [vmem:[%s5 + $0x30] sm:$0xff]
      %v368 = vld [vmem:[%s5 + $0x38] sm:$0xff]
      %v369 = vpack.c.bf16 %v336, %v335
      %v370 = vpack.c.bf16 %v338, %v337
      %v371 = vpack.c.bf16 %v340, %v339
      %v372 = vpack.c.bf16 %v342, %v341
      %v373 = vpack.c.bf16 %v344, %v343
      %v374 = vpack.c.bf16 %v346, %v345
      %v375 = vpack.c.bf16 %v348, %v347
      %v376 = vpack.c.bf16 %v350, %v349
      %v377 = vpack.c.bf16 %v351, %v351
      %v378 = vpack.c.bf16 %v353, %v352
      %v379 = vpack.c.bf16 %v355, %v354
      %v380 = vpack.c.bf16 %v357, %v356
      %v381 = vpack.c.bf16 %v359, %v358
      %v382 = vpack.c.bf16 %v360, %v360
      %vm383 = vcmask 130048
      %v385 = vsel %vm383, %v369, 0
      %v388 = vsel %vm383, %v370, 0
      %v391 = vsel %vm383, %v371, 0
      %v394 = vsel %vm383, %v372, 0
      %v397 = vsel %vm383, %v373, 0
      %v400 = vsel %vm383, %v374, 0
      %v403 = vsel %vm383, %v375, 0
      %v406 = vsel %vm383, %v376, 0
      %v409 = vsel %vm383, %v377, 0
      %411 = vmatprep.subr.bf16.mxu0 0
      %412 = vmatpush1.bf16.xpose.msra.mxu0 0
      %413 = vmatprep.subr.bf16.mxu0 0
      %414 = vmatpush1.bf16.xpose.msra.mxu0 0
      %415 = vmatprep.subr.bf16.mxu0 0
      %416 = vmatpush1.bf16.xpose.msra.mxu0 0
      %417 = vmatprep.subr.bf16.mxu0 0
      %418 = vmatpush1.bf16.xpose.msra.mxu0 %v409
      %419 = vmatprep.subr.bf16.mxu0 0
      %420 = vmatpush1.bf16.xpose.msra.mxu0 %v406
      %421 = vmatprep.subr.bf16.mxu0 0
      %422 = vmatpush1.bf16.xpose.msra.mxu0 %v403
      %423 = vmatprep.subr.bf16.mxu0 0
      %424 = vmatpush1.bf16.xpose.msra.mxu0 %v400
      %425 = vmatprep.subr.bf16.mxu0 0
      %426 = vmatpush1.bf16.xpose.msra.mxu0 %v397
      %427 = vmatprep.subr.bf16.mxu0 0
      %428 = vmatpush2.bf16.xpose.msra.mxu0 0
      %429 = vmatprep.subr.bf16.mxu0 0
      %430 = vmatpush2.bf16.xpose.msra.mxu0 0
      %431 = vmatprep.subr.bf16.mxu0 0
      %432 = vmatpush2.bf16.xpose.msra.mxu0 0
      %433 = vmatprep.subr.bf16.mxu0 0
      %434 = vmatpush2.bf16.xpose.msra.mxu0 0
      %435 = vmatprep.subr.bf16.mxu0 0
      %436 = vmatpush2.bf16.xpose.msra.mxu0 0
      %437 = vmatprep.subr.bf16.mxu0 0
      %438 = vmatpush2.bf16.xpose.msra.mxu0 0
      %439 = vmatprep.subr.bf16.mxu0 0
      %440 = vmatpush2.bf16.xpose.msra.mxu0 0
      %441 = vmatprep.subr.bf16.mxu0 0
      %442 = vmatpush2.bf16.xpose.msra.mxu0 0
      %443 = vmatprep.mubr.bf16.mxu0 0
      %444 = vmatmul.mubr.bf16.gmra.mxu0 %v385
      %v445 = vpop.f32.mrf.mxu0
      %v446 = vadd.f32 0.0, %v445
      %v447 = vpop.f32.mrf.mxu0
      %v448 = vpop.f32.mrf.mxu0
      %v449 = vadd.f32 0.0, %v448
      %v450 = vpop.f32.mrf.mxu0
      %451 = vmatprep.mubr.bf16.mxu0 0
      %452 = vmatmul.mubr.bf16.gmra.mxu0 %v388
      %v453 = vpop.f32.mrf.mxu0
      %v454 = vadd.f32 0.0, %v453
      %v455 = vpop.f32.mrf.mxu0
      %v456 = vpop.f32.mrf.mxu0
      %v457 = vadd.f32 0.0, %v456
      %v458 = vpop.f32.mrf.mxu0
      %459 = vmatprep.mubr.bf16.mxu0 0
      %460 = vmatmul.mubr.bf16.gmra.mxu0 %v391
      %v461 = vpop.f32.mrf.mxu0
      %v462 = vadd.f32 0.0, %v461
      %v463 = vpop.f32.mrf.mxu0
      %v464 = vpop.f32.mrf.mxu0
      %v465 = vadd.f32 0.0, %v464
      %v466 = vpop.f32.mrf.mxu0
      %467 = vmatprep.mubr.bf16.mxu0 0
      %468 = vmatmul.mubr.bf16.gmra.mxu0 %v394
      %v469 = vpop.f32.mrf.mxu0
      %v470 = vadd.f32 0.0, %v469
      %v471 = vpop.f32.mrf.mxu0
      %v472 = vpop.f32.mrf.mxu0
      %v473 = vadd.f32 0.0, %v472
      %v474 = vpop.f32.mrf.mxu0
      %475 = vdwg.mxu0
      %v476 = vmul.f32 %v446, 0.25
      %v477 = vmul.f32 %v449, 0.25
      %v478 = vmul.f32 %v454, 0.25
      %v479 = vmul.f32 %v457, 0.25
      %v480 = vmul.f32 %v462, 0.25
      %v481 = vmul.f32 %v465, 0.25
      %v482 = vmul.f32 %v470, 0.25
      %v483 = vmul.f32 %v473, 0.25
      %vm484 = vcmask 588800
      %v485 = vsel %vm484, %v476, -inf
      %486 = vmax.xlane.f32.xlu0 %v485
      %v487 = vpop.xlane.xlu0 %486
      %v488 = vsel %vm484, %v477, -inf
      %489 = vmax.xlane.f32.xlu0 %v488
      %v490 = vpop.xlane.xlu0 %489
      %v491 = vsel %vm484, %v478, -inf
      %492 = vmax.xlane.f32.xlu0 %v491
      %v493 = vpop.xlane.xlu0 %492
      %v494 = vsel %vm484, %v479, -inf
      %495 = vmax.xlane.f32.xlu0 %v494
      %v496 = vpop.xlane.xlu0 %495
      %v497 = vsel %vm484, %v480, -inf
      %498 = vmax.xlane.f32.xlu0 %v497
      %v499 = vpop.xlane.xlu0 %498
      %v500 = vsel %vm484, %v481, -inf
      %501 = vmax.xlane.f32.xlu0 %v500
      %v502 = vpop.xlane.xlu0 %501
      %v503 = vsel %vm484, %v482, -inf
      %504 = vmax.xlane.f32.xlu0 %v503
      %v505 = vpop.xlane.xlu0 %504
      %v506 = vsel %vm484, %v483, -inf
      %507 = vmax.xlane.f32.xlu0 %v506
      %v508 = vpop.xlane.xlu0 %507
      %v509 = vsub.f32 %v476, %v487
      %v510 = vsub.f32 %v477, %v490
      %v511 = vsub.f32 %v478, %v493
      %v512 = vsub.f32 %v479, %v496
      %v513 = vsub.f32 %v480, %v499
      %v514 = vsub.f32 %v481, %v502
      %v515 = vsub.f32 %v482, %v505
      %v516 = vsub.f32 %v483, %v508
      %v517 = vmul.f32 %v509, 1.442695
      %v518 = vpow.pop %v517
      %v519 = vmul.f32 %v510, 1.442695
      %v520 = vpow.pop %v519
      %v521 = vmul.f32 %v511, 1.442695
      %v522 = vpow.pop %v521
      %v523 = vmul.f32 %v512, 1.442695
      %v524 = vpow.pop %v523
      %v525 = vmul.f32 %v513, 1.442695
      %v526 = vpow.pop %v525
      %v527 = vmul.f32 %v514, 1.442695
      %v528 = vpow.pop %v527
      %v529 = vmul.f32 %v515, 1.442695
      %v530 = vpow.pop %v529
      %v531 = vmul.f32 %v516, 1.442695
      %v532 = vpow.pop %v531
      %v533 = vsel %vm484, %v518, 0.0
      %534 = vadd.xlane.f32.xlu0 %v533
      %v535 = vpop.xlane.xlu0 %534
      %v536 = vsel %vm484, %v520, 0.0
      %537 = vadd.xlane.f32.xlu0 %v536
      %v538 = vpop.xlane.xlu0 %537
      %v539 = vsel %vm484, %v522, 0.0
      %540 = vadd.xlane.f32.xlu0 %v539
      %v541 = vpop.xlane.xlu0 %540
      %v542 = vsel %vm484, %v524, 0.0
      %543 = vadd.xlane.f32.xlu0 %v542
      %v544 = vpop.xlane.xlu0 %543
      %v545 = vsel %vm484, %v526, 0.0
      %546 = vadd.xlane.f32.xlu0 %v545
      %v547 = vpop.xlane.xlu0 %546
      %v548 = vsel %vm484, %v528, 0.0
      %549 = vadd.xlane.f32.xlu0 %v548
      %v550 = vpop.xlane.xlu0 %549
      %v551 = vsel %vm484, %v530, 0.0
      %552 = vadd.xlane.f32.xlu0 %v551
      %v553 = vpop.xlane.xlu0 %552
      %v554 = vsel %vm484, %v532, 0.0
      %555 = vadd.xlane.f32.xlu0 %v554
      %v556 = vpop.xlane.xlu0 %555
      %v557 = vrcp.pop %v535
      %v558 = vmul.f32 %v518, %v557
      %v559 = vrcp.pop %v538
      %v560 = vmul.f32 %v520, %v559
      %v561 = vrcp.pop %v541
      %v562 = vmul.f32 %v522, %v561
      %v563 = vrcp.pop %v544
      %v564 = vmul.f32 %v524, %v563
      %v565 = vrcp.pop %v547
      %v566 = vmul.f32 %v526, %v565
      %v567 = vrcp.pop %v550
      %v568 = vmul.f32 %v528, %v567
      %v569 = vrcp.pop %v553
      %v570 = vmul.f32 %v530, %v569
      %v571 = vrcp.pop %v556
      %v572 = vmul.f32 %v532, %v571
      %v573 = vpack.c.bf16 %v560, %v558
      %v574 = vpack.c.bf16 %v564, %v562
      %v575 = vpack.c.bf16 %v568, %v566
      %v576 = vpack.c.bf16 %v572, %v570
      %v578 = vsel %vm484, %v573, 0
      %v581 = vsel %vm484, %v574, 0
      %v584 = vsel %vm484, %v575, 0
      %v587 = vsel %vm484, %v576, 0
      %vm589 = vcmask 1043456
      %v591 = vsel %vm589, %v382, 0
      %593 = vmatprep.subr.bf16.mxu0 0
      %594 = vmatpush1.bf16.msra.mxu0 0
      %595 = vmatprep.subr.bf16.mxu0 0
      %596 = vmatpush1.bf16.msra.mxu0 0
      %597 = vmatprep.subr.bf16.mxu0 0
      %598 = vmatpush1.bf16.msra.mxu0 0
      %599 = vmatprep.subr.bf16.mxu0 0
      %600 = vmatpush1.bf16.msra.mxu0 %v591
      %601 = vmatprep.subr.bf16.mxu0 0
      %602 = vmatpush1.bf16.msra.mxu0 %v381
      %603 = vmatprep.subr.bf16.mxu0 0
      %604 = vmatpush1.bf16.msra.mxu0 %v380
      %605 = vmatprep.subr.bf16.mxu0 0
      %606 = vmatpush1.bf16.msra.mxu0 %v379
      %607 = vmatprep.subr.bf16.mxu0 0
      %608 = vmatpush1.bf16.msra.mxu0 %v378
      %609 = vmatprep.subr.bf16.mxu0 0
      %610 = vmatpush2.bf16.msra.mxu0 0
      %611 = vmatprep.subr.bf16.mxu0 0
      %612 = vmatpush2.bf16.msra.mxu0 0
      %613 = vmatprep.subr.bf16.mxu0 0
      %614 = vmatpush2.bf16.msra.mxu0 0
      %615 = vmatprep.subr.bf16.mxu0 0
      %616 = vmatpush2.bf16.msra.mxu0 0
      %617 = vmatprep.subr.bf16.mxu0 0
      %618 = vmatpush2.bf16.msra.mxu0 0
      %619 = vmatprep.subr.bf16.mxu0 0
      %620 = vmatpush2.bf16.msra.mxu0 0
      %621 = vmatprep.subr.bf16.mxu0 0
      %622 = vmatpush2.bf16.msra.mxu0 0
      %623 = vmatprep.subr.bf16.mxu0 0
      %624 = vmatpush2.bf16.msra.mxu0 0
      %625 = vmatprep.mubr.bf16.mxu0 0
      %626 = vmatmul.mubr.bf16.gmra.mxu0 %v578
      %v627 = vpop.f32.mrf.mxu0
      %v628 = vadd.f32 0.0, %v627
      %v629 = vpop.f32.mrf.mxu0
      %v630 = vpop.f32.mrf.mxu0
      %v631 = vadd.f32 0.0, %v630
      %v632 = vpop.f32.mrf.mxu0
      %633 = vmatprep.mubr.bf16.mxu0 0
      %634 = vmatmul.mubr.bf16.gmra.mxu0 %v581
      %v635 = vpop.f32.mrf.mxu0
      %v636 = vadd.f32 0.0, %v635
      %v637 = vpop.f32.mrf.mxu0
      %v638 = vpop.f32.mrf.mxu0
      %v639 = vadd.f32 0.0, %v638
      %v640 = vpop.f32.mrf.mxu0
      %641 = vmatprep.mubr.bf16.mxu0 0
      %642 = vmatmul.mubr.bf16.gmra.mxu0 %v584
      %v643 = vpop.f32.mrf.mxu0
      %v644 = vadd.f32 0.0, %v643
      %v645 = vpop.f32.mrf.mxu0
      %v646 = vpop.f32.mrf.mxu0
      %v647 = vadd.f32 0.0, %v646
      %v648 = vpop.f32.mrf.mxu0
      %649 = vmatprep.mubr.bf16.mxu0 0
      %650 = vmatmul.mubr.bf16.gmra.mxu0 %v587
      %v651 = vpop.f32.mrf.mxu0
      %v652 = vadd.f32 0.0, %v651
      %v653 = vpop.f32.mrf.mxu0
      %v654 = vpop.f32.mrf.mxu0
      %v655 = vadd.f32 0.0, %v654
      %v656 = vpop.f32.mrf.mxu0
      %657 = vdwg.mxu0
      %v658 = vpack.c.bf16 %v631, %v628
      %v659 = vpack.c.bf16 %v639, %v636
      %v660 = vpack.c.bf16 %v647, %v644
      %v661 = vpack.c.bf16 %v655, %v652
      %v662 = vpack.c.bf16 %v362, %v361
      %667 = vrot.lane.b32.xlu0 %v369, 112
      %v668 = vpop.permute.xlu0 %667
      %669 = vrot.lane.b32.xlu0 %v370, 112
      %v670 = vpop.permute.xlu0 %669
      %671 = vrot.lane.b32.xlu0 %v371, 112
      %v672 = vpop.permute.xlu0 %671
      %673 = vrot.lane.b32.xlu0 %v372, 112
      %v674 = vpop.permute.xlu0 %673
      %680 = vrot.lane.b32.xlu0 %v373, 112
      %v681 = vpop.permute.xlu0 %680
      %682 = vrot.lane.b32.xlu0 %v374, 112
      %v683 = vpop.permute.xlu0 %682
      %684 = vrot.lane.b32.xlu0 %v375, 112
      %v685 = vpop.permute.xlu0 %684
      %686 = vrot.lane.b32.xlu0 %v376, 112
      %v687 = vpop.permute.xlu0 %686
      %688 = vrot.lane.b32.xlu0 %v377, 112
      %v689 = vpop.permute.xlu0 %688
      %v691 = vsel %vm383, %v668, 0
      %v694 = vsel %vm383, %v670, 0
      %v697 = vsel %vm383, %v672, 0
      %v700 = vsel %vm383, %v674, 0
      %v703 = vsel %vm383, %v681, 0
      %v706 = vsel %vm383, %v683, 0
      %v709 = vsel %vm383, %v685, 0
      %v712 = vsel %vm383, %v687, 0
      %v715 = vsel %vm383, %v689, 0
      %717 = vmatprep.subr.bf16.mxu0 0
      %718 = vmatpush1.bf16.xpose.msra.mxu0 0
      %719 = vmatprep.subr.bf16.mxu0 0
      %720 = vmatpush1.bf16.xpose.msra.mxu0 0
      %721 = vmatprep.subr.bf16.mxu0 0
      %722 = vmatpush1.bf16.xpose.msra.mxu0 0
      %723 = vmatprep.subr.bf16.mxu0 0
      %724 = vmatpush1.bf16.xpose.msra.mxu0 %v715
      %725 = vmatprep.subr.bf16.mxu0 0
      %726 = vmatpush1.bf16.xpose.msra.mxu0 %v712
      %727 = vmatprep.subr.bf16.mxu0 0
      %728 = vmatpush1.bf16.xpose.msra.mxu0 %v709
      %729 = vmatprep.subr.bf16.mxu0 0
      %730 = vmatpush1.bf16.xpose.msra.mxu0 %v706
      %731 = vmatprep.subr.bf16.mxu0 0
      %732 = vmatpush1.bf16.xpose.msra.mxu0 %v703
      %733 = vmatprep.subr.bf16.mxu0 0
      %734 = vmatpush2.bf16.xpose.msra.mxu0 0
      %735 = vmatprep.subr.bf16.mxu0 0
      %736 = vmatpush2.bf16.xpose.msra.mxu0 0
      %737 = vmatprep.subr.bf16.mxu0 0
      %738 = vmatpush2.bf16.xpose.msra.mxu0 0
      %739 = vmatprep.subr.bf16.mxu0 0
      %740 = vmatpush2.bf16.xpose.msra.mxu0 0
      %741 = vmatprep.subr.bf16.mxu0 0
      %742 = vmatpush2.bf16.xpose.msra.mxu0 0
      %743 = vmatprep.subr.bf16.mxu0 0
      %744 = vmatpush2.bf16.xpose.msra.mxu0 0
      %745 = vmatprep.subr.bf16.mxu0 0
      %746 = vmatpush2.bf16.xpose.msra.mxu0 0
      %747 = vmatprep.subr.bf16.mxu0 0
      %748 = vmatpush2.bf16.xpose.msra.mxu0 0
      %749 = vmatprep.mubr.bf16.mxu0 0
      %750 = vmatmul.mubr.bf16.gmra.mxu0 %v691
      %v751 = vpop.f32.mrf.mxu0
      %v752 = vadd.f32 0.0, %v751
      %v753 = vpop.f32.mrf.mxu0
      %v754 = vpop.f32.mrf.mxu0
      %v755 = vadd.f32 0.0, %v754
      %v756 = vpop.f32.mrf.mxu0
      %757 = vmatprep.mubr.bf16.mxu0 0
      %758 = vmatmul.mubr.bf16.gmra.mxu0 %v694
      %v759 = vpop.f32.mrf.mxu0
      %v760 = vadd.f32 0.0, %v759
      %v761 = vpop.f32.mrf.mxu0
      %v762 = vpop.f32.mrf.mxu0
      %v763 = vadd.f32 0.0, %v762
      %v764 = vpop.f32.mrf.mxu0
      %765 = vmatprep.mubr.bf16.mxu0 0
      %766 = vmatmul.mubr.bf16.gmra.mxu0 %v697
      %v767 = vpop.f32.mrf.mxu0
      %v768 = vadd.f32 0.0, %v767
      %v769 = vpop.f32.mrf.mxu0
      %v770 = vpop.f32.mrf.mxu0
      %v771 = vadd.f32 0.0, %v770
      %v772 = vpop.f32.mrf.mxu0
      %773 = vmatprep.mubr.bf16.mxu0 0
      %774 = vmatmul.mubr.bf16.gmra.mxu0 %v700
      %v775 = vpop.f32.mrf.mxu0
      %v776 = vadd.f32 0.0, %v775
      %v777 = vpop.f32.mrf.mxu0
      %v778 = vpop.f32.mrf.mxu0
      %v779 = vadd.f32 0.0, %v778
      %v780 = vpop.f32.mrf.mxu0
      %781 = vdwg.mxu0
      %v782 = vmul.f32 %v752, 0.25
      %v783 = vmul.f32 %v755, 0.25
      %v784 = vmul.f32 %v760, 0.25
      %v785 = vmul.f32 %v763, 0.25
      %v786 = vmul.f32 %v768, 0.25
      %v787 = vmul.f32 %v771, 0.25
      %v788 = vmul.f32 %v776, 0.25
      %v789 = vmul.f32 %v779, 0.25
      %v790 = vsel %vm484, %v782, -inf
      %791 = vmax.xlane.f32.xlu0 %v790
      %v792 = vpop.xlane.xlu0 %791
      %v793 = vsel %vm484, %v783, -inf
      %794 = vmax.xlane.f32.xlu0 %v793
      %v795 = vpop.xlane.xlu0 %794
      %v796 = vsel %vm484, %v784, -inf
      %797 = vmax.xlane.f32.xlu0 %v796
      %v798 = vpop.xlane.xlu0 %797
      %v799 = vsel %vm484, %v785, -inf
      %800 = vmax.xlane.f32.xlu0 %v799
      %v801 = vpop.xlane.xlu0 %800
      %v802 = vsel %vm484, %v786, -inf
      %803 = vmax.xlane.f32.xlu0 %v802
      %v804 = vpop.xlane.xlu0 %803
      %v805 = vsel %vm484, %v787, -inf
      %806 = vmax.xlane.f32.xlu0 %v805
      %v807 = vpop.xlane.xlu0 %806
      %v808 = vsel %vm484, %v788, -inf
      %809 = vmax.xlane.f32.xlu0 %v808
      %v810 = vpop.xlane.xlu0 %809
      %v811 = vsel %vm484, %v789, -inf
      %812 = vmax.xlane.f32.xlu0 %v811
      %v813 = vpop.xlane.xlu0 %812
      %v814 = vsub.f32 %v782, %v792
      %v815 = vsub.f32 %v783, %v795
      %v816 = vsub.f32 %v784, %v798
      %v817 = vsub.f32 %v785, %v801
      %v818 = vsub.f32 %v786, %v804
      %v819 = vsub.f32 %v787, %v807
      %v820 = vsub.f32 %v788, %v810
      %v821 = vsub.f32 %v789, %v813
      %v822 = vmul.f32 %v814, 1.442695
      %v823 = vpow.pop %v822
      %v824 = vmul.f32 %v815, 1.442695
      %v825 = vpow.pop %v824
      %v826 = vmul.f32 %v816, 1.442695
      %v827 = vpow.pop %v826
      %v828 = vmul.f32 %v817, 1.442695
      %v829 = vpow.pop %v828
      %v830 = vmul.f32 %v818, 1.442695
      %v831 = vpow.pop %v830
      %v832 = vmul.f32 %v819, 1.442695
      %v833 = vpow.pop %v832
      %v834 = vmul.f32 %v820, 1.442695
      %v835 = vpow.pop %v834
      %v836 = vmul.f32 %v821, 1.442695
      %v837 = vpow.pop %v836
      %v838 = vsel %vm484, %v823, 0.0
      %839 = vadd.xlane.f32.xlu0 %v838
      %v840 = vpop.xlane.xlu0 %839
      %v841 = vsel %vm484, %v825, 0.0
      %842 = vadd.xlane.f32.xlu0 %v841
      %v843 = vpop.xlane.xlu0 %842
      %v844 = vsel %vm484, %v827, 0.0
      %845 = vadd.xlane.f32.xlu0 %v844
      %v846 = vpop.xlane.xlu0 %845
      %v847 = vsel %vm484, %v829, 0.0
      %848 = vadd.xlane.f32.xlu0 %v847
      %v849 = vpop.xlane.xlu0 %848
      %v850 = vsel %vm484, %v831, 0.0
      %851 = vadd.xlane.f32.xlu0 %v850
      %v852 = vpop.xlane.xlu0 %851
      %v853 = vsel %vm484, %v833, 0.0
      %854 = vadd.xlane.f32.xlu0 %v853
      %v855 = vpop.xlane.xlu0 %854
      %v856 = vsel %vm484, %v835, 0.0
      %857 = vadd.xlane.f32.xlu0 %v856
      %v858 = vpop.xlane.xlu0 %857
      %v859 = vsel %vm484, %v837, 0.0
      %860 = vadd.xlane.f32.xlu0 %v859
      %v861 = vpop.xlane.xlu0 %860
      %v862 = vrcp.pop %v840
      %v863 = vmul.f32 %v823, %v862
      %v864 = vrcp.pop %v843
      %v865 = vmul.f32 %v825, %v864
      %v866 = vrcp.pop %v846
      %v867 = vmul.f32 %v827, %v866
      %v868 = vrcp.pop %v849
      %v869 = vmul.f32 %v829, %v868
      %v870 = vrcp.pop %v852
      %v871 = vmul.f32 %v831, %v870
      %v872 = vrcp.pop %v855
      %v873 = vmul.f32 %v833, %v872
      %v874 = vrcp.pop %v858
      %v875 = vmul.f32 %v835, %v874
      %v876 = vrcp.pop %v861
      %v877 = vmul.f32 %v837, %v876
      %v878 = vpack.c.bf16 %v865, %v863
      %v879 = vpack.c.bf16 %v869, %v867
      %v880 = vpack.c.bf16 %v873, %v871
      %v881 = vpack.c.bf16 %v877, %v875
      %887 = vrot.lane.b32.xlu0 %v378, 112
      %v888 = vpop.permute.xlu0 %887
      %889 = vrot.lane.b32.xlu0 %v379, 112
      %v890 = vpop.permute.xlu0 %889
      %891 = vrot.lane.b32.xlu0 %v380, 112
      %v892 = vpop.permute.xlu0 %891
      %893 = vrot.lane.b32.xlu0 %v381, 112
      %v894 = vpop.permute.xlu0 %893
      %895 = vrot.lane.b32.xlu0 %v382, 112
      %v896 = vpop.permute.xlu0 %895
      %v902 = vsel %vm484, %v878, 0
      %v905 = vsel %vm484, %v879, 0
      %v908 = vsel %vm484, %v880, 0
      %v911 = vsel %vm484, %v881, 0
      %v914 = vsel %vm589, %v896, 0
      %916 = vmatprep.subr.bf16.mxu0 0
      %917 = vmatpush1.bf16.msra.mxu0 0
      %918 = vmatprep.subr.bf16.mxu0 0
      %919 = vmatpush1.bf16.msra.mxu0 0
      %920 = vmatprep.subr.bf16.mxu0 0
      %921 = vmatpush1.bf16.msra.mxu0 0
      %922 = vmatprep.subr.bf16.mxu0 0
      %923 = vmatpush1.bf16.msra.mxu0 %v914
      %924 = vmatprep.subr.bf16.mxu0 0
      %925 = vmatpush1.bf16.msra.mxu0 %v894
      %926 = vmatprep.subr.bf16.mxu0 0
      %927 = vmatpush1.bf16.msra.mxu0 %v892
      %928 = vmatprep.subr.bf16.mxu0 0
      %929 = vmatpush1.bf16.msra.mxu0 %v890
      %930 = vmatprep.subr.bf16.mxu0 0
      %931 = vmatpush1.bf16.msra.mxu0 %v888
      %932 = vmatprep.subr.bf16.mxu0 0
      %933 = vmatpush2.bf16.msra.mxu0 0
      %934 = vmatprep.subr.bf16.mxu0 0
      %935 = vmatpush2.bf16.msra.mxu0 0
      %936 = vmatprep.subr.bf16.mxu0 0
      %937 = vmatpush2.bf16.msra.mxu0 0
      %938 = vmatprep.subr.bf16.mxu0 0
      %939 = vmatpush2.bf16.msra.mxu0 0
      %940 = vmatprep.subr.bf16.mxu0 0
      %941 = vmatpush2.bf16.msra.mxu0 0
      %942 = vmatprep.subr.bf16.mxu0 0
      %943 = vmatpush2.bf16.msra.mxu0 0
      %944 = vmatprep.subr.bf16.mxu0 0
      %945 = vmatpush2.bf16.msra.mxu0 0
      %946 = vmatprep.subr.bf16.mxu0 0
      %947 = vmatpush2.bf16.msra.mxu0 0
      %948 = vmatprep.mubr.bf16.mxu0 0
      %949 = vmatmul.mubr.bf16.gmra.mxu0 %v902
      %v950 = vpop.f32.mrf.mxu0
      %v951 = vadd.f32 0.0, %v950
      %v952 = vpop.f32.mrf.mxu0
      %v953 = vpop.f32.mrf.mxu0
      %v954 = vadd.f32 0.0, %v953
      %v955 = vpop.f32.mrf.mxu0
      %956 = vmatprep.mubr.bf16.mxu0 0
      %957 = vmatmul.mubr.bf16.gmra.mxu0 %v905
      %v958 = vpop.f32.mrf.mxu0
      %v959 = vadd.f32 0.0, %v958
      %v960 = vpop.f32.mrf.mxu0
      %v961 = vpop.f32.mrf.mxu0
      %v962 = vadd.f32 0.0, %v961
      %v963 = vpop.f32.mrf.mxu0
      %964 = vmatprep.mubr.bf16.mxu0 0
      %965 = vmatmul.mubr.bf16.gmra.mxu0 %v908
      %v966 = vpop.f32.mrf.mxu0
      %v967 = vadd.f32 0.0, %v966
      %v968 = vpop.f32.mrf.mxu0
      %v969 = vpop.f32.mrf.mxu0
      %v970 = vadd.f32 0.0, %v969
      %v971 = vpop.f32.mrf.mxu0
      %972 = vmatprep.mubr.bf16.mxu0 0
      %973 = vmatmul.mubr.bf16.gmra.mxu0 %v911
      %v974 = vpop.f32.mrf.mxu0
      %v975 = vadd.f32 0.0, %v974
      %v976 = vpop.f32.mrf.mxu0
      %v977 = vpop.f32.mrf.mxu0
      %v978 = vadd.f32 0.0, %v977
      %v979 = vpop.f32.mrf.mxu0
      %980 = vdwg.mxu0
      %v981 = vpack.c.bf16 %v954, %v951
      %v982 = vpack.c.bf16 %v962, %v959
      %v983 = vpack.c.bf16 %v970, %v967
      %v984 = vpack.c.bf16 %v978, %v975
      %v985 = vpack.c.bf16 %v364, %v363
      %v987 = vsel %vm383, %v981, 0
      %v990 = vsel %vm383, %v982, 0
      %v993 = vsel %vm383, %v983, 0
      %v996 = vsel %vm383, %v984, 0
      %998 = vmatprep.subr.bf16.mxu0 0
      %999 = vmatpush1.bf16.msra.mxu0 0
      %1000 = vmatprep.subr.bf16.mxu0 0
      %1001 = vmatpush1.bf16.msra.mxu0 0
      %1002 = vmatprep.subr.bf16.mxu0 0
      %1003 = vmatpush1.bf16.msra.mxu0 0
      %1004 = vmatprep.subr.bf16.mxu0 0
      %1005 = vmatpush1.bf16.msra.mxu0 0
      %1006 = vmatprep.subr.bf16.mxu0 0
      %1007 = vmatpush1.bf16.msra.mxu0 0
      %1008 = vmatprep.subr.bf16.mxu0 0
      %1009 = vmatpush1.bf16.msra.mxu0 0
      %1010 = vmatprep.subr.bf16.mxu0 0
      %1011 = vmatpush1.bf16.msra.mxu0 0
      %1012 = vmatprep.subr.bf16.mxu0 0
      %1013 = vmatpush1.bf16.msra.mxu0 %v985
      %1014 = vmatprep.subr.bf16.mxu0 0
      %1015 = vmatpush2.bf16.msra.mxu0 0
      %1016 = vmatprep.subr.bf16.mxu0 0
      %1017 = vmatpush2.bf16.msra.mxu0 0
      %1018 = vmatprep.subr.bf16.mxu0 0
      %1019 = vmatpush2.bf16.msra.mxu0 0
      %1020 = vmatprep.subr.bf16.mxu0 0
      %1021 = vmatpush2.bf16.msra.mxu0 0
      %1022 = vmatprep.subr.bf16.mxu0 0
      %1023 = vmatpush2.bf16.msra.mxu0 0
      %1024 = vmatprep.subr.bf16.mxu0 0
      %1025 = vmatpush2.bf16.msra.mxu0 0
      %1026 = vmatprep.subr.bf16.mxu0 0
      %1027 = vmatpush2.bf16.msra.mxu0 0
      %1028 = vmatprep.subr.bf16.mxu0 0
      %1029 = vmatpush2.bf16.msra.mxu0 0
      %1030 = vmatprep.mubr.bf16.mxu0 0
      %1031 = vmatmul.mubr.bf16.gmra.mxu0 %v987
      %v1032 = vpop.f32.mrf.mxu0
      %v1033 = vadd.f32 0.0, %v1032
      %v1034 = vpop.f32.mrf.mxu0
      %v1035 = vpop.f32.mrf.mxu0
      %v1036 = vadd.f32 0.0, %v1035
      %v1037 = vpop.f32.mrf.mxu0
      %1038 = vmatprep.mubr.bf16.mxu0 0
      %1039 = vmatmul.mubr.bf16.gmra.mxu0 %v990
      %v1040 = vpop.f32.mrf.mxu0
      %v1041 = vadd.f32 0.0, %v1040
      %v1042 = vpop.f32.mrf.mxu0
      %v1043 = vpop.f32.mrf.mxu0
      %v1044 = vadd.f32 0.0, %v1043
      %v1045 = vpop.f32.mrf.mxu0
      %1046 = vmatprep.mubr.bf16.mxu0 0
      %1047 = vmatmul.mubr.bf16.gmra.mxu0 %v993
      %v1048 = vpop.f32.mrf.mxu0
      %v1049 = vadd.f32 0.0, %v1048
      %v1050 = vpop.f32.mrf.mxu0
      %v1051 = vpop.f32.mrf.mxu0
      %v1052 = vadd.f32 0.0, %v1051
      %v1053 = vpop.f32.mrf.mxu0
      %1054 = vmatprep.mubr.bf16.mxu0 0
      %1055 = vmatmul.mubr.bf16.gmra.mxu0 %v996
      %v1056 = vpop.f32.mrf.mxu0
      %v1057 = vadd.f32 0.0, %v1056
      %v1058 = vpop.f32.mrf.mxu0
      %v1059 = vpop.f32.mrf.mxu0
      %v1060 = vadd.f32 0.0, %v1059
      %v1061 = vpop.f32.mrf.mxu0
      %1062 = vdwg.mxu0
      %v1064 = vsel %vm383, %v658, 0
      %v1067 = vsel %vm383, %v659, 0
      %v1070 = vsel %vm383, %v660, 0
      %v1073 = vsel %vm383, %v661, 0
      %1075 = vmatprep.subr.bf16.mxu0 0
      %1076 = vmatpush1.bf16.msra.mxu0 0
      %1077 = vmatprep.subr.bf16.mxu0 0
      %1078 = vmatpush1.bf16.msra.mxu0 0
      %1079 = vmatprep.subr.bf16.mxu0 0
      %1080 = vmatpush1.bf16.msra.mxu0 0
      %1081 = vmatprep.subr.bf16.mxu0 0
      %1082 = vmatpush1.bf16.msra.mxu0 0
      %1083 = vmatprep.subr.bf16.mxu0 0
      %1084 = vmatpush1.bf16.msra.mxu0 0
      %1085 = vmatprep.subr.bf16.mxu0 0
      %1086 = vmatpush1.bf16.msra.mxu0 0
      %1087 = vmatprep.subr.bf16.mxu0 0
      %1088 = vmatpush1.bf16.msra.mxu0 0
      %1089 = vmatprep.subr.bf16.mxu0 0
      %1090 = vmatpush1.bf16.msra.mxu0 %v662
      %1091 = vmatprep.subr.bf16.mxu0 0
      %1092 = vmatpush2.bf16.msra.mxu0 0
      %1093 = vmatprep.subr.bf16.mxu0 0
      %1094 = vmatpush2.bf16.msra.mxu0 0
      %1095 = vmatprep.subr.bf16.mxu0 0
      %1096 = vmatpush2.bf16.msra.mxu0 0
      %1097 = vmatprep.subr.bf16.mxu0 0
      %1098 = vmatpush2.bf16.msra.mxu0 0
      %1099 = vmatprep.subr.bf16.mxu0 0
      %1100 = vmatpush2.bf16.msra.mxu0 0
      %1101 = vmatprep.subr.bf16.mxu0 0
      %1102 = vmatpush2.bf16.msra.mxu0 0
      %1103 = vmatprep.subr.bf16.mxu0 0
      %1104 = vmatpush2.bf16.msra.mxu0 0
      %1105 = vmatprep.subr.bf16.mxu0 0
      %1106 = vmatpush2.bf16.msra.mxu0 0
      %1107 = vmatprep.mubr.bf16.mxu0 0
      %1108 = vmatmul.mubr.bf16.gmra.mxu0 %v1064
      %v1109 = vpop.f32.mrf.mxu0
      %v1110 = vadd.f32 %v1033, %v1109
      %v1111 = vpop.f32.mrf.mxu0
      %v1112 = vpop.f32.mrf.mxu0
      %v1113 = vadd.f32 %v1036, %v1112
      %v1114 = vpop.f32.mrf.mxu0
      %1115 = vmatprep.mubr.bf16.mxu0 0
      %1116 = vmatmul.mubr.bf16.gmra.mxu0 %v1067
      %v1117 = vpop.f32.mrf.mxu0
      %v1118 = vadd.f32 %v1041, %v1117
      %v1119 = vpop.f32.mrf.mxu0
      %v1120 = vpop.f32.mrf.mxu0
      %v1121 = vadd.f32 %v1044, %v1120
      %v1122 = vpop.f32.mrf.mxu0
      %1123 = vmatprep.mubr.bf16.mxu0 0
      %1124 = vmatmul.mubr.bf16.gmra.mxu0 %v1070
      %v1125 = vpop.f32.mrf.mxu0
      %v1126 = vadd.f32 %v1049, %v1125
      %v1127 = vpop.f32.mrf.mxu0
      %v1128 = vpop.f32.mrf.mxu0
      %v1129 = vadd.f32 %v1052, %v1128
      %v1130 = vpop.f32.mrf.mxu0
      %1131 = vmatprep.mubr.bf16.mxu0 0
      %1132 = vmatmul.mubr.bf16.gmra.mxu0 %v1073
      %v1133 = vpop.f32.mrf.mxu0
      %v1134 = vadd.f32 %v1057, %v1133
      %v1135 = vpop.f32.mrf.mxu0
      %v1136 = vpop.f32.mrf.mxu0
      %v1137 = vadd.f32 %v1060, %v1136
      %v1138 = vpop.f32.mrf.mxu0
      %1139 = vdwg.mxu0
      %1140 = vrot.lane.b32.xlu0 %v369, 96
      %v1141 = vpop.permute.xlu0 %1140
      %1142 = vrot.lane.b32.xlu0 %v370, 96
      %v1143 = vpop.permute.xlu0 %1142
      %1144 = vrot.lane.b32.xlu0 %v371, 96
      %v1145 = vpop.permute.xlu0 %1144
      %1146 = vrot.lane.b32.xlu0 %v372, 96
      %v1147 = vpop.permute.xlu0 %1146
      %1148 = vrot.lane.b32.xlu0 %v373, 96
      %v1149 = vpop.permute.xlu0 %1148
      %1150 = vrot.lane.b32.xlu0 %v374, 96
      %v1151 = vpop.permute.xlu0 %1150
      %1152 = vrot.lane.b32.xlu0 %v375, 96
      %v1153 = vpop.permute.xlu0 %1152
      %1154 = vrot.lane.b32.xlu0 %v376, 96
      %v1155 = vpop.permute.xlu0 %1154
      %1156 = vrot.lane.b32.xlu0 %v377, 96
      %v1157 = vpop.permute.xlu0 %1156
      %v1159 = vsel %vm383, %v1141, 0
      %v1162 = vsel %vm383, %v1143, 0
      %v1165 = vsel %vm383, %v1145, 0
      %v1168 = vsel %vm383, %v1147, 0
      %v1171 = vsel %vm383, %v1149, 0
      %v1174 = vsel %vm383, %v1151, 0
      %v1177 = vsel %vm383, %v1153, 0
      %v1180 = vsel %vm383, %v1155, 0
      %v1183 = vsel %vm383, %v1157, 0
      %1185 = vmatprep.subr.bf16.mxu0 0
      %1186 = vmatpush1.bf16.xpose.msra.mxu0 0
      %1187 = vmatprep.subr.bf16.mxu0 0
      %1188 = vmatpush1.bf16.xpose.msra.mxu0 0
      %1189 = vmatprep.subr.bf16.mxu0 0
      %1190 = vmatpush1.bf16.xpose.msra.mxu0 0
      %1191 = vmatprep.subr.bf16.mxu0 0
      %1192 = vmatpush1.bf16.xpose.msra.mxu0 %v1183
      %1193 = vmatprep.subr.bf16.mxu0 0
      %1194 = vmatpush1.bf16.xpose.msra.mxu0 %v1180
      %1195 = vmatprep.subr.bf16.mxu0 0
      %1196 = vmatpush1.bf16.xpose.msra.mxu0 %v1177
      %1197 = vmatprep.subr.bf16.mxu0 0
      %1198 = vmatpush1.bf16.xpose.msra.mxu0 %v1174
      %1199 = vmatprep.subr.bf16.mxu0 0
      %1200 = vmatpush1.bf16.xpose.msra.mxu0 %v1171
      %1201 = vmatprep.subr.bf16.mxu0 0
      %1202 = vmatpush2.bf16.xpose.msra.mxu0 0
      %1203 = vmatprep.subr.bf16.mxu0 0
      %1204 = vmatpush2.bf16.xpose.msra.mxu0 0
      %1205 = vmatprep.subr.bf16.mxu0 0
      %1206 = vmatpush2.bf16.xpose.msra.mxu0 0
      %1207 = vmatprep.subr.bf16.mxu0 0
      %1208 = vmatpush2.bf16.xpose.msra.mxu0 0
      %1209 = vmatprep.subr.bf16.mxu0 0
      %1210 = vmatpush2.bf16.xpose.msra.mxu0 0
      %1211 = vmatprep.subr.bf16.mxu0 0
      %1212 = vmatpush2.bf16.xpose.msra.mxu0 0
      %1213 = vmatprep.subr.bf16.mxu0 0
      %1214 = vmatpush2.bf16.xpose.msra.mxu0 0
      %1215 = vmatprep.subr.bf16.mxu0 0
      %1216 = vmatpush2.bf16.xpose.msra.mxu0 0
      %1217 = vmatprep.mubr.bf16.mxu0 0
      %1218 = vmatmul.mubr.bf16.gmra.mxu0 %v1159
      %v1219 = vpop.f32.mrf.mxu0
      %v1220 = vadd.f32 0.0, %v1219
      %v1221 = vpop.f32.mrf.mxu0
      %v1222 = vpop.f32.mrf.mxu0
      %v1223 = vadd.f32 0.0, %v1222
      %v1224 = vpop.f32.mrf.mxu0
      %1225 = vmatprep.mubr.bf16.mxu0 0
      %1226 = vmatmul.mubr.bf16.gmra.mxu0 %v1162
      %v1227 = vpop.f32.mrf.mxu0
      %v1228 = vadd.f32 0.0, %v1227
      %v1229 = vpop.f32.mrf.mxu0
      %v1230 = vpop.f32.mrf.mxu0
      %v1231 = vadd.f32 0.0, %v1230
      %v1232 = vpop.f32.mrf.mxu0
      %1233 = vmatprep.mubr.bf16.mxu0 0
      %1234 = vmatmul.mubr.bf16.gmra.mxu0 %v1165
      %v1235 = vpop.f32.mrf.mxu0
      %v1236 = vadd.f32 0.0, %v1235
      %v1237 = vpop.f32.mrf.mxu0
      %v1238 = vpop.f32.mrf.mxu0
      %v1239 = vadd.f32 0.0, %v1238
      %v1240 = vpop.f32.mrf.mxu0
      %1241 = vmatprep.mubr.bf16.mxu0 0
      %1242 = vmatmul.mubr.bf16.gmra.mxu0 %v1168
      %v1243 = vpop.f32.mrf.mxu0
      %v1244 = vadd.f32 0.0, %v1243
      %v1245 = vpop.f32.mrf.mxu0
      %v1246 = vpop.f32.mrf.mxu0
      %v1247 = vadd.f32 0.0, %v1246
      %v1248 = vpop.f32.mrf.mxu0
      %1249 = vdwg.mxu0
      %v1250 = vmul.f32 %v1220, 0.25
      %v1251 = vmul.f32 %v1223, 0.25
      %v1252 = vmul.f32 %v1228, 0.25
      %v1253 = vmul.f32 %v1231, 0.25
      %v1254 = vmul.f32 %v1236, 0.25
      %v1255 = vmul.f32 %v1239, 0.25
      %v1256 = vmul.f32 %v1244, 0.25
      %v1257 = vmul.f32 %v1247, 0.25
      %v1258 = vsel %vm484, %v1250, -inf
      %1259 = vmax.xlane.f32.xlu0 %v1258
      %v1260 = vpop.xlane.xlu0 %1259
      %v1261 = vsel %vm484, %v1251, -inf
      %1262 = vmax.xlane.f32.xlu0 %v1261
      %v1263 = vpop.xlane.xlu0 %1262
      %v1264 = vsel %vm484, %v1252, -inf
      %1265 = vmax.xlane.f32.xlu0 %v1264
      %v1266 = vpop.xlane.xlu0 %1265
      %v1267 = vsel %vm484, %v1253, -inf
      %1268 = vmax.xlane.f32.xlu0 %v1267
      %v1269 = vpop.xlane.xlu0 %1268
      %v1270 = vsel %vm484, %v1254, -inf
      %1271 = vmax.xlane.f32.xlu0 %v1270
      %v1272 = vpop.xlane.xlu0 %1271
      %v1273 = vsel %vm484, %v1255, -inf
      %1274 = vmax.xlane.f32.xlu0 %v1273
      %v1275 = vpop.xlane.xlu0 %1274
      %v1276 = vsel %vm484, %v1256, -inf
      %1277 = vmax.xlane.f32.xlu0 %v1276
      %v1278 = vpop.xlane.xlu0 %1277
      %v1279 = vsel %vm484, %v1257, -inf
      %1280 = vmax.xlane.f32.xlu0 %v1279
      %v1281 = vpop.xlane.xlu0 %1280
      %v1282 = vsub.f32 %v1250, %v1260
      %v1283 = vsub.f32 %v1251, %v1263
      %v1284 = vsub.f32 %v1252, %v1266
      %v1285 = vsub.f32 %v1253, %v1269
      %v1286 = vsub.f32 %v1254, %v1272
      %v1287 = vsub.f32 %v1255, %v1275
      %v1288 = vsub.f32 %v1256, %v1278
      %v1289 = vsub.f32 %v1257, %v1281
      %v1290 = vmul.f32 %v1282, 1.442695
      %v1291 = vpow.pop %v1290
      %v1292 = vmul.f32 %v1283, 1.442695
      %v1293 = vpow.pop %v1292
      %v1294 = vmul.f32 %v1284, 1.442695
      %v1295 = vpow.pop %v1294
      %v1296 = vmul.f32 %v1285, 1.442695
      %v1297 = vpow.pop %v1296
      %v1298 = vmul.f32 %v1286, 1.442695
      %v1299 = vpow.pop %v1298
      %v1300 = vmul.f32 %v1287, 1.442695
      %v1301 = vpow.pop %v1300
      %v1302 = vmul.f32 %v1288, 1.442695
      %v1303 = vpow.pop %v1302
      %v1304 = vmul.f32 %v1289, 1.442695
      %v1305 = vpow.pop %v1304
      %v1306 = vsel %vm484, %v1291, 0.0
      %1307 = vadd.xlane.f32.xlu0 %v1306
      %v1308 = vpop.xlane.xlu0 %1307
      %v1309 = vsel %vm484, %v1293, 0.0
      %1310 = vadd.xlane.f32.xlu0 %v1309
      %v1311 = vpop.xlane.xlu0 %1310
      %v1312 = vsel %vm484, %v1295, 0.0
      %1313 = vadd.xlane.f32.xlu0 %v1312
      %v1314 = vpop.xlane.xlu0 %1313
      %v1315 = vsel %vm484, %v1297, 0.0
      %1316 = vadd.xlane.f32.xlu0 %v1315
      %v1317 = vpop.xlane.xlu0 %1316
      %v1318 = vsel %vm484, %v1299, 0.0
      %1319 = vadd.xlane.f32.xlu0 %v1318
      %v1320 = vpop.xlane.xlu0 %1319
      %v1321 = vsel %vm484, %v1301, 0.0
      %1322 = vadd.xlane.f32.xlu0 %v1321
      %v1323 = vpop.xlane.xlu0 %1322
      %v1324 = vsel %vm484, %v1303, 0.0
      %1325 = vadd.xlane.f32.xlu0 %v1324
      %v1326 = vpop.xlane.xlu0 %1325
      %v1327 = vsel %vm484, %v1305, 0.0
      %1328 = vadd.xlane.f32.xlu0 %v1327
      %v1329 = vpop.xlane.xlu0 %1328
      %v1330 = vrcp.pop %v1308
      %v1331 = vmul.f32 %v1291, %v1330
      %v1332 = vrcp.pop %v1311
      %v1333 = vmul.f32 %v1293, %v1332
      %v1334 = vrcp.pop %v1314
      %v1335 = vmul.f32 %v1295, %v1334
      %v1336 = vrcp.pop %v1317
      %v1337 = vmul.f32 %v1297, %v1336
      %v1338 = vrcp.pop %v1320
      %v1339 = vmul.f32 %v1299, %v1338
      %v1340 = vrcp.pop %v1323
      %v1341 = vmul.f32 %v1301, %v1340
      %v1342 = vrcp.pop %v1326
      %v1343 = vmul.f32 %v1303, %v1342
      %v1344 = vrcp.pop %v1329
      %v1345 = vmul.f32 %v1305, %v1344
      %v1346 = vpack.c.bf16 %v1333, %v1331
      %v1347 = vpack.c.bf16 %v1337, %v1335
      %v1348 = vpack.c.bf16 %v1341, %v1339
      %v1349 = vpack.c.bf16 %v1345, %v1343
      %1350 = vrot.lane.b32.xlu0 %v378, 96
      %v1351 = vpop.permute.xlu0 %1350
      %1352 = vrot.lane.b32.xlu0 %v379, 96
      %v1353 = vpop.permute.xlu0 %1352
      %1354 = vrot.lane.b32.xlu0 %v380, 96
      %v1355 = vpop.permute.xlu0 %1354
      %1356 = vrot.lane.b32.xlu0 %v381, 96
      %v1357 = vpop.permute.xlu0 %1356
      %1358 = vrot.lane.b32.xlu0 %v382, 96
      %v1359 = vpop.permute.xlu0 %1358
      %v1365 = vsel %vm484, %v1346, 0
      %v1368 = vsel %vm484, %v1347, 0
      %v1371 = vsel %vm484, %v1348, 0
      %v1374 = vsel %vm484, %v1349, 0
      %v1377 = vsel %vm589, %v1359, 0
      %1379 = vmatprep.subr.bf16.mxu0 0
      %1380 = vmatpush1.bf16.msra.mxu0 0
      %1381 = vmatprep.subr.bf16.mxu0 0
      %1382 = vmatpush1.bf16.msra.mxu0 0
      %1383 = vmatprep.subr.bf16.mxu0 0
      %1384 = vmatpush1.bf16.msra.mxu0 0
      %1385 = vmatprep.subr.bf16.mxu0 0
      %1386 = vmatpush1.bf16.msra.mxu0 %v1377
      %1387 = vmatprep.subr.bf16.mxu0 0
      %1388 = vmatpush1.bf16.msra.mxu0 %v1357
      %1389 = vmatprep.subr.bf16.mxu0 0
      %1390 = vmatpush1.bf16.msra.mxu0 %v1355
      %1391 = vmatprep.subr.bf16.mxu0 0
      %1392 = vmatpush1.bf16.msra.mxu0 %v1353
      %1393 = vmatprep.subr.bf16.mxu0 0
      %1394 = vmatpush1.bf16.msra.mxu0 %v1351
      %1395 = vmatprep.subr.bf16.mxu0 0
      %1396 = vmatpush2.bf16.msra.mxu0 0
      %1397 = vmatprep.subr.bf16.mxu0 0
      %1398 = vmatpush2.bf16.msra.mxu0 0
      %1399 = vmatprep.subr.bf16.mxu0 0
      %1400 = vmatpush2.bf16.msra.mxu0 0
      %1401 = vmatprep.subr.bf16.mxu0 0
      %1402 = vmatpush2.bf16.msra.mxu0 0
      %1403 = vmatprep.subr.bf16.mxu0 0
      %1404 = vmatpush2.bf16.msra.mxu0 0
      %1405 = vmatprep.subr.bf16.mxu0 0
      %1406 = vmatpush2.bf16.msra.mxu0 0
      %1407 = vmatprep.subr.bf16.mxu0 0
      %1408 = vmatpush2.bf16.msra.mxu0 0
      %1409 = vmatprep.subr.bf16.mxu0 0
      %1410 = vmatpush2.bf16.msra.mxu0 0
      %1411 = vmatprep.mubr.bf16.mxu0 0
      %1412 = vmatmul.mubr.bf16.gmra.mxu0 %v1365
      %v1413 = vpop.f32.mrf.mxu0
      %v1414 = vadd.f32 0.0, %v1413
      %v1415 = vpop.f32.mrf.mxu0
      %v1416 = vpop.f32.mrf.mxu0
      %v1417 = vadd.f32 0.0, %v1416
      %v1418 = vpop.f32.mrf.mxu0
      %1419 = vmatprep.mubr.bf16.mxu0 0
      %1420 = vmatmul.mubr.bf16.gmra.mxu0 %v1368
      %v1421 = vpop.f32.mrf.mxu0
      %v1422 = vadd.f32 0.0, %v1421
      %v1423 = vpop.f32.mrf.mxu0
      %v1424 = vpop.f32.mrf.mxu0
      %v1425 = vadd.f32 0.0, %v1424
      %v1426 = vpop.f32.mrf.mxu0
      %1427 = vmatprep.mubr.bf16.mxu0 0
      %1428 = vmatmul.mubr.bf16.gmra.mxu0 %v1371
      %v1429 = vpop.f32.mrf.mxu0
      %v1430 = vadd.f32 0.0, %v1429
      %v1431 = vpop.f32.mrf.mxu0
      %v1432 = vpop.f32.mrf.mxu0
      %v1433 = vadd.f32 0.0, %v1432
      %v1434 = vpop.f32.mrf.mxu0
      %1435 = vmatprep.mubr.bf16.mxu0 0
      %1436 = vmatmul.mubr.bf16.gmra.mxu0 %v1374
      %v1437 = vpop.f32.mrf.mxu0
      %v1438 = vadd.f32 0.0, %v1437
      %v1439 = vpop.f32.mrf.mxu0
      %v1440 = vpop.f32.mrf.mxu0
      %v1441 = vadd.f32 0.0, %v1440
      %v1442 = vpop.f32.mrf.mxu0
      %1443 = vdwg.mxu0
      %v1444 = vpack.c.bf16 %v1417, %v1414
      %v1445 = vpack.c.bf16 %v1425, %v1422
      %v1446 = vpack.c.bf16 %v1433, %v1430
      %v1447 = vpack.c.bf16 %v1441, %v1438
      %v1448 = vpack.c.bf16 %v366, %v365
      %v1450 = vsel %vm383, %v1444, 0
      %v1453 = vsel %vm383, %v1445, 0
      %v1456 = vsel %vm383, %v1446, 0
      %v1459 = vsel %vm383, %v1447, 0
      %1461 = vmatprep.subr.bf16.mxu0 0
      %1462 = vmatpush1.bf16.msra.mxu0 0
      %1463 = vmatprep.subr.bf16.mxu0 0
      %1464 = vmatpush1.bf16.msra.mxu0 0
      %1465 = vmatprep.subr.bf16.mxu0 0
      %1466 = vmatpush1.bf16.msra.mxu0 0
      %1467 = vmatprep.subr.bf16.mxu0 0
      %1468 = vmatpush1.bf16.msra.mxu0 0
      %1469 = vmatprep.subr.bf16.mxu0 0
      %1470 = vmatpush1.bf16.msra.mxu0 0
      %1471 = vmatprep.subr.bf16.mxu0 0
      %1472 = vmatpush1.bf16.msra.mxu0 0
      %1473 = vmatprep.subr.bf16.mxu0 0
      %1474 = vmatpush1.bf16.msra.mxu0 0
      %1475 = vmatprep.subr.bf16.mxu0 0
      %1476 = vmatpush1.bf16.msra.mxu0 %v1448
      %1477 = vmatprep.subr.bf16.mxu0 0
      %1478 = vmatpush2.bf16.msra.mxu0 0
      %1479 = vmatprep.subr.bf16.mxu0 0
      %1480 = vmatpush2.bf16.msra.mxu0 0
      %1481 = vmatprep.subr.bf16.mxu0 0
      %1482 = vmatpush2.bf16.msra.mxu0 0
      %1483 = vmatprep.subr.bf16.mxu0 0
      %1484 = vmatpush2.bf16.msra.mxu0 0
      %1485 = vmatprep.subr.bf16.mxu0 0
      %1486 = vmatpush2.bf16.msra.mxu0 0
      %1487 = vmatprep.subr.bf16.mxu0 0
      %1488 = vmatpush2.bf16.msra.mxu0 0
      %1489 = vmatprep.subr.bf16.mxu0 0
      %1490 = vmatpush2.bf16.msra.mxu0 0
      %1491 = vmatprep.subr.bf16.mxu0 0
      %1492 = vmatpush2.bf16.msra.mxu0 0
      %1493 = vmatprep.mubr.bf16.mxu0 0
      %1494 = vmatmul.mubr.bf16.gmra.mxu0 %v1450
      %v1495 = vpop.f32.mrf.mxu0
      %v1496 = vadd.f32 0.0, %v1495
      %v1497 = vpop.f32.mrf.mxu0
      %v1498 = vpop.f32.mrf.mxu0
      %v1499 = vadd.f32 0.0, %v1498
      %v1500 = vpop.f32.mrf.mxu0
      %1501 = vmatprep.mubr.bf16.mxu0 0
      %1502 = vmatmul.mubr.bf16.gmra.mxu0 %v1453
      %v1503 = vpop.f32.mrf.mxu0
      %v1504 = vadd.f32 0.0, %v1503
      %v1505 = vpop.f32.mrf.mxu0
      %v1506 = vpop.f32.mrf.mxu0
      %v1507 = vadd.f32 0.0, %v1506
      %v1508 = vpop.f32.mrf.mxu0
      %1509 = vmatprep.mubr.bf16.mxu0 0
      %1510 = vmatmul.mubr.bf16.gmra.mxu0 %v1456
      %v1511 = vpop.f32.mrf.mxu0
      %v1512 = vadd.f32 0.0, %v1511
      %v1513 = vpop.f32.mrf.mxu0
      %v1514 = vpop.f32.mrf.mxu0
      %v1515 = vadd.f32 0.0, %v1514
      %v1516 = vpop.f32.mrf.mxu0
      %1517 = vmatprep.mubr.bf16.mxu0 0
      %1518 = vmatmul.mubr.bf16.gmra.mxu0 %v1459
      %v1519 = vpop.f32.mrf.mxu0
      %v1520 = vadd.f32 0.0, %v1519
      %v1521 = vpop.f32.mrf.mxu0
      %v1522 = vpop.f32.mrf.mxu0
      %v1523 = vadd.f32 0.0, %v1522
      %v1524 = vpop.f32.mrf.mxu0
      %1525 = vdwg.mxu0
      %v1526 = vadd.f32 %v1110, %v1496
      %v1527 = vadd.f32 %v1113, %v1499
      %v1528 = vadd.f32 %v1118, %v1504
      %v1529 = vadd.f32 %v1121, %v1507
      %v1530 = vadd.f32 %v1126, %v1512
      %v1531 = vadd.f32 %v1129, %v1515
      %v1532 = vadd.f32 %v1134, %v1520
      %v1533 = vadd.f32 %v1137, %v1523
      %1534 = vrot.lane.b32.xlu0 %v369, 80
      %v1535 = vpop.permute.xlu0 %1534
      %1536 = vrot.lane.b32.xlu0 %v370, 80
      %v1537 = vpop.permute.xlu0 %1536
      %1538 = vrot.lane.b32.xlu0 %v371, 80
      %v1539 = vpop.permute.xlu0 %1538
      %1540 = vrot.lane.b32.xlu0 %v372, 80
      %v1541 = vpop.permute.xlu0 %1540
      %1542 = vrot.lane.b32.xlu0 %v373, 80
      %v1543 = vpop.permute.xlu0 %1542
      %1544 = vrot.lane.b32.xlu0 %v374, 80
      %v1545 = vpop.permute.xlu0 %1544
      %1546 = vrot.lane.b32.xlu0 %v375, 80
      %v1547 = vpop.permute.xlu0 %1546
      %1548 = vrot.lane.b32.xlu0 %v376, 80
      %v1549 = vpop.permute.xlu0 %1548
      %1550 = vrot.lane.b32.xlu0 %v377, 80
      %v1551 = vpop.permute.xlu0 %1550
      %v1553 = vsel %vm383, %v1535, 0
      %v1556 = vsel %vm383, %v1537, 0
      %v1559 = vsel %vm383, %v1539, 0
      %v1562 = vsel %vm383, %v1541, 0
      %v1565 = vsel %vm383, %v1543, 0
      %v1568 = vsel %vm383, %v1545, 0
      %v1571 = vsel %vm383, %v1547, 0
      %v1574 = vsel %vm383, %v1549, 0
      %v1577 = vsel %vm383, %v1551, 0
      %1579 = vmatprep.subr.bf16.mxu0 0
      %1580 = vmatpush1.bf16.xpose.msra.mxu0 0
      %1581 = vmatprep.subr.bf16.mxu0 0
      %1582 = vmatpush1.bf16.xpose.msra.mxu0 0
      %1583 = vmatprep.subr.bf16.mxu0 0
      %1584 = vmatpush1.bf16.xpose.msra.mxu0 0
      %1585 = vmatprep.subr.bf16.mxu0 0
      %1586 = vmatpush1.bf16.xpose.msra.mxu0 %v1577
      %1587 = vmatprep.subr.bf16.mxu0 0
      %1588 = vmatpush1.bf16.xpose.msra.mxu0 %v1574
      %1589 = vmatprep.subr.bf16.mxu0 0
      %1590 = vmatpush1.bf16.xpose.msra.mxu0 %v1571
      %1591 = vmatprep.subr.bf16.mxu0 0
      %1592 = vmatpush1.bf16.xpose.msra.mxu0 %v1568
      %1593 = vmatprep.subr.bf16.mxu0 0
      %1594 = vmatpush1.bf16.xpose.msra.mxu0 %v1565
      %1595 = vmatprep.subr.bf16.mxu0 0
      %1596 = vmatpush2.bf16.xpose.msra.mxu0 0
      %1597 = vmatprep.subr.bf16.mxu0 0
      %1598 = vmatpush2.bf16.xpose.msra.mxu0 0
      %1599 = vmatprep.subr.bf16.mxu0 0
      %1600 = vmatpush2.bf16.xpose.msra.mxu0 0
      %1601 = vmatprep.subr.bf16.mxu0 0
      %1602 = vmatpush2.bf16.xpose.msra.mxu0 0
      %1603 = vmatprep.subr.bf16.mxu0 0
      %1604 = vmatpush2.bf16.xpose.msra.mxu0 0
      %1605 = vmatprep.subr.bf16.mxu0 0
      %1606 = vmatpush2.bf16.xpose.msra.mxu0 0
      %1607 = vmatprep.subr.bf16.mxu0 0
      %1608 = vmatpush2.bf16.xpose.msra.mxu0 0
      %1609 = vmatprep.subr.bf16.mxu0 0
      %1610 = vmatpush2.bf16.xpose.msra.mxu0 0
      %1611 = vmatprep.mubr.bf16.mxu0 0
      %1612 = vmatmul.mubr.bf16.gmra.mxu0 %v1553
      %v1613 = vpop.f32.mrf.mxu0
      %v1614 = vadd.f32 0.0, %v1613
      %v1615 = vpop.f32.mrf.mxu0
      %v1616 = vpop.f32.mrf.mxu0
      %v1617 = vadd.f32 0.0, %v1616
      %v1618 = vpop.f32.mrf.mxu0
      %1619 = vmatprep.mubr.bf16.mxu0 0
      %1620 = vmatmul.mubr.bf16.gmra.mxu0 %v1556
      %v1621 = vpop.f32.mrf.mxu0
      %v1622 = vadd.f32 0.0, %v1621
      %v1623 = vpop.f32.mrf.mxu0
      %v1624 = vpop.f32.mrf.mxu0
      %v1625 = vadd.f32 0.0, %v1624
      %v1626 = vpop.f32.mrf.mxu0
      %1627 = vmatprep.mubr.bf16.mxu0 0
      %1628 = vmatmul.mubr.bf16.gmra.mxu0 %v1559
      %v1629 = vpop.f32.mrf.mxu0
      %v1630 = vadd.f32 0.0, %v1629
      %v1631 = vpop.f32.mrf.mxu0
      %v1632 = vpop.f32.mrf.mxu0
      %v1633 = vadd.f32 0.0, %v1632
      %v1634 = vpop.f32.mrf.mxu0
      %1635 = vmatprep.mubr.bf16.mxu0 0
      %1636 = vmatmul.mubr.bf16.gmra.mxu0 %v1562
      %v1637 = vpop.f32.mrf.mxu0
      %v1638 = vadd.f32 0.0, %v1637
      %v1639 = vpop.f32.mrf.mxu0
      %v1640 = vpop.f32.mrf.mxu0
      %v1641 = vadd.f32 0.0, %v1640
      %v1642 = vpop.f32.mrf.mxu0
      %1643 = vdwg.mxu0
      %v1644 = vmul.f32 %v1614, 0.25
      %v1645 = vmul.f32 %v1617, 0.25
      %v1646 = vmul.f32 %v1622, 0.25
      %v1647 = vmul.f32 %v1625, 0.25
      %v1648 = vmul.f32 %v1630, 0.25
      %v1649 = vmul.f32 %v1633, 0.25
      %v1650 = vmul.f32 %v1638, 0.25
      %v1651 = vmul.f32 %v1641, 0.25
      %v1652 = vsel %vm484, %v1644, -inf
      %1653 = vmax.xlane.f32.xlu0 %v1652
      %v1654 = vpop.xlane.xlu0 %1653
      %v1655 = vsel %vm484, %v1645, -inf
      %1656 = vmax.xlane.f32.xlu0 %v1655
      %v1657 = vpop.xlane.xlu0 %1656
      %v1658 = vsel %vm484, %v1646, -inf
      %1659 = vmax.xlane.f32.xlu0 %v1658
      %v1660 = vpop.xlane.xlu0 %1659
      %v1661 = vsel %vm484, %v1647, -inf
      %1662 = vmax.xlane.f32.xlu0 %v1661
      %v1663 = vpop.xlane.xlu0 %1662
      %v1664 = vsel %vm484, %v1648, -inf
      %1665 = vmax.xlane.f32.xlu0 %v1664
      %v1666 = vpop.xlane.xlu0 %1665
      %v1667 = vsel %vm484, %v1649, -inf
      %1668 = vmax.xlane.f32.xlu0 %v1667
      %v1669 = vpop.xlane.xlu0 %1668
      %v1670 = vsel %vm484, %v1650, -inf
      %1671 = vmax.xlane.f32.xlu0 %v1670
      %v1672 = vpop.xlane.xlu0 %1671
      %v1673 = vsel %vm484, %v1651, -inf
      %1674 = vmax.xlane.f32.xlu0 %v1673
      %v1675 = vpop.xlane.xlu0 %1674
      %v1676 = vsub.f32 %v1644, %v1654
      %v1677 = vsub.f32 %v1645, %v1657
      %v1678 = vsub.f32 %v1646, %v1660
      %v1679 = vsub.f32 %v1647, %v1663
      %v1680 = vsub.f32 %v1648, %v1666
      %v1681 = vsub.f32 %v1649, %v1669
      %v1682 = vsub.f32 %v1650, %v1672
      %v1683 = vsub.f32 %v1651, %v1675
      %v1684 = vmul.f32 %v1676, 1.442695
      %v1685 = vpow.pop %v1684
      %v1686 = vmul.f32 %v1677, 1.442695
      %v1687 = vpow.pop %v1686
      %v1688 = vmul.f32 %v1678, 1.442695
      %v1689 = vpow.pop %v1688
      %v1690 = vmul.f32 %v1679, 1.442695
      %v1691 = vpow.pop %v1690
      %v1692 = vmul.f32 %v1680, 1.442695
      %v1693 = vpow.pop %v1692
      %v1694 = vmul.f32 %v1681, 1.442695
      %v1695 = vpow.pop %v1694
      %v1696 = vmul.f32 %v1682, 1.442695
      %v1697 = vpow.pop %v1696
      %v1698 = vmul.f32 %v1683, 1.442695
      %v1699 = vpow.pop %v1698
      %v1700 = vsel %vm484, %v1685, 0.0
      %1701 = vadd.xlane.f32.xlu0 %v1700
      %v1702 = vpop.xlane.xlu0 %1701
      %v1703 = vsel %vm484, %v1687, 0.0
      %1704 = vadd.xlane.f32.xlu0 %v1703
      %v1705 = vpop.xlane.xlu0 %1704
      %v1706 = vsel %vm484, %v1689, 0.0
      %1707 = vadd.xlane.f32.xlu0 %v1706
      %v1708 = vpop.xlane.xlu0 %1707
      %v1709 = vsel %vm484, %v1691, 0.0
      %1710 = vadd.xlane.f32.xlu0 %v1709
      %v1711 = vpop.xlane.xlu0 %1710
      %v1712 = vsel %vm484, %v1693, 0.0
      %1713 = vadd.xlane.f32.xlu0 %v1712
      %v1714 = vpop.xlane.xlu0 %1713
      %v1715 = vsel %vm484, %v1695, 0.0
      %1716 = vadd.xlane.f32.xlu0 %v1715
      %v1717 = vpop.xlane.xlu0 %1716
      %v1718 = vsel %vm484, %v1697, 0.0
      %1719 = vadd.xlane.f32.xlu0 %v1718
      %v1720 = vpop.xlane.xlu0 %1719
      %v1721 = vsel %vm484, %v1699, 0.0
      %1722 = vadd.xlane.f32.xlu0 %v1721
      %v1723 = vpop.xlane.xlu0 %1722
      %v1724 = vrcp.pop %v1702
      %v1725 = vmul.f32 %v1685, %v1724
      %v1726 = vrcp.pop %v1705
      %v1727 = vmul.f32 %v1687, %v1726
      %v1728 = vrcp.pop %v1708
      %v1729 = vmul.f32 %v1689, %v1728
      %v1730 = vrcp.pop %v1711
      %v1731 = vmul.f32 %v1691, %v1730
      %v1732 = vrcp.pop %v1714
      %v1733 = vmul.f32 %v1693, %v1732
      %v1734 = vrcp.pop %v1717
      %v1735 = vmul.f32 %v1695, %v1734
      %v1736 = vrcp.pop %v1720
      %v1737 = vmul.f32 %v1697, %v1736
      %v1738 = vrcp.pop %v1723
      %v1739 = vmul.f32 %v1699, %v1738
      %v1740 = vpack.c.bf16 %v1727, %v1725
      %v1741 = vpack.c.bf16 %v1731, %v1729
      %v1742 = vpack.c.bf16 %v1735, %v1733
      %v1743 = vpack.c.bf16 %v1739, %v1737
      %1744 = vrot.lane.b32.xlu0 %v378, 80
      %v1745 = vpop.permute.xlu0 %1744
      %1746 = vrot.lane.b32.xlu0 %v379, 80
      %v1747 = vpop.permute.xlu0 %1746
      %1748 = vrot.lane.b32.xlu0 %v380, 80
      %v1749 = vpop.permute.xlu0 %1748
      %1750 = vrot.lane.b32.xlu0 %v381, 80
      %v1751 = vpop.permute.xlu0 %1750
      %1752 = vrot.lane.b32.xlu0 %v382, 80
      %v1753 = vpop.permute.xlu0 %1752
      %v1759 = vsel %vm484, %v1740, 0
      %v1762 = vsel %vm484, %v1741, 0
      %v1765 = vsel %vm484, %v1742, 0
      %v1768 = vsel %vm484, %v1743, 0
      %v1771 = vsel %vm589, %v1753, 0
      %1773 = vmatprep.subr.bf16.mxu0 0
      %1774 = vmatpush1.bf16.msra.mxu0 0
      %1775 = vmatprep.subr.bf16.mxu0 0
      %1776 = vmatpush1.bf16.msra.mxu0 0
      %1777 = vmatprep.subr.bf16.mxu0 0
      %1778 = vmatpush1.bf16.msra.mxu0 0
      %1779 = vmatprep.subr.bf16.mxu0 0
      %1780 = vmatpush1.bf16.msra.mxu0 %v1771
      %1781 = vmatprep.subr.bf16.mxu0 0
      %1782 = vmatpush1.bf16.msra.mxu0 %v1751
      %1783 = vmatprep.subr.bf16.mxu0 0
      %1784 = vmatpush1.bf16.msra.mxu0 %v1749
      %1785 = vmatprep.subr.bf16.mxu0 0
      %1786 = vmatpush1.bf16.msra.mxu0 %v1747
      %1787 = vmatprep.subr.bf16.mxu0 0
      %1788 = vmatpush1.bf16.msra.mxu0 %v1745
      %1789 = vmatprep.subr.bf16.mxu0 0
      %1790 = vmatpush2.bf16.msra.mxu0 0
      %1791 = vmatprep.subr.bf16.mxu0 0
      %1792 = vmatpush2.bf16.msra.mxu0 0
      %1793 = vmatprep.subr.bf16.mxu0 0
      %1794 = vmatpush2.bf16.msra.mxu0 0
      %1795 = vmatprep.subr.bf16.mxu0 0
      %1796 = vmatpush2.bf16.msra.mxu0 0
      %1797 = vmatprep.subr.bf16.mxu0 0
      %1798 = vmatpush2.bf16.msra.mxu0 0
      %1799 = vmatprep.subr.bf16.mxu0 0
      %1800 = vmatpush2.bf16.msra.mxu0 0
      %1801 = vmatprep.subr.bf16.mxu0 0
      %1802 = vmatpush2.bf16.msra.mxu0 0
      %1803 = vmatprep.subr.bf16.mxu0 0
      %1804 = vmatpush2.bf16.msra.mxu0 0
      %1805 = vmatprep.mubr.bf16.mxu0 0
      %1806 = vmatmul.mubr.bf16.gmra.mxu0 %v1759
      %v1807 = vpop.f32.mrf.mxu0
      %v1808 = vadd.f32 0.0, %v1807
      %v1809 = vpop.f32.mrf.mxu0
      %v1810 = vpop.f32.mrf.mxu0
      %v1811 = vadd.f32 0.0, %v1810
      %v1812 = vpop.f32.mrf.mxu0
      %1813 = vmatprep.mubr.bf16.mxu0 0
      %1814 = vmatmul.mubr.bf16.gmra.mxu0 %v1762
      %v1815 = vpop.f32.mrf.mxu0
      %v1816 = vadd.f32 0.0, %v1815
      %v1817 = vpop.f32.mrf.mxu0
      %v1818 = vpop.f32.mrf.mxu0
      %v1819 = vadd.f32 0.0, %v1818
      %v1820 = vpop.f32.mrf.mxu0
      %1821 = vmatprep.mubr.bf16.mxu0 0
      %1822 = vmatmul.mubr.bf16.gmra.mxu0 %v1765
      %v1823 = vpop.f32.mrf.mxu0
      %v1824 = vadd.f32 0.0, %v1823
      %v1825 = vpop.f32.mrf.mxu0
      %v1826 = vpop.f32.mrf.mxu0
      %v1827 = vadd.f32 0.0, %v1826
      %v1828 = vpop.f32.mrf.mxu0
      %1829 = vmatprep.mubr.bf16.mxu0 0
      %1830 = vmatmul.mubr.bf16.gmra.mxu0 %v1768
      %v1831 = vpop.f32.mrf.mxu0
      %v1832 = vadd.f32 0.0, %v1831
      %v1833 = vpop.f32.mrf.mxu0
      %v1834 = vpop.f32.mrf.mxu0
      %v1835 = vadd.f32 0.0, %v1834
      %v1836 = vpop.f32.mrf.mxu0
      %1837 = vdwg.mxu0
      %v1838 = vpack.c.bf16 %v1811, %v1808
      %v1839 = vpack.c.bf16 %v1819, %v1816
      %v1840 = vpack.c.bf16 %v1827, %v1824
      %v1841 = vpack.c.bf16 %v1835, %v1832
      %v1842 = vpack.c.bf16 %v368, %v367
      %v1844 = vsel %vm383, %v1838, 0
      %v1847 = vsel %vm383, %v1839, 0
      %v1850 = vsel %vm383, %v1840, 0
      %v1853 = vsel %vm383, %v1841, 0
      %1855 = vmatprep.subr.bf16.mxu0 0
      %1856 = vmatpush1.bf16.msra.mxu0 0
      %1857 = vmatprep.subr.bf16.mxu0 0
      %1858 = vmatpush1.bf16.msra.mxu0 0
      %1859 = vmatprep.subr.bf16.mxu0 0
      %1860 = vmatpush1.bf16.msra.mxu0 0
      %1861 = vmatprep.subr.bf16.mxu0 0
      %1862 = vmatpush1.bf16.msra.mxu0 0
      %1863 = vmatprep.subr.bf16.mxu0 0
      %1864 = vmatpush1.bf16.msra.mxu0 0
      %1865 = vmatprep.subr.bf16.mxu0 0
      %1866 = vmatpush1.bf16.msra.mxu0 0
      %1867 = vmatprep.subr.bf16.mxu0 0
      %1868 = vmatpush1.bf16.msra.mxu0 0
      %1869 = vmatprep.subr.bf16.mxu0 0
      %1870 = vmatpush1.bf16.msra.mxu0 %v1842
      %1871 = vmatprep.subr.bf16.mxu0 0
      %1872 = vmatpush2.bf16.msra.mxu0 0
      %1873 = vmatprep.subr.bf16.mxu0 0
      %1874 = vmatpush2.bf16.msra.mxu0 0
      %1875 = vmatprep.subr.bf16.mxu0 0
      %1876 = vmatpush2.bf16.msra.mxu0 0
      %1877 = vmatprep.subr.bf16.mxu0 0
      %1878 = vmatpush2.bf16.msra.mxu0 0
      %1879 = vmatprep.subr.bf16.mxu0 0
      %1880 = vmatpush2.bf16.msra.mxu0 0
      %1881 = vmatprep.subr.bf16.mxu0 0
      %1882 = vmatpush2.bf16.msra.mxu0 0
      %1883 = vmatprep.subr.bf16.mxu0 0
      %1884 = vmatpush2.bf16.msra.mxu0 0
      %1885 = vmatprep.subr.bf16.mxu0 0
      %1886 = vmatpush2.bf16.msra.mxu0 0
      %1887 = vmatprep.mubr.bf16.mxu0 0
      %1888 = vmatmul.mubr.bf16.gmra.mxu0 %v1844
      %v1889 = vpop.f32.mrf.mxu0
      %v1890 = vadd.f32 0.0, %v1889
      %v1891 = vpop.f32.mrf.mxu0
      %v1892 = vpop.f32.mrf.mxu0
      %v1893 = vadd.f32 0.0, %v1892
      %v1894 = vpop.f32.mrf.mxu0
      %1895 = vmatprep.mubr.bf16.mxu0 0
      %1896 = vmatmul.mubr.bf16.gmra.mxu0 %v1847
      %v1897 = vpop.f32.mrf.mxu0
      %v1898 = vadd.f32 0.0, %v1897
      %v1899 = vpop.f32.mrf.mxu0
      %v1900 = vpop.f32.mrf.mxu0
      %v1901 = vadd.f32 0.0, %v1900
      %v1902 = vpop.f32.mrf.mxu0
      %1903 = vmatprep.mubr.bf16.mxu0 0
      %1904 = vmatmul.mubr.bf16.gmra.mxu0 %v1850
      %v1905 = vpop.f32.mrf.mxu0
      %v1906 = vadd.f32 0.0, %v1905
      %v1907 = vpop.f32.mrf.mxu0
      %v1908 = vpop.f32.mrf.mxu0
      %v1909 = vadd.f32 0.0, %v1908
      %v1910 = vpop.f32.mrf.mxu0
      %1911 = vmatprep.mubr.bf16.mxu0 0
      %1912 = vmatmul.mubr.bf16.gmra.mxu0 %v1853
      %v1913 = vpop.f32.mrf.mxu0
      %v1914 = vadd.f32 0.0, %v1913
      %v1915 = vpop.f32.mrf.mxu0
      %v1916 = vpop.f32.mrf.mxu0
      %v1917 = vadd.f32 0.0, %v1916
      %v1918 = vpop.f32.mrf.mxu0
      %1919 = vdwg.mxu0
      %v1920 = vadd.f32 %v1526, %v1890
      %v1921 = vadd.f32 %v1527, %v1893
      %v1922 = vadd.f32 %v1528, %v1898
      %v1923 = vadd.f32 %v1529, %v1901
      %v1924 = vadd.f32 %v1530, %v1906
      %v1925 = vadd.f32 %v1531, %v1909
      %v1926 = vadd.f32 %v1532, %v1914
      %v1927 = vadd.f32 %v1533, %v1917
      %v1928 = vld [vmem:[%s320] sm:$0x1]
      %v1930 = vlaneseq
      %v1931 = vshrl.u32 %v1930, 7
      %v1932 = vsub.s32 0, %v1931
      %v1933 = vrot.slane %v1928, %v1932
      %v1935 = vmul.f32 %v1933, %v1920
      %v1936 = vmul.f32 %v1933, %v1921
      %v1937 = vmul.f32 %v1933, %v1922
      %v1938 = vmul.f32 %v1933, %v1923
      %v1939 = vmul.f32 %v1933, %v1924
      %v1940 = vmul.f32 %v1933, %v1925
      %v1941 = vmul.f32 %v1933, %v1926
      %v1942 = vmul.f32 %v1933, %v1927
      %v1943 = vadd.f32 %v327, %v1935
      %v1944 = vadd.f32 %v328, %v1936
      %v1945 = vadd.f32 %v329, %v1937
      %v1946 = vadd.f32 %v330, %v1938
      %v1947 = vadd.f32 %v331, %v1939
      %v1948 = vadd.f32 %v332, %v1940
      %v1949 = vadd.f32 %v333, %v1941
      %v1950 = vadd.f32 %v334, %v1942
      %vm1951 = vcmask 523264
      %1952 = vst.msk [vmem:[%s325] sm:$0xff] %vm1951, %v1943
      %1953 = vst.msk [vmem:[%s325 + $0x8] sm:$0xff] %vm1951, %v1944
      %1954 = vst.msk [vmem:[%s325 + $0x10] sm:$0xff] %vm1951, %v1945
      %1955 = vst.msk [vmem:[%s325 + $0x18] sm:$0xff] %vm1951, %v1946
      %1956 = vst.msk [vmem:[%s325 + $0x20] sm:$0xff] %vm1951, %v1947
      %1957 = vst.msk [vmem:[%s325 + $0x28] sm:$0xff] %vm1951, %v1948
      %1958 = vst.msk [vmem:[%s325 + $0x30] sm:$0xff] %vm1951, %v1949
      %1959 = vst.msk [vmem:[%s325 + $0x38] sm:$0xff] %vm1951, %v1950
      %p1960 = scmp.lt.s32.totalorder %s17, 1
      %s1961 = scalar_select %p1960, %s17, 1
      %s1962 = smul.addr %s1961, 8
      %s1963 = smul.addr %s1962, 8
      %s1964 = scalar_lea.vmem %s6, %s1963
      // Predicated region
      $region45: #{_lambda_.24} parent=43 // pred_check
        %p1965 = pneg %p186
      $region46: #{_lambda_.24} parent=43 // pred_check_branch
        %1967 = sbr.rel (%p1965) target = $region48
      $region47: #{_lambda_.24} parent=43 // pred_region
        _
      $region48: #{_lambda_.24} parent=43 // pred_fallthru
        _
    $region44: #{_lambda_.24} parent=5 // pred_fallthru
      _
    %p1968 = scmp.le.s32.totalorder 2, %s12
    // Predicated region
    $region49: #{_lambda_.24} parent=5 // pred_check
      %p1969 = pneg %p1968
    $region50: #{_lambda_.24} parent=5 // pred_check_branch
      %1971 = sbr.rel (%p1969) target = $region52
    $region51: #{_lambda_.24} parent=5 // pred_region
      %s1972 = ssub.s32 %s12, 2
      // Predicated region
      $region53: #{_lambda_.24} parent=51 // pred_check
        %p1973 = pneg %p192
      $region54: #{_lambda_.24} parent=51 // pred_check_branch
        %1975 = sbr.rel (%p1973) target = $region56
      $region55: #{_lambda_.24} parent=51 // pred_region
        %p1976 = scmp.lt.s32.totalorder %s18, 1
        %s1977 = scalar_select %p1976, %s18, 1
        %s1978 = smul.addr %s1977, 8
        %s1979 = smul.addr %s1978, 8
        %s1980 = scalar_lea.vmem %s6, %s1979
      $region56: #{_lambda_.24} parent=51 // pred_fallthru
        _
    $region52: #{_lambda_.24} parent=5 // pred_fallthru
      _
  $region6: #{_lambda_.24} parent=0 // loop_footer
    %s16 = sadd.s32 1, %s12
  $region7: #{_lambda_.24} parent=0 // loop_footer_branch
    %11 = sbr.rel target = $region3
  $region8: #{_lambda_.24} parent=0 // loop_exit
    _

// kernel: _lambda_.32
$region0: #{_lambda_.32}
  #allocation0 [shape = 'u32[]', space=smem, size = 0x4, offset = 0x4, fixed_abs, tag = 'smem constant byte address 0x4 - core index']
  #allocation1 [shape = 'u32[144,128]{1,0:T(1,128)}', space=vmem, size = 0x12000, scoped, tag = 'internal scratch']
  %s0 = inlined_call_operand.vmem [shape: f32[2,64,64], index: 0, kind: input, shape index: {}]
  %s1 = inlined_call_operand.vmem [shape: f32[2,1,64], index: 1, kind: input, shape index: {}]
  %s2 = inlined_call_operand.vmem [shape: f32[2,1,64], index: 2, kind: input, shape index: {}]
  %s3 = inlined_call_operand.vmem [shape: f32[64,4], index: 3, kind: input, shape index: {}]
  %s4 = inlined_call_operand.vmem [shape: f32[2,64,4], index: 4, kind: output, shape index: {}]
  %s5 = sld [smem:[#allocation0]]
  $region49: #{_lambda_.32} parent=0
    _
  %s7 = ssub.s32 1, %s5
  %s8 = scalar_select 0, %s7, %s5
  loop: start=0, step=1, limit=4
  $region2: #{_lambda_.32} parent=0 // loop_pre_header
    _
  $region3: #{_lambda_.32} parent=0 // loop_header
    %s10 = sphi 0, %s14
    %p11 = scmp.ge.s32.totalorder %s10, 4
    %s17 = sphi 0, %s29
    %s18 = sphi 0, %s25
    %s19 = sphi 0, %s17
    %s20 = sphi 0, %s18
    %s21 = sphi 0, %s19
    %s22 = sphi 0, %s20
    %s34 = sphi 0, %s36
    %s37 = sphi 0, %s34
    %s38 = sphi 0, %s37
    %s54 = sphi 0, %s38
    %s60 = sphi 0, %s62
    %s63 = sphi 0, %s60
    %s64 = sphi 0, %s63
    %s80 = sphi 0, %s64
    %s86 = sphi 0, %s88
    %s89 = sphi 0, %s86
    %s90 = sphi 0, %s89
    %s106 = sphi 0, %s90
    %s110 = sphi 0, %s110
    %s112 = sphi 0, %s110
    %s113 = sphi 0, %s112
    %s127 = sphi 0, %s113
    %s135 = sphi 0, %s137
    %s138 = sphi 0, %s135
    %s139 = sphi 0, %s138
    %s155 = sphi 0, %s139
  $region4: #{_lambda_.32} parent=0 // loop_header_branch
    %13 = sbr.rel (%p11) target = $region8
  $region5: #{_lambda_.32} parent=0 // loop_body
    %s15 = ssub.s32 %s10, 1
    %s16 = ssub.s32 %s10, 2
    %s23 = sadd.s32 1, %s18
    %p24 = scmp.ge.s32.totalorder %s23, 1
    %s25 = scalar_select %p24, 0, %s23
    %s26 = sadd.s32 1, %s17
    %s27 = scalar_select %p24, %s26, %s17
    %p28 = scmp.ge.s32.totalorder %s27, 2
    %s29 = scalar_select %p28, 0, %s27
    %s30 = ssub.s32 %s17, %s29
    %s31 = ssub.s32 %s18, %s25
    %s32 = sor.u32 %s30, %s31
    %p33 = scmp.eq.s32.totalorder %s32, 0
    %s35 = sadd.s32 %s34, 1
    %s36 = scalar_select %p33, %s34, %s35
    %p39 = pneg %p33
    %p40 = scmp.eq.s32.totalorder %s10, 1
    %p41 = por %p39, %p40
    %p42 = scmp.ne.s32.totalorder %s34, %s37
    %p43 = scmp.eq.s32.totalorder %s10, 0
    %p44 = por %p42, %p43
    %p45 = scmp.ne.s32.totalorder %s34, %s37
    %p46 = scmp.eq.s32.totalorder %s15, 1
    %p47 = por %p45, %p46
    %p48 = scmp.ne.s32.totalorder %s37, %s38
    %p49 = scmp.eq.s32.totalorder %s15, 0
    %p50 = por %p48, %p49
    %p51 = scmp.ne.s32.totalorder %s37, %s38
    %p52 = scmp.eq.s32.totalorder %s16, 1
    %p53 = por %p51, %p52
    %p55 = scmp.ne.s32.totalorder %s38, %s54
    %p56 = scmp.eq.s32.totalorder %s16, 0
    %p57 = por %p55, %p56
    %s58 = ssub.s32 %s17, %s29
    %p59 = scmp.eq.s32.totalorder %s58, 0
    %s61 = sadd.s32 %s60, 1
    %s62 = scalar_select %p59, %s60, %s61
    %p65 = pneg %p59
    %p66 = scmp.eq.s32.totalorder %s10, 1
    %p67 = por %p65, %p66
    %p68 = scmp.ne.s32.totalorder %s60, %s63
    %p69 = scmp.eq.s32.totalorder %s10, 0
    %p70 = por %p68, %p69
    %p71 = scmp.ne.s32.totalorder %s60, %s63
    %p72 = scmp.eq.s32.totalorder %s15, 1
    %p73 = por %p71, %p72
    %p74 = scmp.ne.s32.totalorder %s63, %s64
    %p75 = scmp.eq.s32.totalorder %s15, 0
    %p76 = por %p74, %p75
    %p77 = scmp.ne.s32.totalorder %s63, %s64
    %p78 = scmp.eq.s32.totalorder %s16, 1
    %p79 = por %p77, %p78
    %p81 = scmp.ne.s32.totalorder %s64, %s80
    %p82 = scmp.eq.s32.totalorder %s16, 0
    %p83 = por %p81, %p82
    %s84 = ssub.s32 %s17, %s29
    %p85 = scmp.eq.s32.totalorder %s84, 0
    %s87 = sadd.s32 %s86, 1
    %s88 = scalar_select %p85, %s86, %s87
    %p91 = pneg %p85
    %p92 = scmp.eq.s32.totalorder %s10, 1
    %p93 = por %p91, %p92
    %p94 = scmp.ne.s32.totalorder %s86, %s89
    %p95 = scmp.eq.s32.totalorder %s10, 0
    %p96 = por %p94, %p95
    %p97 = scmp.ne.s32.totalorder %s86, %s89
    %p98 = scmp.eq.s32.totalorder %s15, 1
    %p99 = por %p97, %p98
    %p100 = scmp.ne.s32.totalorder %s89, %s90
    %p101 = scmp.eq.s32.totalorder %s15, 0
    %p102 = por %p100, %p101
    %p103 = scmp.ne.s32.totalorder %s89, %s90
    %p104 = scmp.eq.s32.totalorder %s16, 1
    %p105 = por %p103, %p104
    %p107 = scmp.ne.s32.totalorder %s90, %s106
    %p108 = scmp.eq.s32.totalorder %s16, 0
    %p109 = por %p107, %p108
    %s111 = sadd.s32 %s110, 1
    %p114 = scmp.eq.s32.totalorder %s10, 1
    %p115 = scmp.ne.s32.totalorder %s110, %s112
    %p116 = scmp.eq.s32.totalorder %s10, 0
    %p117 = por %p115, %p116
    %p118 = scmp.ne.s32.totalorder %s110, %s112
    %p119 = scmp.eq.s32.totalorder %s15, 1
    %p120 = por %p118, %p119
    %p121 = scmp.ne.s32.totalorder %s112, %s113
    %p122 = scmp.eq.s32.totalorder %s15, 0
    %p123 = por %p121, %p122
    %p124 = scmp.ne.s32.totalorder %s112, %s113
    %p125 = scmp.eq.s32.totalorder %s16, 1
    %p126 = por %p124, %p125
    %p128 = scmp.ne.s32.totalorder %s113, %s127
    %p129 = scmp.eq.s32.totalorder %s16, 0
    %p130 = por %p128, %p129
    %s131 = ssub.s32 %s17, %s29
    %s132 = ssub.s32 %s18, %s25
    %s133 = sor.u32 %s131, %s132
    %p134 = scmp.eq.s32.totalorder %s133, 0
    %s136 = sadd.s32 %s135, 1
    %s137 = scalar_select %p134, %s135, %s136
    %p140 = pneg %p134
    %p141 = scmp.eq.s32.totalorder %s10, 1
    %p142 = por %p140, %p141
    %p143 = scmp.ne.s32.totalorder %s135, %s138
    %p144 = scmp.eq.s32.totalorder %s10, 0
    %p145 = por %p143, %p144
    %p146 = scmp.ne.s32.totalorder %s135, %s138
    %p147 = scmp.eq.s32.totalorder %s15, 1
    %p148 = por %p146, %p147
    %p149 = scmp.ne.s32.totalorder %s138, %s139
    %p150 = scmp.eq.s32.totalorder %s15, 0
    %p151 = por %p149, %p150
    %p152 = scmp.ne.s32.totalorder %s138, %s139
    %p153 = scmp.eq.s32.totalorder %s16, 1
    %p154 = por %p152, %p153
    %p156 = scmp.ne.s32.totalorder %s139, %s155
    %p157 = scmp.eq.s32.totalorder %s16, 0
    %p158 = por %p156, %p157
    %p159 = scmp.le.s32.totalorder 1, %s10
    %p160 = scmp.lt.s32.totalorder %s10, 3
    %p161 = pnand %p159, %p160
    %p162 = pneg %p161
    // Predicated region
    $region9: #{_lambda_.32} parent=5 // pred_check
      _
    $region10: #{_lambda_.32} parent=5 // pred_check_branch
      %164 = sbr.rel (%p161) target = $region12
    $region11: #{_lambda_.32} parent=5 // pred_region
      %s165 = ssub.s32 %s10, 1
      // Predicated region
      $region13: #{_lambda_.32} parent=11 // pred_check
        %p166 = pneg %p123
      $region14: #{_lambda_.32} parent=11 // pred_check_branch
        %168 = sbr.rel (%p166) target = $region16
      $region15: #{_lambda_.32} parent=11 // pred_region
        _
      $region16: #{_lambda_.32} parent=11 // pred_fallthru
        _
    $region12: #{_lambda_.32} parent=5 // pred_fallthru
      _
    %p169 = scmp.lt.s32.totalorder %s10, 2
    // Predicated region
    $region17: #{_lambda_.32} parent=5 // pred_check
      %p170 = pneg %p169
    $region18: #{_lambda_.32} parent=5 // pred_check_branch
      %172 = sbr.rel (%p170) target = $region20
    $region19: #{_lambda_.32} parent=5 // pred_region
      // Predicated region
      $region21: #{_lambda_.32} parent=19 // pred_check
        %p173 = pneg %p44
      $region22: #{_lambda_.32} parent=19 // pred_check_branch
        %175 = sbr.rel (%p173) target = $region24
      $region23: #{_lambda_.32} parent=19 // pred_region
        %s176 = smul.u32 8, %s18
        %p177 = scmp.lt.s32.totalorder %s17, 1
        %s178 = scalar_select %p177, %s17, 1
        %p179 = scmp.lt.s32.totalorder %s176, 7
        %s180 = scalar_select %p179, %s176, 7
        %s181 = smul.addr %s178, 8
        %s182 = sadd.s32 %s180, %s181
        %s183 = smul.addr %s182, 8
        %s184 = scalar_lea.vmem %s0, %s183
        %s185 = smul.u32 8, %s18
      $region24: #{_lambda_.32} parent=19 // pred_fallthru
        _
      // Predicated region
      $region25: #{_lambda_.32} parent=19 // pred_check
        %p186 = pneg %p70
      $region26: #{_lambda_.32} parent=19 // pred_check_branch
        %188 = sbr.rel (%p186) target = $region28
      $region27: #{_lambda_.32} parent=19 // pred_region
        %p189 = scmp.lt.s32.totalorder %s17, 1
        %s190 = scalar_select %p189, %s17, 1
        %s191 = scalar_lea.vmem %s1, %s190
      $region28: #{_lambda_.32} parent=19 // pred_fallthru
        _
      // Predicated region
      $region29: #{_lambda_.32} parent=19 // pred_check
        %p192 = pneg %p96
      $region30: #{_lambda_.32} parent=19 // pred_check_branch
        %194 = sbr.rel (%p192) target = $region32
      $region31: #{_lambda_.32} parent=19 // pred_region
        %p195 = scmp.lt.s32.totalorder %s17, 1
        %s196 = scalar_select %p195, %s17, 1
        %s197 = scalar_lea.vmem %s2, %s196
      $region32: #{_lambda_.32} parent=19 // pred_fallthru
        _
    $region20: #{_lambda_.32} parent=5 // pred_fallthru
      _
    %p198 = scmp.le.s32.totalorder 1, %s10
    %p199 = scmp.lt.s32.totalorder %s10, 3
    %p200 = pnand %p198, %p199
    %p201 = pneg %p200
    // Predicated region
    $region33: #{_lambda_.32} parent=5 // pred_check
      _
    $region34: #{_lambda_.32} parent=5 // pred_check_branch
      %203 = sbr.rel (%p200) target = $region36
    $region35: #{_lambda_.32} parent=5 // pred_region
      %s204 = ssub.s32 %s10, 1
      %s205 = smul.u32 8, %s20
      %p206 = scmp.lt.s32.totalorder %s19, 1
      %s207 = scalar_select %p206, %s19, 1
      %p208 = scmp.lt.s32.totalorder %s205, 7
      %s209 = scalar_select %p208, %s205, 7
      %s210 = smul.addr %s207, 8
      %s211 = sadd.s32 %s209, %s210
      %s212 = smul.addr %s211, 8
      %s213 = scalar_lea.vmem %s0, %s212
      %p214 = pneg %p50
      %p215 = pneg %p47
      %p216 = scmp.lt.s32.totalorder %s19, 1
      %s217 = scalar_select %p216, %s19, 1
      %s218 = scalar_lea.vmem %s1, %s217
      %p219 = pneg %p76
      %p220 = pneg %p73
      %p221 = scmp.lt.s32.totalorder %s19, 1
      %s222 = scalar_select %p221, %s19, 1
      %s223 = scalar_lea.vmem %s2, %s222
      %p224 = pneg %p102
      %p225 = pneg %p99
      %p226 = pneg %p123
      %p227 = pneg %p120
      %p228 = pneg %p151
      %p229 = pneg %p148
      %s230 = smul.u32 8, %s20
      %p231 = scmp.lt.s32.totalorder %s19, 1
      %s232 = scalar_select %p231, %s19, 1
      %p233 = scmp.lt.s32.totalorder %s230, 7
      %s234 = scalar_select %p233, %s230, 7
      %s235 = smul.addr %s232, 8
      %s236 = sadd.s32 %s234, %s235
      %s237 = smul.addr %s236, 8
      %s238 = scalar_lea.vmem %s4, %s237
      %s239 = smul.u32 8, %s20
      %p240 = scmp.lt.s32.totalorder %s19, 1
      %s241 = scalar_select %p240, %s19, 1
      %p242 = scmp.lt.s32.totalorder %s239, 7
      %s243 = scalar_select %p242, %s239, 7
      %s244 = smul.addr %s241, 8
      %s245 = sadd.s32 %s243, %s244
      %s246 = smul.addr %s245, 8
      %s247 = scalar_lea.vmem %s0, %s246
      %s248 = smul.u32 8, %s20
      %p249 = scmp.lt.s32.totalorder %s19, 1
      %s250 = scalar_select %p249, %s19, 1
      %s251 = scalar_lea.vmem %s1, %s250
      %p252 = scmp.lt.s32.totalorder %s19, 1
      %s253 = scalar_select %p252, %s19, 1
      %s254 = scalar_lea.vmem %s2, %s253
      %s255 = smul.u32 8, %s20
      %p256 = scmp.lt.s32.totalorder %s19, 1
      %s257 = scalar_select %p256, %s19, 1
      %p258 = scmp.lt.s32.totalorder %s255, 7
      %s259 = scalar_select %p258, %s255, 7
      %s260 = smul.addr %s257, 8
      %s261 = sadd.s32 %s259, %s260
      %s262 = smul.addr %s261, 8
      %s263 = scalar_lea.vmem %s4, %s262
      %s264 = smul.u32 8, %s20
      %v266 = vld [vmem:[%s247] sm:$0xff]
      %v267 = vld [vmem:[%s247 + $0x8] sm:$0xff]
      %v268 = vld [vmem:[%s247 + $0x10] sm:$0xff]
      %v269 = vld [vmem:[%s247 + $0x18] sm:$0xff]
      %v270 = vld [vmem:[%s247 + $0x20] sm:$0xff]
      %v271 = vld [vmem:[%s247 + $0x28] sm:$0xff]
      %v272 = vld [vmem:[%s247 + $0x30] sm:$0xff]
      %v273 = vld [vmem:[%s247 + $0x38] sm:$0xff]
      %v274 = vld [vmem:[%s251] sm:$0x1]
      %v275 = vld [vmem:[%s254] sm:$0x1]
      %vm276 = vcmask 523264
      %v277 = vsel %vm276, %v266, 0.0
      %278 = vadd.xlane.f32.xlu0 %v277
      %v279 = vpop.xlane.xlu0 %278
      %v280 = vsel %vm276, %v267, 0.0
      %281 = vadd.xlane.f32.xlu0 %v280
      %v282 = vpop.xlane.xlu0 %281
      %v283 = vsel %vm276, %v268, 0.0
      %284 = vadd.xlane.f32.xlu0 %v283
      %v285 = vpop.xlane.xlu0 %284
      %v286 = vsel %vm276, %v269, 0.0
      %287 = vadd.xlane.f32.xlu0 %v286
      %v288 = vpop.xlane.xlu0 %287
      %v289 = vsel %vm276, %v270, 0.0
      %290 = vadd.xlane.f32.xlu0 %v289
      %v291 = vpop.xlane.xlu0 %290
      %v292 = vsel %vm276, %v271, 0.0
      %293 = vadd.xlane.f32.xlu0 %v292
      %v294 = vpop.xlane.xlu0 %293
      %v295 = vsel %vm276, %v272, 0.0
      %296 = vadd.xlane.f32.xlu0 %v295
      %v297 = vpop.xlane.xlu0 %296
      %v298 = vsel %vm276, %v273, 0.0
      %299 = vadd.xlane.f32.xlu0 %v298
      %v300 = vpop.xlane.xlu0 %299
      %v301 = vrcp.pop 64.0
      %v302 = vmul.f32 %v279, %v301
      %v303 = vmul.f32 %v282, %v301
      %v304 = vmul.f32 %v285, %v301
      %v305 = vmul.f32 %v288, %v301
      %v306 = vmul.f32 %v291, %v301
      %v307 = vmul.f32 %v294, %v301
      %v308 = vmul.f32 %v297, %v301
      %v309 = vmul.f32 %v300, %v301
      %v310 = vsub.f32 %v266, %v302
      %v311 = vsub.f32 %v267, %v303
      %v312 = vsub.f32 %v268, %v304
      %v313 = vsub.f32 %v269, %v305
      %v314 = vsub.f32 %v270, %v306
      %v315 = vsub.f32 %v271, %v307
      %v316 = vsub.f32 %v272, %v308
      %v317 = vsub.f32 %v273, %v309
      %v318 = vmul.f32 %v310, %v310
      %v319 = vmul.f32 %v311, %v311
      %v320 = vmul.f32 %v312, %v312
      %v321 = vmul.f32 %v313, %v313
      %v322 = vmul.f32 %v314, %v314
      %v323 = vmul.f32 %v315, %v315
      %v324 = vmul.f32 %v316, %v316
      %v325 = vmul.f32 %v317, %v317
      %v326 = vsel %vm276, %v318, 0.0
      %327 = vadd.xlane.f32.xlu0 %v326
      %v328 = vpop.xlane.xlu0 %327
      %v329 = vsel %vm276, %v319, 0.0
      %330 = vadd.xlane.f32.xlu0 %v329
      %v331 = vpop.xlane.xlu0 %330
      %v332 = vsel %vm276, %v320, 0.0
      %333 = vadd.xlane.f32.xlu0 %v332
      %v334 = vpop.xlane.xlu0 %333
      %v335 = vsel %vm276, %v321, 0.0
      %336 = vadd.xlane.f32.xlu0 %v335
      %v337 = vpop.xlane.xlu0 %336
      %v338 = vsel %vm276, %v322, 0.0
      %339 = vadd.xlane.f32.xlu0 %v338
      %v340 = vpop.xlane.xlu0 %339
      %v341 = vsel %vm276, %v323, 0.0
      %342 = vadd.xlane.f32.xlu0 %v341
      %v343 = vpop.xlane.xlu0 %342
      %v344 = vsel %vm276, %v324, 0.0
      %345 = vadd.xlane.f32.xlu0 %v344
      %v346 = vpop.xlane.xlu0 %345
      %v347 = vsel %vm276, %v325, 0.0
      %348 = vadd.xlane.f32.xlu0 %v347
      %v349 = vpop.xlane.xlu0 %348
      %v350 = vmul.f32 %v328, %v301
      %v351 = vmul.f32 %v331, %v301
      %v352 = vmul.f32 %v334, %v301
      %v353 = vmul.f32 %v337, %v301
      %v354 = vmul.f32 %v340, %v301
      %v355 = vmul.f32 %v343, %v301
      %v356 = vmul.f32 %v346, %v301
      %v357 = vmul.f32 %v349, %v301
      %v358 = vadd.f32 %v350, 1e-06
      %v359 = vadd.f32 %v351, 1e-06
      %v360 = vadd.f32 %v352, 1e-06
      %v361 = vadd.f32 %v353, 1e-06
      %v362 = vadd.f32 %v354, 1e-06
      %v363 = vadd.f32 %v355, 1e-06
      %v364 = vadd.f32 %v356, 1e-06
      %v365 = vadd.f32 %v357, 1e-06
      %v366 = vrsqrt.pop %v358
      %v367 = vrsqrt.pop %v359
      %v368 = vrsqrt.pop %v360
      %v369 = vrsqrt.pop %v361
      %v370 = vrsqrt.pop %v362
      %v371 = vrsqrt.pop %v363
      %v372 = vrsqrt.pop %v364
      %v373 = vrsqrt.pop %v365
      %v374 = vmul.f32 %v310, %v366
      %v375 = vmul.f32 %v311, %v367
      %v376 = vmul.f32 %v312, %v368
      %v377 = vmul.f32 %v313, %v369
      %v378 = vmul.f32 %v314, %v370
      %v379 = vmul.f32 %v315, %v371
      %v380 = vmul.f32 %v316, %v372
      %v381 = vmul.f32 %v317, %v373
      %v382 = vadd.f32 %v275, 1.0
      %v384 = vlaneseq
      %v385 = vshrl.u32 %v384, 7
      %v386 = vsub.s32 0, %v385
      %v387 = vrot.slane %v382, %v386
      %v389 = vmul.f32 %v374, %v387
      %v390 = vmul.f32 %v375, %v387
      %v391 = vmul.f32 %v376, %v387
      %v392 = vmul.f32 %v377, %v387
      %v393 = vmul.f32 %v378, %v387
      %v394 = vmul.f32 %v379, %v387
      %v395 = vmul.f32 %v380, %v387
      %v396 = vmul.f32 %v381, %v387
      %v398 = vlaneseq
      %v399 = vshrl.u32 %v398, 7
      %v400 = vsub.s32 0, %v399
      %v401 = vrot.slane %v274, %v400
      %v403 = vadd.f32 %v389, %v401
      %v404 = vadd.f32 %v390, %v401
      %v405 = vadd.f32 %v391, %v401
      %v406 = vadd.f32 %v392, %v401
      %v407 = vadd.f32 %v393, %v401
      %v408 = vadd.f32 %v394, %v401
      %v409 = vadd.f32 %v395, %v401
      %v410 = vadd.f32 %v396, %v401
      %v411 = vpack.c.bf16 %v404, %v403
      %v412 = vpack.c.bf16 %v406, %v405
      %v413 = vpack.c.bf16 %v408, %v407
      %v414 = vpack.c.bf16 %v410, %v409
      %v415 = vld [vmem:[%s3] sm:$0xff]
      %v416 = vld [vmem:[%s3 + $0x8] sm:$0xff]
      %v417 = vld [vmem:[%s3 + $0x10] sm:$0xff]
      %v418 = vld [vmem:[%s3 + $0x18] sm:$0xff]
      %v419 = vld [vmem:[%s3 + $0x20] sm:$0xff]
      %v420 = vld [vmem:[%s3 + $0x28] sm:$0xff]
      %v421 = vld [vmem:[%s3 + $0x30] sm:$0xff]
      %v422 = vld [vmem:[%s3 + $0x38] sm:$0xff]
      %v423 = vpack.c.bf16 %v416, %v415
      %v424 = vpack.c.bf16 %v418, %v417
      %v425 = vpack.c.bf16 %v420, %v419
      %v426 = vpack.c.bf16 %v422, %v421
      %v428 = vsel %vm276, %v411, 0
      %v431 = vsel %vm276, %v412, 0
      %v434 = vsel %vm276, %v413, 0
      %v437 = vsel %vm276, %v414, 0
      %439 = vmatprep.subr.bf16.mxu0 0
      %440 = vmatpush1.bf16.msra.mxu0 0
      %441 = vmatprep.subr.bf16.mxu0 0
      %442 = vmatpush1.bf16.msra.mxu0 0
      %443 = vmatprep.subr.bf16.mxu0 0
      %444 = vmatpush1.bf16.msra.mxu0 0
      %445 = vmatprep.subr.bf16.mxu0 0
      %446 = vmatpush1.bf16.msra.mxu0 0
      %447 = vmatprep.subr.bf16.mxu0 0
      %448 = vmatpush1.bf16.msra.mxu0 %v426
      %449 = vmatprep.subr.bf16.mxu0 0
      %450 = vmatpush1.bf16.msra.mxu0 %v425
      %451 = vmatprep.subr.bf16.mxu0 0
      %452 = vmatpush1.bf16.msra.mxu0 %v424
      %453 = vmatprep.subr.bf16.mxu0 0
      %454 = vmatpush1.bf16.msra.mxu0 %v423
      %455 = vmatprep.subr.bf16.mxu0 0
      %456 = vmatpush2.bf16.msra.mxu0 0
      %457 = vmatprep.subr.bf16.mxu0 0
      %458 = vmatpush2.bf16.msra.mxu0 0
      %459 = vmatprep.subr.bf16.mxu0 0
      %460 = vmatpush2.bf16.msra.mxu0 0
      %461 = vmatprep.subr.bf16.mxu0 0
      %462 = vmatpush2.bf16.msra.mxu0 0
      %463 = vmatprep.subr.bf16.mxu0 0
      %464 = vmatpush2.bf16.msra.mxu0 0
      %465 = vmatprep.subr.bf16.mxu0 0
      %466 = vmatpush2.bf16.msra.mxu0 0
      %467 = vmatprep.subr.bf16.mxu0 0
      %468 = vmatpush2.bf16.msra.mxu0 0
      %469 = vmatprep.subr.bf16.mxu0 0
      %470 = vmatpush2.bf16.msra.mxu0 0
      %471 = vmatprep.mubr.bf16.mxu0 0
      %472 = vmatmul.mubr.bf16.gmra.mxu0 %v428
      %v473 = vpop.f32.mrf.mxu0
      %v474 = vadd.f32 0.0, %v473
      %v475 = vpop.f32.mrf.mxu0
      %v476 = vpop.f32.mrf.mxu0
      %v477 = vadd.f32 0.0, %v476
      %v478 = vpop.f32.mrf.mxu0
      %479 = vmatprep.mubr.bf16.mxu0 0
      %480 = vmatmul.mubr.bf16.gmra.mxu0 %v431
      %v481 = vpop.f32.mrf.mxu0
      %v482 = vadd.f32 0.0, %v481
      %v483 = vpop.f32.mrf.mxu0
      %v484 = vpop.f32.mrf.mxu0
      %v485 = vadd.f32 0.0, %v484
      %v486 = vpop.f32.mrf.mxu0
      %487 = vmatprep.mubr.bf16.mxu0 0
      %488 = vmatmul.mubr.bf16.gmra.mxu0 %v434
      %v489 = vpop.f32.mrf.mxu0
      %v490 = vadd.f32 0.0, %v489
      %v491 = vpop.f32.mrf.mxu0
      %v492 = vpop.f32.mrf.mxu0
      %v493 = vadd.f32 0.0, %v492
      %v494 = vpop.f32.mrf.mxu0
      %495 = vmatprep.mubr.bf16.mxu0 0
      %496 = vmatmul.mubr.bf16.gmra.mxu0 %v437
      %v497 = vpop.f32.mrf.mxu0
      %v498 = vadd.f32 0.0, %v497
      %v499 = vpop.f32.mrf.mxu0
      %v500 = vpop.f32.mrf.mxu0
      %v501 = vadd.f32 0.0, %v500
      %v502 = vpop.f32.mrf.mxu0
      %503 = vdwg.mxu0
      %vm504 = vcmask 31744
      %505 = vst.msk [vmem:[%s263] sm:$0xff] %vm504, %v474
      %506 = vst.msk [vmem:[%s263 + $0x8] sm:$0xff] %vm504, %v477
      %507 = vst.msk [vmem:[%s263 + $0x10] sm:$0xff] %vm504, %v482
      %508 = vst.msk [vmem:[%s263 + $0x18] sm:$0xff] %vm504, %v485
      %509 = vst.msk [vmem:[%s263 + $0x20] sm:$0xff] %vm504, %v490
      %510 = vst.msk [vmem:[%s263 + $0x28] sm:$0xff] %vm504, %v493
      %511 = vst.msk [vmem:[%s263 + $0x30] sm:$0xff] %vm504, %v498
      %512 = vst.msk [vmem:[%s263 + $0x38] sm:$0xff] %vm504, %v501
      %s513 = smul.u32 8, %s20
      %p514 = scmp.lt.s32.totalorder %s19, 1
      %s515 = scalar_select %p514, %s19, 1
      %p516 = scmp.lt.s32.totalorder %s513, 7
      %s517 = scalar_select %p516, %s513, 7
      %s518 = smul.addr %s515, 8
      %s519 = sadd.s32 %s517, %s518
      %s520 = smul.addr %s519, 8
      %s521 = scalar_lea.vmem %s4, %s520
      // Predicated region
      $region37: #{_lambda_.32} parent=35 // pred_check
        %p522 = pneg %p148
      $region38: #{_lambda_.32} parent=35 // pred_check_branch
        %524 = sbr.rel (%p522) target = $region40
      $region39: #{_lambda_.32} parent=35 // pred_region
        %s525 = smul.u32 8, %s20
      $region40: #{_lambda_.32} parent=35 // pred_fallthru
        _
    $region36: #{_lambda_.32} parent=5 // pred_fallthru
      _
    %p526 = scmp.le.s32.totalorder 2, %s10
    // Predicated region
    $region41: #{_lambda_.32} parent=5 // pred_check
      %p527 = pneg %p526
    $region42: #{_lambda_.32} parent=5 // pred_check_branch
      %529 = sbr.rel (%p527) target = $region44
    $region43: #{_lambda_.32} parent=5 // pred_region
      %s530 = ssub.s32 %s10, 2
      // Predicated region
      $region45: #{_lambda_.32} parent=43 // pred_check
        %p531 = pneg %p154
      $region46: #{_lambda_.32} parent=43 // pred_check_branch
        %533 = sbr.rel (%p531) target = $region48
      $region47: #{_lambda_.32} parent=43 // pred_region
        %s534 = smul.u32 8, %s22
        %p535 = scmp.lt.s32.totalorder %s21, 1
        %s536 = scalar_select %p535, %s21, 1
        %p537 = scmp.lt.s32.totalorder %s534, 7
        %s538 = scalar_select %p537, %s534, 7
        %s539 = smul.addr %s536, 8
        %s540 = sadd.s32 %s538, %s539
        %s541 = smul.addr %s540, 8
        %s542 = scalar_lea.vmem %s4, %s541
      $region48: #{_lambda_.32} parent=43 // pred_fallthru
        _
    $region44: #{_lambda_.32} parent=5 // pred_fallthru
      _
  $region6: #{_lambda_.32} parent=0 // loop_footer
    %s14 = sadd.s32 1, %s10
  $region7: #{_lambda_.32} parent=0 // loop_footer_branch
    %9 = sbr.rel target = $region3
  $region8: #{_lambda_.32} parent=0 // loop_exit
    _

// kernel: _lambda_.33
$region0: #{_lambda_.33}
  #allocation0 [shape = 'u32[]', space=smem, size = 0x4, offset = 0x4, fixed_abs, tag = 'smem constant byte address 0x4 - core index']
  #allocation1 [shape = 'u32[144,128]{1,0:T(1,128)}', space=vmem, size = 0x12000, scoped, tag = 'internal scratch']
  #allocation2 [shape = 'f32[1,1]{1,0:T(1,128)}', space=vmem, size = 0x200, scoped, tag = 'scratch operand']
  %s0 = inlined_call_operand.vmem [shape: f32[64,8], index: 0, kind: input, shape index: {}]
  %s1 = inlined_call_operand.vmem [shape: f32[64,8], index: 1, kind: input, shape index: {}]
  %s2 = inlined_call_operand.hbm [shape: f32[1,1], index: 2, kind: output, shape index: {}]
  %s3 = sld [smem:[#allocation0]]
  $region26: #{_lambda_.33} parent=0
    _
  %s5 = ssub.s32 1, %s3
  %s6 = scalar_select 0, %s5, %s3
  $region1: #{_lambda_.33} parent=0
    #allocation3 [shape = 'u8[512]{0}', space=vmem, size = 0x400, scoped, tag = 'output window, operand 0, single buffered']
    #allocation4 [shape = 's32[1]{0}', space=sflag, size = 0x4, scoped, tag = 'scoped memory for _lambda_.33']
    %7 = vsyncpa [#allocation4], 0
    // Predicated region
    $region2: #{_lambda_.33} parent=1 // pred_check
      _
    $region3: #{_lambda_.33} parent=1 // pred_check_branch
      %9 = sbr.rel (0) target = $region5
    $region4: #{_lambda_.33} parent=1 // pred_region
      _
    $region5: #{_lambda_.33} parent=1 // pred_fallthru
      _
    // Predicated region
    $region6: #{_lambda_.33} parent=1 // pred_check
      _
    $region7: #{_lambda_.33} parent=1 // pred_check_branch
      %11 = sbr.rel (0) target = $region9
    $region8: #{_lambda_.33} parent=1 // pred_region
      _
    $region9: #{_lambda_.33} parent=1 // pred_fallthru
      _
    %p12 = scmp.eq.s32.totalorder 0, 0
    // Predicated region
    $region10: #{_lambda_.33} parent=1 // pred_check
      %p13 = pneg %p12
    $region11: #{_lambda_.33} parent=1 // pred_check_branch
      %15 = sbr.rel (%p13) target = $region13
    $region12: #{_lambda_.33} parent=1 // pred_region
      %vm16 = vcmask 0
      %17 = vst.msk [vmem:[#allocation2] sm:$0x1] %vm16, 0.0
    $region13: #{_lambda_.33} parent=1 // pred_fallthru
      _
    %v18 = vld [vmem:[%s0] sm:$0xff]
    %v19 = vld [vmem:[%s0 + $0x8] sm:$0xff]
    %v20 = vld [vmem:[%s0 + $0x10] sm:$0xff]
    %v21 = vld [vmem:[%s0 + $0x18] sm:$0xff]
    %v22 = vld [vmem:[%s0 + $0x20] sm:$0xff]
    %v23 = vld [vmem:[%s0 + $0x28] sm:$0xff]
    %v24 = vld [vmem:[%s0 + $0x30] sm:$0xff]
    %v25 = vld [vmem:[%s0 + $0x38] sm:$0xff]
    %v26 = vld [vmem:[%s1] sm:$0xff]
    %v27 = vld [vmem:[%s1 + $0x8] sm:$0xff]
    %v28 = vld [vmem:[%s1 + $0x10] sm:$0xff]
    %v29 = vld [vmem:[%s1 + $0x18] sm:$0xff]
    %v30 = vld [vmem:[%s1 + $0x20] sm:$0xff]
    %v31 = vld [vmem:[%s1 + $0x28] sm:$0xff]
    %v32 = vld [vmem:[%s1 + $0x30] sm:$0xff]
    %v33 = vld [vmem:[%s1 + $0x38] sm:$0xff]
    %v34 = vsub.f32 %v18, %v26
    %v35 = vsub.f32 %v19, %v27
    %v36 = vsub.f32 %v20, %v28
    %v37 = vsub.f32 %v21, %v29
    %v38 = vsub.f32 %v22, %v30
    %v39 = vsub.f32 %v23, %v31
    %v40 = vsub.f32 %v24, %v32
    %v41 = vsub.f32 %v25, %v33
    %v42 = vld [vmem:[#allocation2] sm:$0x1]
    %v43 = vmul.f32 %v34, %v34
    %v44 = vmul.f32 %v35, %v35
    %v45 = vmul.f32 %v36, %v36
    %v46 = vmul.f32 %v37, %v37
    %v47 = vmul.f32 %v38, %v38
    %v48 = vmul.f32 %v39, %v39
    %v49 = vmul.f32 %v40, %v40
    %v50 = vmul.f32 %v41, %v41
    %vm51 = vcmask 64512
    %v52 = vsel %vm51, %v43, 0.0
    %v53 = vsel %vm51, %v44, 0.0
    %v54 = vadd.f32 %v52, %v53
    %v55 = vsel %vm51, %v45, 0.0
    %v56 = vadd.f32 %v54, %v55
    %v57 = vsel %vm51, %v46, 0.0
    %v58 = vadd.f32 %v56, %v57
    %v59 = vsel %vm51, %v47, 0.0
    %v60 = vadd.f32 %v58, %v59
    %v61 = vsel %vm51, %v48, 0.0
    %v62 = vadd.f32 %v60, %v61
    %v63 = vsel %vm51, %v49, 0.0
    %v64 = vadd.f32 %v62, %v63
    %v65 = vsel %vm51, %v50, 0.0
    %v66 = vadd.f32 %v64, %v65
    %67 = vadd.xlane.f32.xlu0 %v66
    %v68 = vpop.xlane.xlu0 %67
    %v69 = vrot.slane %v68, 4
    %v70 = vadd.f32 %v68, %v69
    %v71 = vrot.slane %v70, 2
    %v72 = vadd.f32 %v70, %v71
    %v73 = vrot.slane %v72, 1
    %v74 = vadd.f32 %v72, %v73
    %s75 = vtos %v74
    %v76 = vstv %s75
    %v77 = vadd.f32 %v42, %v76
    %vm78 = vcmask 0
    %79 = vst.msk [vmem:[#allocation2] sm:$0x1] %vm78, %v77
    // Predicated region
    $region14: #{_lambda_.33} parent=1 // pred_check
      %p80 = pneg %p12
    $region15: #{_lambda_.33} parent=1 // pred_check_branch
      %82 = sbr.rel (%p80) target = $region17
    $region16: #{_lambda_.33} parent=1 // pred_region
      %v83 = vld [vmem:[#allocation2] sm:$0x1]
      %v84 = vmul.f32 %v83, 0.001953125
      %85 = vst.msk [vmem:[#allocation3] sm:$0x1] %vm78, %v84
    $region17: #{_lambda_.33} parent=1 // pred_fallthru
      _
    // Predicated region
    $region18: #{_lambda_.33} parent=1 // pred_check
      _
    $region19: #{_lambda_.33} parent=1 // pred_check_branch
      %87 = sbr.rel (0) target = $region21
    $region20: #{_lambda_.33} parent=1 // pred_region
      %s89 = ssub.s32 16, 16
      %90 = vsyncadd [#allocation4], %s89
      %s92 = sshll.u32 [#allocation3], 4
      %s93 = int_to_ptr.vmem [resolvable:$true] %s92
      %95 = dma.vmem_to_hbm [thread:$0]  %s93, 16, %s2, [#allocation4]
    $region21: #{_lambda_.33} parent=1 // pred_fallthru
      _
    // Predicated region
    $region22: #{_lambda_.33} parent=1 // pred_check
      _
    $region23: #{_lambda_.33} parent=1 // pred_check_branch
      %97 = sbr.rel (0) target = $region25
    $region24: #{_lambda_.33} parent=1 // pred_region
      %98 = dma.done [#allocation4], 16
    $region25: #{_lambda_.33} parent=1 // pred_fallthru
      _
    %99 = vsyncpa [#allocation4], 1

</llo_original>
